<compile_context>
chip_gen: v6e
topology: v6e:2x2x1
jax: 0.10.0
libtpu: 0.0.40
codegen_flags: <defaults>
</compile_context>

<pallas_src>
import jax
import jax.numpy as jnp
from jax.experimental import pallas as pl
from jax.experimental.pallas import tpu as pltpu


def _make_xca_kernel(N, C, num_heads, head_dim):
    f32 = jnp.float32

    def kernel(x_ref, wq_ref, wk_ref, wv_ref, t_ref, wp_ref, b_ref, o_ref):
        # x_ref: (N, C); wq/wk/wv: (C, C) rows ordered [h, d]; t_ref: (C, 1)
        # wp_ref: (C_out, C_in); b_ref: (1, C); o_ref: (N, C)
        xt = jnp.transpose(x_ref[...])                     # (C, N), tokens on lanes

        q = jnp.dot(wq_ref[...], xt, preferred_element_type=f32)   # (C, N)
        k = jnp.dot(wk_ref[...], xt, preferred_element_type=f32)   # (C, N)
        v = jnp.dot(wv_ref[...], xt, preferred_element_type=f32)   # (C, N)

        # F.normalize(dim=-1) over the token axis (lane-axis reduce + rsqrt).
        # rsqrt(max(ss, eps^2)) == 1 / max(sqrt(ss), eps) with eps = 1e-12.
        qn = q * jax.lax.rsqrt(
            jnp.maximum(jnp.sum(q * q, axis=-1, keepdims=True), 1e-24))
        kn = k * jax.lax.rsqrt(
            jnp.maximum(jnp.sum(k * k, axis=-1, keepdims=True), 1e-24))

        # Fold per-head temperature into q (scores get scaled exactly once).
        qn = qn * t_ref[...]

        # Per-head attention; all slices are sublane slices (multiples of 8).
        head_outs = []
        for h in range(num_heads):
            s0, s1 = h * head_dim, (h + 1) * head_dim
            qh = qn[s0:s1, :]                              # (D, N)
            kh = kn[s0:s1, :]
            vh = v[s0:s1, :]

            # scores[i, j] = sum_n qh[i, n] * kh[j, n]   (rhs-transposed matmul)
            s = jax.lax.dot_general(
                qh, kh, (((1,), (1,)), ((), ())), preferred_element_type=f32)

            # softmax over the last dim
            s = s - jnp.max(s, axis=-1, keepdims=True)
            e = jnp.exp(s)
            a = e / jnp.sum(e, axis=-1, keepdims=True)      # (D, D)

            head_outs.append(
                jnp.dot(a, vh, preferred_element_type=f32))  # (D, N)

        # (B, H, D, N) -> channels h*D+d: sublane-axis concat (cheap).
        attn_t = jnp.concatenate(head_outs, axis=0)          # (C, N)

        # proj: y^T = W_proj @ x_attn^T ; add bias after transposing back.
        y_t = jnp.dot(wp_ref[...], attn_t, preferred_element_type=f32)  # (C, N)
        o_ref[...] = (jnp.transpose(y_t) + b_ref[...]).astype(o_ref.dtype)

    return kernel


def xca_forward(x, w_qkv, temperature, w_proj, b_proj, num_heads=8):
    """x: (B, N, C); w_qkv: (3C, C) [torch nn.Linear(dim, 3*dim).weight];
    temperature: (num_heads,); w_proj: (C, C); b_proj: (C,).
    Returns (B, N, C) float32 matching the PyTorch XCA.forward."""
    B, N, C = x.shape
    D = C // num_heads

    x = jnp.asarray(x, jnp.float32)
    w_qkv = jnp.asarray(w_qkv, jnp.float32)
    wq = w_qkv[0 * C:1 * C, :]                  # rows ordered [head, head_dim]
    wk = w_qkv[1 * C:2 * C, :]
    wv = w_qkv[2 * C:3 * C, :]
    t_col = jnp.repeat(jnp.asarray(temperature, jnp.float32).reshape(-1), D)
    t_col = t_col.reshape(C, 1)
    wp = jnp.asarray(w_proj, jnp.float32)       # (C_out, C_in)
    b_row = jnp.asarray(b_proj, jnp.float32).reshape(1, C)

    kernel = _make_xca_kernel(N, C, num_heads, D)

    out = pl.pallas_call(
        kernel,
        out_shape=jax.ShapeDtypeStruct((B, N, C), jnp.float32),
        grid_spec=pltpu.PrefetchScalarGridSpec(
            num_scalar_prefetch=0,
            grid=(B,),
            in_specs=[
                pl.BlockSpec((None, N, C), lambda b: (b, 0, 0)),   # x
                pl.BlockSpec((C, C), lambda b: (0, 0)),            # wq
                pl.BlockSpec((C, C), lambda b: (0, 0)),            # wk
                pl.BlockSpec((C, C), lambda b: (0, 0)),            # wv
                pl.BlockSpec((C, 1), lambda b: (0, 0)),            # temperature (per-row)
                pl.BlockSpec((C, C), lambda b: (0, 0)),            # w_proj
                pl.BlockSpec((1, C), lambda b: (0, 0)),            # b_proj
            ],
            out_specs=pl.BlockSpec((None, N, C), lambda b: (b, 0, 0)),
        ),
        compiler_params=pltpu.CompilerParams(
            dimension_semantics=("parallel",)),
    )(x, wq, wk, wv, t_col, wp, b_row)
    return out


def _reference_forward(x, w_qkv, temperature, w_proj, b_proj, num_heads):
    """Pure-JAX port of the PyTorch XCA.forward (high-precision matmuls)."""
    B, N, C = x.shape
    D = C // num_heads
    hp = jax.lax.Precision.HIGHEST

    qkv = jnp.einsum('bnc,oc->bno', x, w_qkv, precision=hp)          # (B, N, 3C)
    qkv = qkv.reshape(B, N, 3, num_heads, D).transpose(2, 0, 3, 1, 4)
    q, k, v = qkv[0], qkv[1], qkv[2]                                  # (B, H, N, D)
    q = jnp.swapaxes(q, -2, -1)                                       # (B, H, D, N)
    k = jnp.swapaxes(k, -2, -1)
    v = jnp.swapaxes(v, -2, -1)
    q = q / jnp.maximum(jnp.sqrt(jnp.sum(q * q, axis=-1, keepdims=True)), 1e-12)
    k = k / jnp.maximum(jnp.sqrt(jnp.sum(k * k, axis=-1, keepdims=True)), 1e-12)
    attn = jnp.einsum('bhdn,bhen->bhde', q, k, precision=hp)
    attn = attn * jnp.asarray(temperature).reshape(1, num_heads, 1, 1)
    attn = jax.nn.softmax(attn, axis=-1)
    out = jnp.einsum('bhde,bhen->bhdn', attn, v, precision=hp)        # (B, H, D, N)
    out = out.transpose(0, 3, 1, 2).reshape(B, N, C)
    return jnp.einsum('bnc,oc->bno', out, w_proj, precision=hp) + b_proj[None, None, :]


if __name__ == "__main__":
    # Small, module-consistent shapes: dim=128, num_heads=8 (head_dim=16), B=2, N=64.
    B, N, C, num_heads = 2, 64, 128, 8

    key = jax.random.PRNGKey(0)
    k1, k2, k3, k4, k5 = jax.random.split(key, 5)
    x = jax.random.normal(k1, (B, N, C), jnp.float32)
    w_qkv = jax.random.normal(k2, (3 * C, C), jnp.float32) * 0.05   # Linear(C, 3C), no bias
    w_proj = jax.random.normal(k3, (C, C), jnp.float32) * 0.05      # Linear(C, C)
    b_proj = jax.random.normal(k4, (C,), jnp.float32) * 0.05
    temperature = jax.random.uniform(k5, (num_heads,), jnp.float32, 0.5, 1.5)

    out = xca_forward(x, w_qkv, temperature, w_proj, b_proj, num_heads=num_heads)
    out = jax.block_until_ready(out)

    ref = _reference_forward(x, w_qkv, temperature, w_proj, b_proj, num_heads)
    ref = jax.block_until_ready(ref)

    assert out.shape == (B, N, C), out.shape
    err = float(jnp.max(jnp.abs(out - ref)))
    assert err < 1e-2, f"max abs diff {err}"

    print("KERNEL_OK")
</pallas_src>

<mosaic_0001>
module attributes {stable_mosaic.version = 11 : i64} {
  func.func @kernel(%arg0: i32, %arg1: memref<1x64x128xf32, #tpu.memory_space<vmem>>, %arg2: memref<128x128xf32, #tpu.memory_space<vmem>>, %arg3: memref<128x128xf32, #tpu.memory_space<vmem>>, %arg4: memref<128x128xf32, #tpu.memory_space<vmem>>, %arg5: memref<128x1xf32, #tpu.memory_space<vmem>>, %arg6: memref<128x128xf32, #tpu.memory_space<vmem>>, %arg7: memref<1x128xf32, #tpu.memory_space<vmem>>, %arg8: memref<1x64x128xf32, #tpu.memory_space<vmem>>) attributes {dimension_semantics = [#tpu.dimension_semantics<parallel>], iteration_bounds = array<i64: 2>, scalar_prefetch = 0 : i64, scratch_operands = 0 : i64, tpu.core_type = #tpu.core_type<tc>, window_params = [{transform_indices = @transform_0, window_bounds = array<i64: 1, 64, 128>}, {pipeline_mode = #tpu.pipeline_mode<synchronous>, transform_indices = @transform_1, window_bounds = array<i64: 128, 128>}, {pipeline_mode = #tpu.pipeline_mode<synchronous>, transform_indices = @transform_2, window_bounds = array<i64: 128, 128>}, {pipeline_mode = #tpu.pipeline_mode<synchronous>, transform_indices = @transform_3, window_bounds = array<i64: 128, 128>}, {pipeline_mode = #tpu.pipeline_mode<synchronous>, transform_indices = @transform_4, window_bounds = array<i64: 128, 1>}, {pipeline_mode = #tpu.pipeline_mode<synchronous>, transform_indices = @transform_5, window_bounds = array<i64: 128, 128>}, {pipeline_mode = #tpu.pipeline_mode<synchronous>, transform_indices = @transform_6, window_bounds = array<i64: 1, 128>}, {transform_indices = @transform_7, window_bounds = array<i64: 1, 64, 128>}]} {
    %c0 = arith.constant 0 : index
    %c0_0 = arith.constant 0 : index
    %c0_1 = arith.constant 0 : index
    %0 = vector.load %arg1[%c0, %c0_0, %c0_1] : memref<1x64x128xf32, #tpu.memory_space<vmem>>, vector<1x64x128xf32>
    %1 = vector.shape_cast %0 : vector<1x64x128xf32> to vector<64x128xf32>
    %2 = tpu.transpose %1, [1, 0] : vector<64x128xf32> -> vector<128x64xf32>
    %c0_2 = arith.constant 0 : index
    %c0_3 = arith.constant 0 : index
    %3 = vector.load %arg2[%c0_2, %c0_3] : memref<128x128xf32, #tpu.memory_space<vmem>>, vector<128x128xf32>
    %cst = arith.constant dense<0.000000e+00> : vector<128x64xf32>
    %4 = tpu.matmul %3, %2, %cst {dimension_numbers = #tpu.dot_dimension_numbers<[1], [0], [0], [1], [0, 0, 1, 1], [], []>} : vector<128x128xf32>, vector<128x64xf32>, vector<128x64xf32> -> vector<128x64xf32>
    %c0_4 = arith.constant 0 : index
    %c0_5 = arith.constant 0 : index
    %5 = vector.load %arg3[%c0_4, %c0_5] : memref<128x128xf32, #tpu.memory_space<vmem>>, vector<128x128xf32>
    %cst_6 = arith.constant dense<0.000000e+00> : vector<128x64xf32>
    %6 = tpu.matmul %5, %2, %cst_6 {dimension_numbers = #tpu.dot_dimension_numbers<[1], [0], [0], [1], [0, 0, 1, 1], [], []>} : vector<128x128xf32>, vector<128x64xf32>, vector<128x64xf32> -> vector<128x64xf32>
    %c0_7 = arith.constant 0 : index
    %c0_8 = arith.constant 0 : index
    %7 = vector.load %arg4[%c0_7, %c0_8] : memref<128x128xf32, #tpu.memory_space<vmem>>, vector<128x128xf32>
    %cst_9 = arith.constant dense<0.000000e+00> : vector<128x64xf32>
    %8 = tpu.matmul %7, %2, %cst_9 {dimension_numbers = #tpu.dot_dimension_numbers<[1], [0], [0], [1], [0, 0, 1, 1], [], []>} : vector<128x128xf32>, vector<128x64xf32>, vector<128x64xf32> -> vector<128x64xf32>
    %9 = arith.mulf %4, %4 : vector<128x64xf32>
    %cst_10 = arith.constant dense<0.000000e+00> : vector<128xf32>
    %10 = vector.multi_reduction <add>, %9, %cst_10 [1] : vector<128x64xf32> to vector<128xf32>
    %11 = vector.shape_cast %10 : vector<128xf32> to vector<128x1xf32>
    %cst_11 = arith.constant 1.000000e-24 : f32
    %12 = vector.broadcast %cst_11 : f32 to vector<128x1xf32>
    %13 = arith.maximumf %11, %12 : vector<128x1xf32>
    %14 = math.rsqrt %13 : vector<128x1xf32>
    %15 = vector.broadcast %14 : vector<128x1xf32> to vector<128x64xf32>
    %16 = arith.mulf %4, %15 : vector<128x64xf32>
    %17 = arith.mulf %6, %6 : vector<128x64xf32>
    %cst_12 = arith.constant dense<0.000000e+00> : vector<128xf32>
    %18 = vector.multi_reduction <add>, %17, %cst_12 [1] : vector<128x64xf32> to vector<128xf32>
    %19 = vector.shape_cast %18 : vector<128xf32> to vector<128x1xf32>
    %cst_13 = arith.constant 1.000000e-24 : f32
    %20 = vector.broadcast %cst_13 : f32 to vector<128x1xf32>
    %21 = arith.maximumf %19, %20 : vector<128x1xf32>
    %22 = math.rsqrt %21 : vector<128x1xf32>
    %23 = vector.broadcast %22 : vector<128x1xf32> to vector<128x64xf32>
    %24 = arith.mulf %6, %23 : vector<128x64xf32>
    %c0_14 = arith.constant 0 : index
    %c0_15 = arith.constant 0 : index
    %25 = vector.load %arg5[%c0_14, %c0_15] : memref<128x1xf32, #tpu.memory_space<vmem>>, vector<128x1xf32>
    %26 = vector.broadcast %25 : vector<128x1xf32> to vector<128x64xf32>
    %27 = arith.mulf %16, %26 : vector<128x64xf32>
    %28 = vector.extract_strided_slice %27 {offsets = [0, 0], sizes = [16, 64], strides = [1, 1]} : vector<128x64xf32> to vector<16x64xf32>
    %29 = vector.extract_strided_slice %24 {offsets = [0, 0], sizes = [16, 64], strides = [1, 1]} : vector<128x64xf32> to vector<16x64xf32>
    %30 = vector.extract_strided_slice %8 {offsets = [0, 0], sizes = [16, 64], strides = [1, 1]} : vector<128x64xf32> to vector<16x64xf32>
    %cst_16 = arith.constant dense<0.000000e+00> : vector<16x16xf32>
    %31 = tpu.matmul %28, %29, %cst_16 {dimension_numbers = #tpu.dot_dimension_numbers<[1], [1], [0], [0], [0, 0, 1, 0], [], []>} : vector<16x64xf32>, vector<16x64xf32>, vector<16x16xf32> -> vector<16x16xf32>
    %cst_17 = arith.constant dense<0xFF800000> : vector<16xf32>
    %32 = vector.multi_reduction <maximumf>, %31, %cst_17 [1] : vector<16x16xf32> to vector<16xf32>
    %33 = vector.shape_cast %32 : vector<16xf32> to vector<16x1xf32>
    %34 = vector.broadcast %33 : vector<16x1xf32> to vector<16x16xf32>
    %35 = arith.subf %31, %34 : vector<16x16xf32>
    %36 = math.exp %35 : vector<16x16xf32>
    %cst_18 = arith.constant dense<0.000000e+00> : vector<16xf32>
    %37 = vector.multi_reduction <add>, %36, %cst_18 [1] : vector<16x16xf32> to vector<16xf32>
    %38 = vector.shape_cast %37 : vector<16xf32> to vector<16x1xf32>
    %39 = vector.broadcast %38 : vector<16x1xf32> to vector<16x16xf32>
    %40 = arith.divf %36, %39 : vector<16x16xf32>
    %cst_19 = arith.constant dense<0.000000e+00> : vector<16x64xf32>
    %41 = tpu.matmul %40, %30, %cst_19 {dimension_numbers = #tpu.dot_dimension_numbers<[1], [0], [0], [1], [0, 0, 1, 1], [], []>} : vector<16x16xf32>, vector<16x64xf32>, vector<16x64xf32> -> vector<16x64xf32>
    %42 = vector.extract_strided_slice %27 {offsets = [16, 0], sizes = [16, 64], strides = [1, 1]} : vector<128x64xf32> to vector<16x64xf32>
    %43 = vector.extract_strided_slice %24 {offsets = [16, 0], sizes = [16, 64], strides = [1, 1]} : vector<128x64xf32> to vector<16x64xf32>
    %44 = vector.extract_strided_slice %8 {offsets = [16, 0], sizes = [16, 64], strides = [1, 1]} : vector<128x64xf32> to vector<16x64xf32>
    %cst_20 = arith.constant dense<0.000000e+00> : vector<16x16xf32>
    %45 = tpu.matmul %42, %43, %cst_20 {dimension_numbers = #tpu.dot_dimension_numbers<[1], [1], [0], [0], [0, 0, 1, 0], [], []>} : vector<16x64xf32>, vector<16x64xf32>, vector<16x16xf32> -> vector<16x16xf32>
    %cst_21 = arith.constant dense<0xFF800000> : vector<16xf32>
    %46 = vector.multi_reduction <maximumf>, %45, %cst_21 [1] : vector<16x16xf32> to vector<16xf32>
    %47 = vector.shape_cast %46 : vector<16xf32> to vector<16x1xf32>
    %48 = vector.broadcast %47 : vector<16x1xf32> to vector<16x16xf32>
    %49 = arith.subf %45, %48 : vector<16x16xf32>
    %50 = math.exp %49 : vector<16x16xf32>
    %cst_22 = arith.constant dense<0.000000e+00> : vector<16xf32>
    %51 = vector.multi_reduction <add>, %50, %cst_22 [1] : vector<16x16xf32> to vector<16xf32>
    %52 = vector.shape_cast %51 : vector<16xf32> to vector<16x1xf32>
    %53 = vector.broadcast %52 : vector<16x1xf32> to vector<16x16xf32>
    %54 = arith.divf %50, %53 : vector<16x16xf32>
    %cst_23 = arith.constant dense<0.000000e+00> : vector<16x64xf32>
    %55 = tpu.matmul %54, %44, %cst_23 {dimension_numbers = #tpu.dot_dimension_numbers<[1], [0], [0], [1], [0, 0, 1, 1], [], []>} : vector<16x16xf32>, vector<16x64xf32>, vector<16x64xf32> -> vector<16x64xf32>
    %56 = vector.extract_strided_slice %27 {offsets = [32, 0], sizes = [16, 64], strides = [1, 1]} : vector<128x64xf32> to vector<16x64xf32>
    %57 = vector.extract_strided_slice %24 {offsets = [32, 0], sizes = [16, 64], strides = [1, 1]} : vector<128x64xf32> to vector<16x64xf32>
    %58 = vector.extract_strided_slice %8 {offsets = [32, 0], sizes = [16, 64], strides = [1, 1]} : vector<128x64xf32> to vector<16x64xf32>
    %cst_24 = arith.constant dense<0.000000e+00> : vector<16x16xf32>
    %59 = tpu.matmul %56, %57, %cst_24 {dimension_numbers = #tpu.dot_dimension_numbers<[1], [1], [0], [0], [0, 0, 1, 0], [], []>} : vector<16x64xf32>, vector<16x64xf32>, vector<16x16xf32> -> vector<16x16xf32>
    %cst_25 = arith.constant dense<0xFF800000> : vector<16xf32>
    %60 = vector.multi_reduction <maximumf>, %59, %cst_25 [1] : vector<16x16xf32> to vector<16xf32>
    %61 = vector.shape_cast %60 : vector<16xf32> to vector<16x1xf32>
    %62 = vector.broadcast %61 : vector<16x1xf32> to vector<16x16xf32>
    %63 = arith.subf %59, %62 : vector<16x16xf32>
    %64 = math.exp %63 : vector<16x16xf32>
    %cst_26 = arith.constant dense<0.000000e+00> : vector<16xf32>
    %65 = vector.multi_reduction <add>, %64, %cst_26 [1] : vector<16x16xf32> to vector<16xf32>
    %66 = vector.shape_cast %65 : vector<16xf32> to vector<16x1xf32>
    %67 = vector.broadcast %66 : vector<16x1xf32> to vector<16x16xf32>
    %68 = arith.divf %64, %67 : vector<16x16xf32>
    %cst_27 = arith.constant dense<0.000000e+00> : vector<16x64xf32>
    %69 = tpu.matmul %68, %58, %cst_27 {dimension_numbers = #tpu.dot_dimension_numbers<[1], [0], [0], [1], [0, 0, 1, 1], [], []>} : vector<16x16xf32>, vector<16x64xf32>, vector<16x64xf32> -> vector<16x64xf32>
    %70 = vector.extract_strided_slice %27 {offsets = [48, 0], sizes = [16, 64], strides = [1, 1]} : vector<128x64xf32> to vector<16x64xf32>
    %71 = vector.extract_strided_slice %24 {offsets = [48, 0], sizes = [16, 64], strides = [1, 1]} : vector<128x64xf32> to vector<16x64xf32>
    %72 = vector.extract_strided_slice %8 {offsets = [48, 0], sizes = [16, 64], strides = [1, 1]} : vector<128x64xf32> to vector<16x64xf32>
    %cst_28 = arith.constant dense<0.000000e+00> : vector<16x16xf32>
    %73 = tpu.matmul %70, %71, %cst_28 {dimension_numbers = #tpu.dot_dimension_numbers<[1], [1], [0], [0], [0, 0, 1, 0], [], []>} : vector<16x64xf32>, vector<16x64xf32>, vector<16x16xf32> -> vector<16x16xf32>
    %cst_29 = arith.constant dense<0xFF800000> : vector<16xf32>
    %74 = vector.multi_reduction <maximumf>, %73, %cst_29 [1] : vector<16x16xf32> to vector<16xf32>
    %75 = vector.shape_cast %74 : vector<16xf32> to vector<16x1xf32>
    %76 = vector.broadcast %75 : vector<16x1xf32> to vector<16x16xf32>
    %77 = arith.subf %73, %76 : vector<16x16xf32>
    %78 = math.exp %77 : vector<16x16xf32>
    %cst_30 = arith.constant dense<0.000000e+00> : vector<16xf32>
    %79 = vector.multi_reduction <add>, %78, %cst_30 [1] : vector<16x16xf32> to vector<16xf32>
    %80 = vector.shape_cast %79 : vector<16xf32> to vector<16x1xf32>
    %81 = vector.broadcast %80 : vector<16x1xf32> to vector<16x16xf32>
    %82 = arith.divf %78, %81 : vector<16x16xf32>
    %cst_31 = arith.constant dense<0.000000e+00> : vector<16x64xf32>
    %83 = tpu.matmul %82, %72, %cst_31 {dimension_numbers = #tpu.dot_dimension_numbers<[1], [0], [0], [1], [0, 0, 1, 1], [], []>} : vector<16x16xf32>, vector<16x64xf32>, vector<16x64xf32> -> vector<16x64xf32>
    %84 = vector.extract_strided_slice %27 {offsets = [64, 0], sizes = [16, 64], strides = [1, 1]} : vector<128x64xf32> to vector<16x64xf32>
    %85 = vector.extract_strided_slice %24 {offsets = [64, 0], sizes = [16, 64], strides = [1, 1]} : vector<128x64xf32> to vector<16x64xf32>
    %86 = vector.extract_strided_slice %8 {offsets = [64, 0], sizes = [16, 64], strides = [1, 1]} : vector<128x64xf32> to vector<16x64xf32>
    %cst_32 = arith.constant dense<0.000000e+00> : vector<16x16xf32>
    %87 = tpu.matmul %84, %85, %cst_32 {dimension_numbers = #tpu.dot_dimension_numbers<[1], [1], [0], [0], [0, 0, 1, 0], [], []>} : vector<16x64xf32>, vector<16x64xf32>, vector<16x16xf32> -> vector<16x16xf32>
    %cst_33 = arith.constant dense<0xFF800000> : vector<16xf32>
    %88 = vector.multi_reduction <maximumf>, %87, %cst_33 [1] : vector<16x16xf32> to vector<16xf32>
    %89 = vector.shape_cast %88 : vector<16xf32> to vector<16x1xf32>
    %90 = vector.broadcast %89 : vector<16x1xf32> to vector<16x16xf32>
    %91 = arith.subf %87, %90 : vector<16x16xf32>
    %92 = math.exp %91 : vector<16x16xf32>
    %cst_34 = arith.constant dense<0.000000e+00> : vector<16xf32>
    %93 = vector.multi_reduction <add>, %92, %cst_34 [1] : vector<16x16xf32> to vector<16xf32>
    %94 = vector.shape_cast %93 : vector<16xf32> to vector<16x1xf32>
    %95 = vector.broadcast %94 : vector<16x1xf32> to vector<16x16xf32>
    %96 = arith.divf %92, %95 : vector<16x16xf32>
    %cst_35 = arith.constant dense<0.000000e+00> : vector<16x64xf32>
    %97 = tpu.matmul %96, %86, %cst_35 {dimension_numbers = #tpu.dot_dimension_numbers<[1], [0], [0], [1], [0, 0, 1, 1], [], []>} : vector<16x16xf32>, vector<16x64xf32>, vector<16x64xf32> -> vector<16x64xf32>
    %98 = vector.extract_strided_slice %27 {offsets = [80, 0], sizes = [16, 64], strides = [1, 1]} : vector<128x64xf32> to vector<16x64xf32>
    %99 = vector.extract_strided_slice %24 {offsets = [80, 0], sizes = [16, 64], strides = [1, 1]} : vector<128x64xf32> to vector<16x64xf32>
    %100 = vector.extract_strided_slice %8 {offsets = [80, 0], sizes = [16, 64], strides = [1, 1]} : vector<128x64xf32> to vector<16x64xf32>
    %cst_36 = arith.constant dense<0.000000e+00> : vector<16x16xf32>
    %101 = tpu.matmul %98, %99, %cst_36 {dimension_numbers = #tpu.dot_dimension_numbers<[1], [1], [0], [0], [0, 0, 1, 0], [], []>} : vector<16x64xf32>, vector<16x64xf32>, vector<16x16xf32> -> vector<16x16xf32>
    %cst_37 = arith.constant dense<0xFF800000> : vector<16xf32>
    %102 = vector.multi_reduction <maximumf>, %101, %cst_37 [1] : vector<16x16xf32> to vector<16xf32>
    %103 = vector.shape_cast %102 : vector<16xf32> to vector<16x1xf32>
    %104 = vector.broadcast %103 : vector<16x1xf32> to vector<16x16xf32>
    %105 = arith.subf %101, %104 : vector<16x16xf32>
    %106 = math.exp %105 : vector<16x16xf32>
    %cst_38 = arith.constant dense<0.000000e+00> : vector<16xf32>
    %107 = vector.multi_reduction <add>, %106, %cst_38 [1] : vector<16x16xf32> to vector<16xf32>
    %108 = vector.shape_cast %107 : vector<16xf32> to vector<16x1xf32>
    %109 = vector.broadcast %108 : vector<16x1xf32> to vector<16x16xf32>
    %110 = arith.divf %106, %109 : vector<16x16xf32>
    %cst_39 = arith.constant dense<0.000000e+00> : vector<16x64xf32>
    %111 = tpu.matmul %110, %100, %cst_39 {dimension_numbers = #tpu.dot_dimension_numbers<[1], [0], [0], [1], [0, 0, 1, 1], [], []>} : vector<16x16xf32>, vector<16x64xf32>, vector<16x64xf32> -> vector<16x64xf32>
    %112 = vector.extract_strided_slice %27 {offsets = [96, 0], sizes = [16, 64], strides = [1, 1]} : vector<128x64xf32> to vector<16x64xf32>
    %113 = vector.extract_strided_slice %24 {offsets = [96, 0], sizes = [16, 64], strides = [1, 1]} : vector<128x64xf32> to vector<16x64xf32>
    %114 = vector.extract_strided_slice %8 {offsets = [96, 0], sizes = [16, 64], strides = [1, 1]} : vector<128x64xf32> to vector<16x64xf32>
    %cst_40 = arith.constant dense<0.000000e+00> : vector<16x16xf32>
    %115 = tpu.matmul %112, %113, %cst_40 {dimension_numbers = #tpu.dot_dimension_numbers<[1], [1], [0], [0], [0, 0, 1, 0], [], []>} : vector<16x64xf32>, vector<16x64xf32>, vector<16x16xf32> -> vector<16x16xf32>
    %cst_41 = arith.constant dense<0xFF800000> : vector<16xf32>
    %116 = vector.multi_reduction <maximumf>, %115, %cst_41 [1] : vector<16x16xf32> to vector<16xf32>
    %117 = vector.shape_cast %116 : vector<16xf32> to vector<16x1xf32>
    %118 = vector.broadcast %117 : vector<16x1xf32> to vector<16x16xf32>
    %119 = arith.subf %115, %118 : vector<16x16xf32>
    %120 = math.exp %119 : vector<16x16xf32>
    %cst_42 = arith.constant dense<0.000000e+00> : vector<16xf32>
    %121 = vector.multi_reduction <add>, %120, %cst_42 [1] : vector<16x16xf32> to vector<16xf32>
    %122 = vector.shape_cast %121 : vector<16xf32> to vector<16x1xf32>
    %123 = vector.broadcast %122 : vector<16x1xf32> to vector<16x16xf32>
    %124 = arith.divf %120, %123 : vector<16x16xf32>
    %cst_43 = arith.constant dense<0.000000e+00> : vector<16x64xf32>
    %125 = tpu.matmul %124, %114, %cst_43 {dimension_numbers = #tpu.dot_dimension_numbers<[1], [0], [0], [1], [0, 0, 1, 1], [], []>} : vector<16x16xf32>, vector<16x64xf32>, vector<16x64xf32> -> vector<16x64xf32>
    %126 = vector.extract_strided_slice %27 {offsets = [112, 0], sizes = [16, 64], strides = [1, 1]} : vector<128x64xf32> to vector<16x64xf32>
    %127 = vector.extract_strided_slice %24 {offsets = [112, 0], sizes = [16, 64], strides = [1, 1]} : vector<128x64xf32> to vector<16x64xf32>
    %128 = vector.extract_strided_slice %8 {offsets = [112, 0], sizes = [16, 64], strides = [1, 1]} : vector<128x64xf32> to vector<16x64xf32>
    %cst_44 = arith.constant dense<0.000000e+00> : vector<16x16xf32>
    %129 = tpu.matmul %126, %127, %cst_44 {dimension_numbers = #tpu.dot_dimension_numbers<[1], [1], [0], [0], [0, 0, 1, 0], [], []>} : vector<16x64xf32>, vector<16x64xf32>, vector<16x16xf32> -> vector<16x16xf32>
    %cst_45 = arith.constant dense<0xFF800000> : vector<16xf32>
    %130 = vector.multi_reduction <maximumf>, %129, %cst_45 [1] : vector<16x16xf32> to vector<16xf32>
    %131 = vector.shape_cast %130 : vector<16xf32> to vector<16x1xf32>
    %132 = vector.broadcast %131 : vector<16x1xf32> to vector<16x16xf32>
    %133 = arith.subf %129, %132 : vector<16x16xf32>
    %134 = math.exp %133 : vector<16x16xf32>
    %cst_46 = arith.constant dense<0.000000e+00> : vector<16xf32>
    %135 = vector.multi_reduction <add>, %134, %cst_46 [1] : vector<16x16xf32> to vector<16xf32>
    %136 = vector.shape_cast %135 : vector<16xf32> to vector<16x1xf32>
    %137 = vector.broadcast %136 : vector<16x1xf32> to vector<16x16xf32>
    %138 = arith.divf %134, %137 : vector<16x16xf32>
    %cst_47 = arith.constant dense<0.000000e+00> : vector<16x64xf32>
    %139 = tpu.matmul %138, %128, %cst_47 {dimension_numbers = #tpu.dot_dimension_numbers<[1], [0], [0], [1], [0, 0, 1, 1], [], []>} : vector<16x16xf32>, vector<16x64xf32>, vector<16x64xf32> -> vector<16x64xf32>
    %140 = tpu.concatenate %41, %55, %69, %83, %97, %111, %125, %139 in 0 : vector<16x64xf32>, vector<16x64xf32>, vector<16x64xf32>, vector<16x64xf32>, vector<16x64xf32>, vector<16x64xf32>, vector<16x64xf32>, vector<16x64xf32> -> vector<128x64xf32>
    %c0_48 = arith.constant 0 : index
    %c0_49 = arith.constant 0 : index
    %141 = vector.load %arg6[%c0_48, %c0_49] : memref<128x128xf32, #tpu.memory_space<vmem>>, vector<128x128xf32>
    %cst_50 = arith.constant dense<0.000000e+00> : vector<128x64xf32>
    %142 = tpu.matmul %141, %140, %cst_50 {dimension_numbers = #tpu.dot_dimension_numbers<[1], [0], [0], [1], [0, 0, 1, 1], [], []>} : vector<128x128xf32>, vector<128x64xf32>, vector<128x64xf32> -> vector<128x64xf32>
    %143 = tpu.transpose %142, [1, 0] : vector<128x64xf32> -> vector<64x128xf32>
    %c0_51 = arith.constant 0 : index
    %c0_52 = arith.constant 0 : index
    %144 = vector.load %arg7[%c0_51, %c0_52] : memref<1x128xf32, #tpu.memory_space<vmem>>, vector<1x128xf32>
    %145 = vector.broadcast %144 : vector<1x128xf32> to vector<64x128xf32>
    %146 = arith.addf %143, %145 : vector<64x128xf32>
    %c0_53 = arith.constant 0 : index
    %c0_54 = arith.constant 0 : index
    %c0_55 = arith.constant 0 : index
    %147 = vector.load %arg8[%c0_53, %c0_54, %c0_55] : memref<1x64x128xf32, #tpu.memory_space<vmem>>, vector<1x64x128xf32>
    %148 = vector.shape_cast %147 : vector<1x64x128xf32> to vector<64x128xf32>
    %149 = vector.shape_cast %146 : vector<64x128xf32> to vector<1x64x128xf32>
    tpu.vector_store %arg8[%c0_53, %c0_54, %c0_55], %149 {strides = array<i32>} : memref<1x64x128xf32, #tpu.memory_space<vmem>>, vector<1x64x128xf32>,
    return
  }
  func.func @transform_0(%arg0: i32) -> (i32, i32, i32) {
    %c0_i32 = arith.constant 0 : i32
    %c0_i32_0 = arith.constant 0 : i32
    %c0_i32_1 = arith.constant 0 : i32
    return %arg0, %c0_i32, %c0_i32_0 : i32, i32, i32
  }
  func.func @transform_1(%arg0: i32) -> (i32, i32) {
    %c0_i32 = arith.constant 0 : i32
    %c0_i32_0 = arith.constant 0 : i32
    %c0_i32_1 = arith.constant 0 : i32
    return %c0_i32, %c0_i32_0 : i32, i32
  }
  func.func @transform_2(%arg0: i32) -> (i32, i32) {
    %c0_i32 = arith.constant 0 : i32
    %c0_i32_0 = arith.constant 0 : i32
    %c0_i32_1 = arith.constant 0 : i32
    return %c0_i32, %c0_i32_0 : i32, i32
  }
  func.func @transform_3(%arg0: i32) -> (i32, i32) {
    %c0_i32 = arith.constant 0 : i32
    %c0_i32_0 = arith.constant 0 : i32
    %c0_i32_1 = arith.constant 0 : i32
    return %c0_i32, %c0_i32_0 : i32, i32
  }
  func.func @transform_4(%arg0: i32) -> (i32, i32) {
    %c0_i32 = arith.constant 0 : i32
    %c0_i32_0 = arith.constant 0 : i32
    %c0_i32_1 = arith.constant 0 : i32
    return %c0_i32, %c0_i32_0 : i32, i32
  }
  func.func @transform_5(%arg0: i32) -> (i32, i32) {
    %c0_i32 = arith.constant 0 : i32
    %c0_i32_0 = arith.constant 0 : i32
    %c0_i32_1 = arith.constant 0 : i32
    return %c0_i32, %c0_i32_0 : i32, i32
  }
  func.func @transform_6(%arg0: i32) -> (i32, i32) {
    %c0_i32 = arith.constant 0 : i32
    %c0_i32_0 = arith.constant 0 : i32
    %c0_i32_1 = arith.constant 0 : i32
    return %c0_i32, %c0_i32_0 : i32, i32
  }
  func.func @transform_7(%arg0: i32) -> (i32, i32, i32) {
    %c0_i32 = arith.constant 0 : i32
    %c0_i32_0 = arith.constant 0 : i32
    %c0_i32_1 = arith.constant 0 : i32
    return %arg0, %c0_i32, %c0_i32_0 : i32, i32, i32
  }
}

</mosaic_0001>

<llo_original>
// kernel: tpu_custom_call.1
$region0: #{tpu_custom_call.1}
  #allocation0 [shape = 'u32[]', space=smem, size = 0x4, offset = 0x4, fixed_abs, tag = 'smem constant byte address 0x4 - core index']
  #allocation1 [shape = 'u32[144,128]{1,0:T(1,128)}', space=vmem, size = 0x12000, scoped, tag = 'internal scratch']
  %s0 = inlined_call_operand.vmem [shape: f32[2,64,128], index: 0, kind: input, shape index: {}]
  %s1 = inlined_call_operand.hbm [shape: f32[128,128], index: 1, kind: input, shape index: {}]
  %s2 = inlined_call_operand.hbm [shape: f32[128,128], index: 2, kind: input, shape index: {}]
  %s3 = inlined_call_operand.hbm [shape: f32[128,128], index: 3, kind: input, shape index: {}]
  %s4 = inlined_call_operand.vmem [shape: f32[128,1], index: 4, kind: input, shape index: {}]
  %s5 = inlined_call_operand.hbm [shape: f32[128,128], index: 5, kind: input, shape index: {}]
  %s6 = inlined_call_operand.vmem [shape: f32[1,128], index: 6, kind: input, shape index: {}]
  %s7 = inlined_call_operand.hbm [shape: f32[2,64,128], index: 7, kind: output, shape index: {}]
  %s8 = sld [smem:[#allocation0]]
  $region77: #{tpu_custom_call.1} parent=0
    _
  %s10 = ssub.s32 1, %s8
  %s11 = scalar_select 0, %s10, %s8
  $region1: #{tpu_custom_call.1} parent=0
    #allocation2 [shape = 'u8[65536]{0}', space=vmem, size = 0x10000, scoped, tag = 'input window, operand 1, single buffered']
    #allocation3 [shape = 's32[2]{0}', space=sflag, size = 0x8, scoped, tag = 'scoped memory for tpu_custom_call.1']
    #allocation4 [shape = 's32[2]{0}', space=sflag, size = 0x8, scoped, tag = 'scoped memory for tpu_custom_call.1']
    #allocation5 [shape = 'u8[65536]{0}', space=vmem, size = 0x10000, scoped, tag = 'input window, operand 2, single buffered']
    #allocation6 [shape = 's32[1]{0}', space=sflag, size = 0x4, scoped, tag = 'scoped memory for tpu_custom_call.1']
    #allocation7 [shape = 'u8[65536]{0}', space=vmem, size = 0x10000, scoped, tag = 'input window, operand 3, single buffered']
    #allocation8 [shape = 'u8[65536]{0}', space=vmem, size = 0x10000, scoped, tag = 'input window, operand 5, single buffered']
    #allocation9 [shape = 's32[1]{0}', space=sflag, size = 0x4, scoped, tag = 'scoped memory for tpu_custom_call.1']
    #allocation10 [shape = 'u8[65536]{0}', space=vmem, size = 0x10000, scoped, tag = 'output window, operand 0']
    %12 = vsyncpa [#allocation3], 0
    %13 = vsyncpa [#allocation6], 0
    %14 = vsyncpa [#allocation9], 0
    %15 = vsyncpa [#allocation4], 0
    %s16 = scalar_lea.sflag [#allocation4], 1
    %17 = vsyncpa %s16, 0
    loop: start=0, step=1, limit=4
    $region2: #{tpu_custom_call.1} parent=1 // loop_pre_header
      _
    $region3: #{tpu_custom_call.1} parent=1 // loop_header
      %s19 = sphi 0, %s23
      %p20 = scmp.ge.s32.totalorder %s19, 4
      %s29 = sphi 0, %s31
      %s32 = sphi 0, %s29
      %s33 = sphi 0, %s32
      %s49 = sphi 0, %s33
      %s53 = sphi 0, %s53
      %s55 = sphi 0, %s53
      %s56 = sphi 0, %s55
      %s70 = sphi 0, %s56
      %s74 = sphi 0, %s74
      %s76 = sphi 0, %s74
      %s77 = sphi 0, %s76
      %s91 = sphi 0, %s77
      %s95 = sphi 0, %s95
      %s97 = sphi 0, %s95
      %s98 = sphi 0, %s97
      %s112 = sphi 0, %s98
      %s116 = sphi 0, %s116
      %s118 = sphi 0, %s116
      %s119 = sphi 0, %s118
      %s133 = sphi 0, %s119
      %s137 = sphi 0, %s137
      %s139 = sphi 0, %s137
      %s140 = sphi 0, %s139
      %s154 = sphi 0, %s140
      %s158 = sphi 0, %s158
      %s160 = sphi 0, %s158
      %s161 = sphi 0, %s160
      %s175 = sphi 0, %s161
      %s181 = sphi 0, %s183
      %s184 = sphi 0, %s181
      %s185 = sphi 0, %s184
      %s201 = sphi 0, %s185
    $region4: #{tpu_custom_call.1} parent=1 // loop_header_branch
      %22 = sbr.rel (%p20) target = $region8
    $region5: #{tpu_custom_call.1} parent=1 // loop_body
      %s24 = ssub.s32 %s19, 1
      %s25 = ssub.s32 %s19, 2
      %s26 = sadd.s32 %s19, 1
      %s27 = ssub.s32 %s19, %s26
      %p28 = scmp.eq.s32.totalorder %s27, 0
      %s30 = sadd.s32 %s29, 1
      %s31 = scalar_select %p28, %s29, %s30
      %p34 = pneg %p28
      %p35 = scmp.eq.s32.totalorder %s19, 1
      %p36 = por %p34, %p35
      %p37 = scmp.ne.s32.totalorder %s29, %s32
      %p38 = scmp.eq.s32.totalorder %s19, 0
      %p39 = por %p37, %p38
      %p40 = scmp.ne.s32.totalorder %s29, %s32
      %p41 = scmp.eq.s32.totalorder %s24, 1
      %p42 = por %p40, %p41
      %p43 = scmp.ne.s32.totalorder %s32, %s33
      %p44 = scmp.eq.s32.totalorder %s24, 0
      %p45 = por %p43, %p44
      %p46 = scmp.ne.s32.totalorder %s32, %s33
      %p47 = scmp.eq.s32.totalorder %s25, 1
      %p48 = por %p46, %p47
      %p50 = scmp.ne.s32.totalorder %s33, %s49
      %p51 = scmp.eq.s32.totalorder %s25, 0
      %p52 = por %p50, %p51
      %s54 = sadd.s32 %s53, 1
      %p57 = scmp.eq.s32.totalorder %s19, 1
      %p58 = scmp.ne.s32.totalorder %s53, %s55
      %p59 = scmp.eq.s32.totalorder %s19, 0
      %p60 = por %p58, %p59
      %p61 = scmp.ne.s32.totalorder %s53, %s55
      %p62 = scmp.eq.s32.totalorder %s24, 1
      %p63 = por %p61, %p62
      %p64 = scmp.ne.s32.totalorder %s55, %s56
      %p65 = scmp.eq.s32.totalorder %s24, 0
      %p66 = por %p64, %p65
      %p67 = scmp.ne.s32.totalorder %s55, %s56
      %p68 = scmp.eq.s32.totalorder %s25, 1
      %p69 = por %p67, %p68
      %p71 = scmp.ne.s32.totalorder %s56, %s70
      %p72 = scmp.eq.s32.totalorder %s25, 0
      %p73 = por %p71, %p72
      %s75 = sadd.s32 %s74, 1
      %p78 = scmp.eq.s32.totalorder %s19, 1
      %p79 = scmp.ne.s32.totalorder %s74, %s76
      %p80 = scmp.eq.s32.totalorder %s19, 0
      %p81 = por %p79, %p80
      %p82 = scmp.ne.s32.totalorder %s74, %s76
      %p83 = scmp.eq.s32.totalorder %s24, 1
      %p84 = por %p82, %p83
      %p85 = scmp.ne.s32.totalorder %s76, %s77
      %p86 = scmp.eq.s32.totalorder %s24, 0
      %p87 = por %p85, %p86
      %p88 = scmp.ne.s32.totalorder %s76, %s77
      %p89 = scmp.eq.s32.totalorder %s25, 1
      %p90 = por %p88, %p89
      %p92 = scmp.ne.s32.totalorder %s77, %s91
      %p93 = scmp.eq.s32.totalorder %s25, 0
      %p94 = por %p92, %p93
      %s96 = sadd.s32 %s95, 1
      %p99 = scmp.eq.s32.totalorder %s19, 1
      %p100 = scmp.ne.s32.totalorder %s95, %s97
      %p101 = scmp.eq.s32.totalorder %s19, 0
      %p102 = por %p100, %p101
      %p103 = scmp.ne.s32.totalorder %s95, %s97
      %p104 = scmp.eq.s32.totalorder %s24, 1
      %p105 = por %p103, %p104
      %p106 = scmp.ne.s32.totalorder %s97, %s98
      %p107 = scmp.eq.s32.totalorder %s24, 0
      %p108 = por %p106, %p107
      %p109 = scmp.ne.s32.totalorder %s97, %s98
      %p110 = scmp.eq.s32.totalorder %s25, 1
      %p111 = por %p109, %p110
      %p113 = scmp.ne.s32.totalorder %s98, %s112
      %p114 = scmp.eq.s32.totalorder %s25, 0
      %p115 = por %p113, %p114
      %s117 = sadd.s32 %s116, 1
      %p120 = scmp.eq.s32.totalorder %s19, 1
      %p121 = scmp.ne.s32.totalorder %s116, %s118
      %p122 = scmp.eq.s32.totalorder %s19, 0
      %p123 = por %p121, %p122
      %p124 = scmp.ne.s32.totalorder %s116, %s118
      %p125 = scmp.eq.s32.totalorder %s24, 1
      %p126 = por %p124, %p125
      %p127 = scmp.ne.s32.totalorder %s118, %s119
      %p128 = scmp.eq.s32.totalorder %s24, 0
      %p129 = por %p127, %p128
      %p130 = scmp.ne.s32.totalorder %s118, %s119
      %p131 = scmp.eq.s32.totalorder %s25, 1
      %p132 = por %p130, %p131
      %p134 = scmp.ne.s32.totalorder %s119, %s133
      %p135 = scmp.eq.s32.totalorder %s25, 0
      %p136 = por %p134, %p135
      %s138 = sadd.s32 %s137, 1
      %p141 = scmp.eq.s32.totalorder %s19, 1
      %p142 = scmp.ne.s32.totalorder %s137, %s139
      %p143 = scmp.eq.s32.totalorder %s19, 0
      %p144 = por %p142, %p143
      %p145 = scmp.ne.s32.totalorder %s137, %s139
      %p146 = scmp.eq.s32.totalorder %s24, 1
      %p147 = por %p145, %p146
      %p148 = scmp.ne.s32.totalorder %s139, %s140
      %p149 = scmp.eq.s32.totalorder %s24, 0
      %p150 = por %p148, %p149
      %p151 = scmp.ne.s32.totalorder %s139, %s140
      %p152 = scmp.eq.s32.totalorder %s25, 1
      %p153 = por %p151, %p152
      %p155 = scmp.ne.s32.totalorder %s140, %s154
      %p156 = scmp.eq.s32.totalorder %s25, 0
      %p157 = por %p155, %p156
      %s159 = sadd.s32 %s158, 1
      %p162 = scmp.eq.s32.totalorder %s19, 1
      %p163 = scmp.ne.s32.totalorder %s158, %s160
      %p164 = scmp.eq.s32.totalorder %s19, 0
      %p165 = por %p163, %p164
      %p166 = scmp.ne.s32.totalorder %s158, %s160
      %p167 = scmp.eq.s32.totalorder %s24, 1
      %p168 = por %p166, %p167
      %p169 = scmp.ne.s32.totalorder %s160, %s161
      %p170 = scmp.eq.s32.totalorder %s24, 0
      %p171 = por %p169, %p170
      %p172 = scmp.ne.s32.totalorder %s160, %s161
      %p173 = scmp.eq.s32.totalorder %s25, 1
      %p174 = por %p172, %p173
      %p176 = scmp.ne.s32.totalorder %s161, %s175
      %p177 = scmp.eq.s32.totalorder %s25, 0
      %p178 = por %p176, %p177
      %s179 = ssub.s32 %s19, %s26
      %p180 = scmp.eq.s32.totalorder %s179, 0
      %s182 = sadd.s32 %s181, 1
      %s183 = scalar_select %p180, %s181, %s182
      %p186 = pneg %p180
      %p187 = scmp.eq.s32.totalorder %s19, 1
      %p188 = por %p186, %p187
      %p189 = scmp.ne.s32.totalorder %s181, %s184
      %p190 = scmp.eq.s32.totalorder %s19, 0
      %p191 = por %p189, %p190
      %p192 = scmp.ne.s32.totalorder %s181, %s184
      %p193 = scmp.eq.s32.totalorder %s24, 1
      %p194 = por %p192, %p193
      %p195 = scmp.ne.s32.totalorder %s184, %s185
      %p196 = scmp.eq.s32.totalorder %s24, 0
      %p197 = por %p195, %p196
      %p198 = scmp.ne.s32.totalorder %s184, %s185
      %p199 = scmp.eq.s32.totalorder %s25, 1
      %p200 = por %p198, %p199
      %p202 = scmp.ne.s32.totalorder %s185, %s201
      %p203 = scmp.eq.s32.totalorder %s25, 0
      %p204 = por %p202, %p203
      %p205 = scmp.le.s32.totalorder 1, %s19
      %p206 = scmp.lt.s32.totalorder %s19, 3
      %p207 = pnand %p205, %p206
      %p208 = pneg %p207
      // Predicated region
      $region9: #{tpu_custom_call.1} parent=5 // pred_check
        _
      $region10: #{tpu_custom_call.1} parent=5 // pred_check_branch
        %210 = sbr.rel (%p207) target = $region12
      $region11: #{tpu_custom_call.1} parent=5 // pred_region
        %s211 = ssub.s32 %s19, 1
        // Predicated region
        $region13: #{tpu_custom_call.1} parent=11 // pred_check
          %p212 = pneg %p66
        $region14: #{tpu_custom_call.1} parent=11 // pred_check_branch
          %214 = sbr.rel (%p212) target = $region16
        $region15: #{tpu_custom_call.1} parent=11 // pred_region
          %s216 = ssub.s32 2048, 2048
          %217 = vsyncadd [#allocation3], %s216
          %s218 = sshll.u32 [#allocation2], 4
          %s219 = int_to_ptr.vmem [resolvable:$true] %s218
          %224 = dma.hbm_to_vmem [thread:$0]  %s1, 2048, %s219, [#allocation3], 128, 128, 8
        $region16: #{tpu_custom_call.1} parent=11 // pred_fallthru
          _
        // Predicated region
        $region17: #{tpu_custom_call.1} parent=11 // pred_check
          %p225 = pneg %p87
        $region18: #{tpu_custom_call.1} parent=11 // pred_check_branch
          %227 = sbr.rel (%p225) target = $region20
        $region19: #{tpu_custom_call.1} parent=11 // pred_region
          %s229 = ssub.s32 2048, 2048
          %230 = vsyncadd [#allocation6], %s229
          %s231 = sshll.u32 [#allocation5], 4
          %s232 = int_to_ptr.vmem [resolvable:$true] %s231
          %237 = dma.hbm_to_vmem [thread:$0]  %s2, 2048, %s232, [#allocation6], 128, 128, 8
        $region20: #{tpu_custom_call.1} parent=11 // pred_fallthru
          _
        // Predicated region
        $region21: #{tpu_custom_call.1} parent=11 // pred_check
          %p238 = pneg %p108
        $region22: #{tpu_custom_call.1} parent=11 // pred_check_branch
          %240 = sbr.rel (%p238) target = $region24
        $region23: #{tpu_custom_call.1} parent=11 // pred_region
          %s242 = ssub.s32 2048, 2048
          %243 = vsyncadd [#allocation6], %s242
          %s244 = sshll.u32 [#allocation7], 4
          %s245 = int_to_ptr.vmem [resolvable:$true] %s244
          %250 = dma.hbm_to_vmem [thread:$0]  %s3, 2048, %s245, [#allocation6], 128, 128, 8
        $region24: #{tpu_custom_call.1} parent=11 // pred_fallthru
          _
        // Predicated region
        $region25: #{tpu_custom_call.1} parent=11 // pred_check
          %p251 = pneg %p129
        $region26: #{tpu_custom_call.1} parent=11 // pred_check_branch
          %253 = sbr.rel (%p251) target = $region28
        $region27: #{tpu_custom_call.1} parent=11 // pred_region
          _
        $region28: #{tpu_custom_call.1} parent=11 // pred_fallthru
          _
        // Predicated region
        $region29: #{tpu_custom_call.1} parent=11 // pred_check
          %p254 = pneg %p150
        $region30: #{tpu_custom_call.1} parent=11 // pred_check_branch
          %256 = sbr.rel (%p254) target = $region32
        $region31: #{tpu_custom_call.1} parent=11 // pred_region
          %s258 = ssub.s32 2048, 2048
          %259 = vsyncadd [#allocation9], %s258
          %s260 = sshll.u32 [#allocation8], 4
          %s261 = int_to_ptr.vmem [resolvable:$true] %s260
          %266 = dma.hbm_to_vmem [thread:$0]  %s5, 2048, %s261, [#allocation9], 128, 128, 8
        $region32: #{tpu_custom_call.1} parent=11 // pred_fallthru
          _
        // Predicated region
        $region33: #{tpu_custom_call.1} parent=11 // pred_check
          %p267 = pneg %p171
        $region34: #{tpu_custom_call.1} parent=11 // pred_check_branch
          %269 = sbr.rel (%p267) target = $region36
        $region35: #{tpu_custom_call.1} parent=11 // pred_region
          _
        $region36: #{tpu_custom_call.1} parent=11 // pred_fallthru
          _
      $region12: #{tpu_custom_call.1} parent=5 // pred_fallthru
        _
      %p270 = scmp.lt.s32.totalorder %s19, 2
      // Predicated region
      $region37: #{tpu_custom_call.1} parent=5 // pred_check
        %p271 = pneg %p270
      $region38: #{tpu_custom_call.1} parent=5 // pred_check_branch
        %273 = sbr.rel (%p271) target = $region40
      $region39: #{tpu_custom_call.1} parent=5 // pred_region
        // Predicated region
        $region41: #{tpu_custom_call.1} parent=39 // pred_check
          %p274 = pneg %p39
        $region42: #{tpu_custom_call.1} parent=39 // pred_check_branch
          %276 = sbr.rel (%p274) target = $region44
        $region43: #{tpu_custom_call.1} parent=39 // pred_region
          %p277 = scmp.lt.s32.totalorder %s19, 1
          %s278 = scalar_select %p277, %s19, 1
          %s279 = smul.addr %s278, 8
          %s280 = smul.addr %s279, 8
          %s281 = scalar_lea.vmem %s0, %s280
        $region44: #{tpu_custom_call.1} parent=39 // pred_fallthru
          _
      $region40: #{tpu_custom_call.1} parent=5 // pred_fallthru
        _
      %p282 = scmp.le.s32.totalorder 1, %s19
      %p283 = scmp.lt.s32.totalorder %s19, 3
      %p284 = pnand %p282, %p283
      %p285 = pneg %p284
      // Predicated region
      $region45: #{tpu_custom_call.1} parent=5 // pred_check
        _
      $region46: #{tpu_custom_call.1} parent=5 // pred_check_branch
        %287 = sbr.rel (%p284) target = $region48
      $region47: #{tpu_custom_call.1} parent=5 // pred_region
        %s288 = ssub.s32 %s19, 1
        // Predicated region
        $region49: #{tpu_custom_call.1} parent=47 // pred_check
          %p289 = pneg %p66
        $region50: #{tpu_custom_call.1} parent=47 // pred_check_branch
          %291 = sbr.rel (%p289) target = $region52
        $region51: #{tpu_custom_call.1} parent=47 // pred_region
          %292 = dma.done [#allocation3], 2048
        $region52: #{tpu_custom_call.1} parent=47 // pred_fallthru
          _
        // Predicated region
        $region53: #{tpu_custom_call.1} parent=47 // pred_check
          %p293 = pneg %p87
        $region54: #{tpu_custom_call.1} parent=47 // pred_check_branch
          %295 = sbr.rel (%p293) target = $region56
        $region55: #{tpu_custom_call.1} parent=47 // pred_region
          %296 = dma.done [#allocation6], 2048
        $region56: #{tpu_custom_call.1} parent=47 // pred_fallthru
          _
        // Predicated region
        $region57: #{tpu_custom_call.1} parent=47 // pred_check
          %p297 = pneg %p108
        $region58: #{tpu_custom_call.1} parent=47 // pred_check_branch
          %299 = sbr.rel (%p297) target = $region60
        $region59: #{tpu_custom_call.1} parent=47 // pred_region
          %300 = dma.done [#allocation6], 2048
        $region60: #{tpu_custom_call.1} parent=47 // pred_fallthru
          _
        // Predicated region
        $region61: #{tpu_custom_call.1} parent=47 // pred_check
          %p301 = pneg %p150
        $region62: #{tpu_custom_call.1} parent=47 // pred_check_branch
          %303 = sbr.rel (%p301) target = $region64
        $region63: #{tpu_custom_call.1} parent=47 // pred_region
          %304 = dma.done [#allocation9], 2048
        $region64: #{tpu_custom_call.1} parent=47 // pred_fallthru
          _
        %p305 = scmp.lt.s32.totalorder %s24, 1
        %s306 = scalar_select %p305, %s24, 1
        %s307 = smul.addr %s306, 8
        %s308 = smul.addr %s307, 8
        %s309 = scalar_lea.vmem %s0, %s308
        %p310 = pneg %p45
        %p311 = pneg %p42
        %p312 = pneg %p66
        %p313 = pneg %p63
        %p314 = pneg %p87
        %p315 = pneg %p84
        %p316 = pneg %p108
        %p317 = pneg %p105
        %p318 = pneg %p129
        %p319 = pneg %p126
        %p320 = pneg %p150
        %p321 = pneg %p147
        %p322 = pneg %p171
        %p323 = pneg %p168
        %p324 = pneg %p197
        %p325 = pneg %p194
        %s326 = sand.u32 %s184, 1
        %s327 = scalar_lea.sflag [#allocation4], %s326
        %s328 = sand.u32 %s184, 1
        %s329 = smul.addr %s328, 64
        %s330 = scalar_lea.vmem [#allocation10], %s329
        %p331 = scmp.lt.s32.totalorder %s24, 1
        %s332 = scalar_select %p331, %s24, 1
        %s333 = smul.addr %s332, 8
        %s334 = smul.addr %s333, 8
        %s335 = scalar_lea.vmem %s0, %s334
        %v336 = vld [vmem:[%s335] sm:$0xff]
        %v337 = vld [vmem:[%s335 + $0x8] sm:$0xff]
        %v338 = vld [vmem:[%s335 + $0x10] sm:$0xff]
        %v339 = vld [vmem:[%s335 + $0x18] sm:$0xff]
        %v340 = vld [vmem:[%s335 + $0x20] sm:$0xff]
        %v341 = vld [vmem:[%s335 + $0x28] sm:$0xff]
        %v342 = vld [vmem:[%s335 + $0x30] sm:$0xff]
        %v343 = vld [vmem:[%s335 + $0x38] sm:$0xff]
        %v344 = vld [vmem:[#allocation2] sm:$0xff]
        %v345 = vld [vmem:[#allocation2 + $0x8] sm:$0xff]
        %v346 = vld [vmem:[#allocation2 + $0x10] sm:$0xff]
        %v347 = vld [vmem:[#allocation2 + $0x18] sm:$0xff]
        %v348 = vld [vmem:[#allocation2 + $0x20] sm:$0xff]
        %v349 = vld [vmem:[#allocation2 + $0x28] sm:$0xff]
        %v350 = vld [vmem:[#allocation2 + $0x30] sm:$0xff]
        %v351 = vld [vmem:[#allocation2 + $0x38] sm:$0xff]
        %v352 = vld [vmem:[#allocation2 + $0x40] sm:$0xff]
        %v353 = vld [vmem:[#allocation2 + $0x48] sm:$0xff]
        %v354 = vld [vmem:[#allocation2 + $0x50] sm:$0xff]
        %v355 = vld [vmem:[#allocation2 + $0x58] sm:$0xff]
        %v356 = vld [vmem:[#allocation2 + $0x60] sm:$0xff]
        %v357 = vld [vmem:[#allocation2 + $0x68] sm:$0xff]
        %v358 = vld [vmem:[#allocation2 + $0x70] sm:$0xff]
        %v359 = vld [vmem:[#allocation2 + $0x78] sm:$0xff]
        %360 = vmatprep.subr.mxu0 0.0
        %361 = vmatpush1.xpose.msra.mxu0 0.0
        %362 = vmatprep.subr.mxu0 0.0
        %363 = vmatpush1.xpose.msra.mxu0 0.0
        %364 = vmatprep.subr.mxu0 0.0
        %365 = vmatpush1.xpose.msra.mxu0 0.0
        %366 = vmatprep.subr.mxu0 0.0
        %367 = vmatpush1.xpose.msra.mxu0 0.0
        %368 = vmatprep.subr.mxu0 0.0
        %369 = vmatpush1.xpose.msra.mxu0 0.0
        %370 = vmatprep.subr.mxu0 0.0
        %371 = vmatpush1.xpose.msra.mxu0 0.0
        %372 = vmatprep.subr.mxu0 0.0
        %373 = vmatpush1.xpose.msra.mxu0 0.0
        %374 = vmatprep.subr.mxu0 0.0
        %375 = vmatpush1.xpose.msra.mxu0 0.0
        %376 = vmatprep.subr.mxu0 0.0
        %377 = vmatpush1.xpose.msra.mxu0 %v343
        %378 = vmatprep.subr.mxu0 0.0
        %379 = vmatpush1.xpose.msra.mxu0 %v342
        %380 = vmatprep.subr.mxu0 0.0
        %381 = vmatpush1.xpose.msra.mxu0 %v341
        %382 = vmatprep.subr.mxu0 0.0
        %383 = vmatpush1.xpose.msra.mxu0 %v340
        %384 = vmatprep.subr.mxu0 0.0
        %385 = vmatpush1.xpose.msra.mxu0 %v339
        %386 = vmatprep.subr.mxu0 0.0
        %387 = vmatpush1.xpose.msra.mxu0 %v338
        %388 = vmatprep.subr.mxu0 0.0
        %389 = vmatpush1.xpose.msra.mxu0 %v337
        %390 = vmatprep.subr.mxu0 0.0
        %391 = vmatpush1.xpose.msra.mxu0 %v336
        %392 = vmatprep.subr.mxu0 0.0
        %393 = vmatpush2.xpose.msra.mxu0 0.0
        %394 = vmatprep.subr.mxu0 0.0
        %395 = vmatpush2.xpose.msra.mxu0 0.0
        %396 = vmatprep.subr.mxu0 0.0
        %397 = vmatpush2.xpose.msra.mxu0 0.0
        %398 = vmatprep.subr.mxu0 0.0
        %399 = vmatpush2.xpose.msra.mxu0 0.0
        %400 = vmatprep.subr.mxu0 0.0
        %401 = vmatpush2.xpose.msra.mxu0 0.0
        %402 = vmatprep.subr.mxu0 0.0
        %403 = vmatpush2.xpose.msra.mxu0 0.0
        %404 = vmatprep.subr.mxu0 0.0
        %405 = vmatpush2.xpose.msra.mxu0 0.0
        %406 = vmatprep.subr.mxu0 0.0
        %407 = vmatpush2.xpose.msra.mxu0 0.0
        %408 = vmatprep.subr.mxu0 0.0
        %409 = vmatpush2.xpose.msra.mxu0 0.0
        %410 = vmatprep.subr.mxu0 0.0
        %411 = vmatpush2.xpose.msra.mxu0 0.0
        %412 = vmatprep.subr.mxu0 0.0
        %413 = vmatpush2.xpose.msra.mxu0 0.0
        %414 = vmatprep.subr.mxu0 0.0
        %415 = vmatpush2.xpose.msra.mxu0 0.0
        %416 = vmatprep.subr.mxu0 0.0
        %417 = vmatpush2.xpose.msra.mxu0 0.0
        %418 = vmatprep.subr.mxu0 0.0
        %419 = vmatpush2.xpose.msra.mxu0 0.0
        %420 = vmatprep.subr.mxu0 0.0
        %421 = vmatpush2.xpose.msra.mxu0 0.0
        %422 = vmatprep.subr.mxu0 0.0
        %423 = vmatpush2.xpose.msra.mxu0 0.0
        %424 = vmatprep.mubr.f32.mxu0 0.0
        %425 = vmatmul.mubr.f32.gmra.mxu0 %v344
        %v426 = vpop.f32.mrf.mxu0
        %v427 = vadd.f32 0.0, %v426
        %v428 = vpop.f32.mrf.mxu0
        %429 = vmatprep.mubr.f32.mxu0 0.0
        %430 = vmatmul.mubr.f32.gmra.mxu0 %v345
        %v431 = vpop.f32.mrf.mxu0
        %v432 = vadd.f32 0.0, %v431
        %v433 = vpop.f32.mrf.mxu0
        %434 = vmatprep.mubr.f32.mxu0 0.0
        %435 = vmatmul.mubr.f32.gmra.mxu0 %v346
        %v436 = vpop.f32.mrf.mxu0
        %v437 = vadd.f32 0.0, %v436
        %v438 = vpop.f32.mrf.mxu0
        %439 = vmatprep.mubr.f32.mxu0 0.0
        %440 = vmatmul.mubr.f32.gmra.mxu0 %v347
        %v441 = vpop.f32.mrf.mxu0
        %v442 = vadd.f32 0.0, %v441
        %v443 = vpop.f32.mrf.mxu0
        %444 = vmatprep.mubr.f32.mxu0 0.0
        %445 = vmatmul.mubr.f32.gmra.mxu0 %v348
        %v446 = vpop.f32.mrf.mxu0
        %v447 = vadd.f32 0.0, %v446
        %v448 = vpop.f32.mrf.mxu0
        %449 = vmatprep.mubr.f32.mxu0 0.0
        %450 = vmatmul.mubr.f32.gmra.mxu0 %v349
        %v451 = vpop.f32.mrf.mxu0
        %v452 = vadd.f32 0.0, %v451
        %v453 = vpop.f32.mrf.mxu0
        %454 = vmatprep.mubr.f32.mxu0 0.0
        %455 = vmatmul.mubr.f32.gmra.mxu0 %v350
        %v456 = vpop.f32.mrf.mxu0
        %v457 = vadd.f32 0.0, %v456
        %v458 = vpop.f32.mrf.mxu0
        %459 = vmatprep.mubr.f32.mxu0 0.0
        %460 = vmatmul.mubr.f32.gmra.mxu0 %v351
        %v461 = vpop.f32.mrf.mxu0
        %v462 = vadd.f32 0.0, %v461
        %v463 = vpop.f32.mrf.mxu0
        %464 = vmatprep.mubr.f32.mxu0 0.0
        %465 = vmatmul.mubr.f32.gmra.mxu0 %v352
        %v466 = vpop.f32.mrf.mxu0
        %v467 = vadd.f32 0.0, %v466
        %v468 = vpop.f32.mrf.mxu0
        %469 = vmatprep.mubr.f32.mxu0 0.0
        %470 = vmatmul.mubr.f32.gmra.mxu0 %v353
        %v471 = vpop.f32.mrf.mxu0
        %v472 = vadd.f32 0.0, %v471
        %v473 = vpop.f32.mrf.mxu0
        %474 = vmatprep.mubr.f32.mxu0 0.0
        %475 = vmatmul.mubr.f32.gmra.mxu0 %v354
        %v476 = vpop.f32.mrf.mxu0
        %v477 = vadd.f32 0.0, %v476
        %v478 = vpop.f32.mrf.mxu0
        %479 = vmatprep.mubr.f32.mxu0 0.0
        %480 = vmatmul.mubr.f32.gmra.mxu0 %v355
        %v481 = vpop.f32.mrf.mxu0
        %v482 = vadd.f32 0.0, %v481
        %v483 = vpop.f32.mrf.mxu0
        %484 = vmatprep.mubr.f32.mxu0 0.0
        %485 = vmatmul.mubr.f32.gmra.mxu0 %v356
        %v486 = vpop.f32.mrf.mxu0
        %v487 = vadd.f32 0.0, %v486
        %v488 = vpop.f32.mrf.mxu0
        %489 = vmatprep.mubr.f32.mxu0 0.0
        %490 = vmatmul.mubr.f32.gmra.mxu0 %v357
        %v491 = vpop.f32.mrf.mxu0
        %v492 = vadd.f32 0.0, %v491
        %v493 = vpop.f32.mrf.mxu0
        %494 = vmatprep.mubr.f32.mxu0 0.0
        %495 = vmatmul.mubr.f32.gmra.mxu0 %v358
        %v496 = vpop.f32.mrf.mxu0
        %v497 = vadd.f32 0.0, %v496
        %v498 = vpop.f32.mrf.mxu0
        %499 = vmatprep.mubr.f32.mxu0 0.0
        %500 = vmatmul.mubr.f32.gmra.mxu0 %v359
        %v501 = vpop.f32.mrf.mxu0
        %v502 = vadd.f32 0.0, %v501
        %v503 = vpop.f32.mrf.mxu0
        %504 = vdwg.mxu0
        %v505 = vld [vmem:[#allocation5] sm:$0xff]
        %v506 = vld [vmem:[#allocation5 + $0x8] sm:$0xff]
        %v507 = vld [vmem:[#allocation5 + $0x10] sm:$0xff]
        %v508 = vld [vmem:[#allocation5 + $0x18] sm:$0xff]
        %v509 = vld [vmem:[#allocation5 + $0x20] sm:$0xff]
        %v510 = vld [vmem:[#allocation5 + $0x28] sm:$0xff]
        %v511 = vld [vmem:[#allocation5 + $0x30] sm:$0xff]
        %v512 = vld [vmem:[#allocation5 + $0x38] sm:$0xff]
        %v513 = vld [vmem:[#allocation5 + $0x40] sm:$0xff]
        %v514 = vld [vmem:[#allocation5 + $0x48] sm:$0xff]
        %v515 = vld [vmem:[#allocation5 + $0x50] sm:$0xff]
        %v516 = vld [vmem:[#allocation5 + $0x58] sm:$0xff]
        %v517 = vld [vmem:[#allocation5 + $0x60] sm:$0xff]
        %v518 = vld [vmem:[#allocation5 + $0x68] sm:$0xff]
        %v519 = vld [vmem:[#allocation5 + $0x70] sm:$0xff]
        %v520 = vld [vmem:[#allocation5 + $0x78] sm:$0xff]
        %521 = vmatprep.subr.mxu0 0.0
        %522 = vmatpush1.xpose.msra.mxu0 0.0
        %523 = vmatprep.subr.mxu0 0.0
        %524 = vmatpush1.xpose.msra.mxu0 0.0
        %525 = vmatprep.subr.mxu0 0.0
        %526 = vmatpush1.xpose.msra.mxu0 0.0
        %527 = vmatprep.subr.mxu0 0.0
        %528 = vmatpush1.xpose.msra.mxu0 0.0
        %529 = vmatprep.subr.mxu0 0.0
        %530 = vmatpush1.xpose.msra.mxu0 0.0
        %531 = vmatprep.subr.mxu0 0.0
        %532 = vmatpush1.xpose.msra.mxu0 0.0
        %533 = vmatprep.subr.mxu0 0.0
        %534 = vmatpush1.xpose.msra.mxu0 0.0
        %535 = vmatprep.subr.mxu0 0.0
        %536 = vmatpush1.xpose.msra.mxu0 0.0
        %537 = vmatprep.subr.mxu0 0.0
        %538 = vmatpush1.xpose.msra.mxu0 %v343
        %539 = vmatprep.subr.mxu0 0.0
        %540 = vmatpush1.xpose.msra.mxu0 %v342
        %541 = vmatprep.subr.mxu0 0.0
        %542 = vmatpush1.xpose.msra.mxu0 %v341
        %543 = vmatprep.subr.mxu0 0.0
        %544 = vmatpush1.xpose.msra.mxu0 %v340
        %545 = vmatprep.subr.mxu0 0.0
        %546 = vmatpush1.xpose.msra.mxu0 %v339
        %547 = vmatprep.subr.mxu0 0.0
        %548 = vmatpush1.xpose.msra.mxu0 %v338
        %549 = vmatprep.subr.mxu0 0.0
        %550 = vmatpush1.xpose.msra.mxu0 %v337
        %551 = vmatprep.subr.mxu0 0.0
        %552 = vmatpush1.xpose.msra.mxu0 %v336
        %553 = vmatprep.subr.mxu0 0.0
        %554 = vmatpush2.xpose.msra.mxu0 0.0
        %555 = vmatprep.subr.mxu0 0.0
        %556 = vmatpush2.xpose.msra.mxu0 0.0
        %557 = vmatprep.subr.mxu0 0.0
        %558 = vmatpush2.xpose.msra.mxu0 0.0
        %559 = vmatprep.subr.mxu0 0.0
        %560 = vmatpush2.xpose.msra.mxu0 0.0
        %561 = vmatprep.subr.mxu0 0.0
        %562 = vmatpush2.xpose.msra.mxu0 0.0
        %563 = vmatprep.subr.mxu0 0.0
        %564 = vmatpush2.xpose.msra.mxu0 0.0
        %565 = vmatprep.subr.mxu0 0.0
        %566 = vmatpush2.xpose.msra.mxu0 0.0
        %567 = vmatprep.subr.mxu0 0.0
        %568 = vmatpush2.xpose.msra.mxu0 0.0
        %569 = vmatprep.subr.mxu0 0.0
        %570 = vmatpush2.xpose.msra.mxu0 0.0
        %571 = vmatprep.subr.mxu0 0.0
        %572 = vmatpush2.xpose.msra.mxu0 0.0
        %573 = vmatprep.subr.mxu0 0.0
        %574 = vmatpush2.xpose.msra.mxu0 0.0
        %575 = vmatprep.subr.mxu0 0.0
        %576 = vmatpush2.xpose.msra.mxu0 0.0
        %577 = vmatprep.subr.mxu0 0.0
        %578 = vmatpush2.xpose.msra.mxu0 0.0
        %579 = vmatprep.subr.mxu0 0.0
        %580 = vmatpush2.xpose.msra.mxu0 0.0
        %581 = vmatprep.subr.mxu0 0.0
        %582 = vmatpush2.xpose.msra.mxu0 0.0
        %583 = vmatprep.subr.mxu0 0.0
        %584 = vmatpush2.xpose.msra.mxu0 0.0
        %585 = vmatprep.mubr.f32.mxu0 0.0
        %586 = vmatmul.mubr.f32.gmra.mxu0 %v505
        %v587 = vpop.f32.mrf.mxu0
        %v588 = vadd.f32 0.0, %v587
        %v589 = vpop.f32.mrf.mxu0
        %590 = vmatprep.mubr.f32.mxu0 0.0
        %591 = vmatmul.mubr.f32.gmra.mxu0 %v506
        %v592 = vpop.f32.mrf.mxu0
        %v593 = vadd.f32 0.0, %v592
        %v594 = vpop.f32.mrf.mxu0
        %595 = vmatprep.mubr.f32.mxu0 0.0
        %596 = vmatmul.mubr.f32.gmra.mxu0 %v507
        %v597 = vpop.f32.mrf.mxu0
        %v598 = vadd.f32 0.0, %v597
        %v599 = vpop.f32.mrf.mxu0
        %600 = vmatprep.mubr.f32.mxu0 0.0
        %601 = vmatmul.mubr.f32.gmra.mxu0 %v508
        %v602 = vpop.f32.mrf.mxu0
        %v603 = vadd.f32 0.0, %v602
        %v604 = vpop.f32.mrf.mxu0
        %605 = vmatprep.mubr.f32.mxu0 0.0
        %606 = vmatmul.mubr.f32.gmra.mxu0 %v509
        %v607 = vpop.f32.mrf.mxu0
        %v608 = vadd.f32 0.0, %v607
        %v609 = vpop.f32.mrf.mxu0
        %610 = vmatprep.mubr.f32.mxu0 0.0
        %611 = vmatmul.mubr.f32.gmra.mxu0 %v510
        %v612 = vpop.f32.mrf.mxu0
        %v613 = vadd.f32 0.0, %v612
        %v614 = vpop.f32.mrf.mxu0
        %615 = vmatprep.mubr.f32.mxu0 0.0
        %616 = vmatmul.mubr.f32.gmra.mxu0 %v511
        %v617 = vpop.f32.mrf.mxu0
        %v618 = vadd.f32 0.0, %v617
        %v619 = vpop.f32.mrf.mxu0
        %620 = vmatprep.mubr.f32.mxu0 0.0
        %621 = vmatmul.mubr.f32.gmra.mxu0 %v512
        %v622 = vpop.f32.mrf.mxu0
        %v623 = vadd.f32 0.0, %v622
        %v624 = vpop.f32.mrf.mxu0
        %625 = vmatprep.mubr.f32.mxu0 0.0
        %626 = vmatmul.mubr.f32.gmra.mxu0 %v513
        %v627 = vpop.f32.mrf.mxu0
        %v628 = vadd.f32 0.0, %v627
        %v629 = vpop.f32.mrf.mxu0
        %630 = vmatprep.mubr.f32.mxu0 0.0
        %631 = vmatmul.mubr.f32.gmra.mxu0 %v514
        %v632 = vpop.f32.mrf.mxu0
        %v633 = vadd.f32 0.0, %v632
        %v634 = vpop.f32.mrf.mxu0
        %635 = vmatprep.mubr.f32.mxu0 0.0
        %636 = vmatmul.mubr.f32.gmra.mxu0 %v515
        %v637 = vpop.f32.mrf.mxu0
        %v638 = vadd.f32 0.0, %v637
        %v639 = vpop.f32.mrf.mxu0
        %640 = vmatprep.mubr.f32.mxu0 0.0
        %641 = vmatmul.mubr.f32.gmra.mxu0 %v516
        %v642 = vpop.f32.mrf.mxu0
        %v643 = vadd.f32 0.0, %v642
        %v644 = vpop.f32.mrf.mxu0
        %645 = vmatprep.mubr.f32.mxu0 0.0
        %646 = vmatmul.mubr.f32.gmra.mxu0 %v517
        %v647 = vpop.f32.mrf.mxu0
        %v648 = vadd.f32 0.0, %v647
        %v649 = vpop.f32.mrf.mxu0
        %650 = vmatprep.mubr.f32.mxu0 0.0
        %651 = vmatmul.mubr.f32.gmra.mxu0 %v518
        %v652 = vpop.f32.mrf.mxu0
        %v653 = vadd.f32 0.0, %v652
        %v654 = vpop.f32.mrf.mxu0
        %655 = vmatprep.mubr.f32.mxu0 0.0
        %656 = vmatmul.mubr.f32.gmra.mxu0 %v519
        %v657 = vpop.f32.mrf.mxu0
        %v658 = vadd.f32 0.0, %v657
        %v659 = vpop.f32.mrf.mxu0
        %660 = vmatprep.mubr.f32.mxu0 0.0
        %661 = vmatmul.mubr.f32.gmra.mxu0 %v520
        %v662 = vpop.f32.mrf.mxu0
        %v663 = vadd.f32 0.0, %v662
        %v664 = vpop.f32.mrf.mxu0
        %665 = vdwg.mxu0
        %v666 = vld [vmem:[#allocation7] sm:$0xff]
        %v667 = vld [vmem:[#allocation7 + $0x8] sm:$0xff]
        %v668 = vld [vmem:[#allocation7 + $0x10] sm:$0xff]
        %v669 = vld [vmem:[#allocation7 + $0x18] sm:$0xff]
        %v670 = vld [vmem:[#allocation7 + $0x20] sm:$0xff]
        %v671 = vld [vmem:[#allocation7 + $0x28] sm:$0xff]
        %v672 = vld [vmem:[#allocation7 + $0x30] sm:$0xff]
        %v673 = vld [vmem:[#allocation7 + $0x38] sm:$0xff]
        %v674 = vld [vmem:[#allocation7 + $0x40] sm:$0xff]
        %v675 = vld [vmem:[#allocation7 + $0x48] sm:$0xff]
        %v676 = vld [vmem:[#allocation7 + $0x50] sm:$0xff]
        %v677 = vld [vmem:[#allocation7 + $0x58] sm:$0xff]
        %v678 = vld [vmem:[#allocation7 + $0x60] sm:$0xff]
        %v679 = vld [vmem:[#allocation7 + $0x68] sm:$0xff]
        %v680 = vld [vmem:[#allocation7 + $0x70] sm:$0xff]
        %v681 = vld [vmem:[#allocation7 + $0x78] sm:$0xff]
        %682 = vmatprep.subr.mxu0 0.0
        %683 = vmatpush1.xpose.msra.mxu0 0.0
        %684 = vmatprep.subr.mxu0 0.0
        %685 = vmatpush1.xpose.msra.mxu0 0.0
        %686 = vmatprep.subr.mxu0 0.0
        %687 = vmatpush1.xpose.msra.mxu0 0.0
        %688 = vmatprep.subr.mxu0 0.0
        %689 = vmatpush1.xpose.msra.mxu0 0.0
        %690 = vmatprep.subr.mxu0 0.0
        %691 = vmatpush1.xpose.msra.mxu0 0.0
        %692 = vmatprep.subr.mxu0 0.0
        %693 = vmatpush1.xpose.msra.mxu0 0.0
        %694 = vmatprep.subr.mxu0 0.0
        %695 = vmatpush1.xpose.msra.mxu0 0.0
        %696 = vmatprep.subr.mxu0 0.0
        %697 = vmatpush1.xpose.msra.mxu0 0.0
        %698 = vmatprep.subr.mxu0 0.0
        %699 = vmatpush1.xpose.msra.mxu0 %v343
        %700 = vmatprep.subr.mxu0 0.0
        %701 = vmatpush1.xpose.msra.mxu0 %v342
        %702 = vmatprep.subr.mxu0 0.0
        %703 = vmatpush1.xpose.msra.mxu0 %v341
        %704 = vmatprep.subr.mxu0 0.0
        %705 = vmatpush1.xpose.msra.mxu0 %v340
        %706 = vmatprep.subr.mxu0 0.0
        %707 = vmatpush1.xpose.msra.mxu0 %v339
        %708 = vmatprep.subr.mxu0 0.0
        %709 = vmatpush1.xpose.msra.mxu0 %v338
        %710 = vmatprep.subr.mxu0 0.0
        %711 = vmatpush1.xpose.msra.mxu0 %v337
        %712 = vmatprep.subr.mxu0 0.0
        %713 = vmatpush1.xpose.msra.mxu0 %v336
        %714 = vmatprep.subr.mxu0 0.0
        %715 = vmatpush2.xpose.msra.mxu0 0.0
        %716 = vmatprep.subr.mxu0 0.0
        %717 = vmatpush2.xpose.msra.mxu0 0.0
        %718 = vmatprep.subr.mxu0 0.0
        %719 = vmatpush2.xpose.msra.mxu0 0.0
        %720 = vmatprep.subr.mxu0 0.0
        %721 = vmatpush2.xpose.msra.mxu0 0.0
        %722 = vmatprep.subr.mxu0 0.0
        %723 = vmatpush2.xpose.msra.mxu0 0.0
        %724 = vmatprep.subr.mxu0 0.0
        %725 = vmatpush2.xpose.msra.mxu0 0.0
        %726 = vmatprep.subr.mxu0 0.0
        %727 = vmatpush2.xpose.msra.mxu0 0.0
        %728 = vmatprep.subr.mxu0 0.0
        %729 = vmatpush2.xpose.msra.mxu0 0.0
        %730 = vmatprep.subr.mxu0 0.0
        %731 = vmatpush2.xpose.msra.mxu0 0.0
        %732 = vmatprep.subr.mxu0 0.0
        %733 = vmatpush2.xpose.msra.mxu0 0.0
        %734 = vmatprep.subr.mxu0 0.0
        %735 = vmatpush2.xpose.msra.mxu0 0.0
        %736 = vmatprep.subr.mxu0 0.0
        %737 = vmatpush2.xpose.msra.mxu0 0.0
        %738 = vmatprep.subr.mxu0 0.0
        %739 = vmatpush2.xpose.msra.mxu0 0.0
        %740 = vmatprep.subr.mxu0 0.0
        %741 = vmatpush2.xpose.msra.mxu0 0.0
        %742 = vmatprep.subr.mxu0 0.0
        %743 = vmatpush2.xpose.msra.mxu0 0.0
        %744 = vmatprep.subr.mxu0 0.0
        %745 = vmatpush2.xpose.msra.mxu0 0.0
        %746 = vmatprep.mubr.f32.mxu0 0.0
        %747 = vmatmul.mubr.f32.gmra.mxu0 %v666
        %v748 = vpop.f32.mrf.mxu0
        %v749 = vadd.f32 0.0, %v748
        %v750 = vpop.f32.mrf.mxu0
        %751 = vmatprep.mubr.f32.mxu0 0.0
        %752 = vmatmul.mubr.f32.gmra.mxu0 %v667
        %v753 = vpop.f32.mrf.mxu0
        %v754 = vadd.f32 0.0, %v753
        %v755 = vpop.f32.mrf.mxu0
        %756 = vmatprep.mubr.f32.mxu0 0.0
        %757 = vmatmul.mubr.f32.gmra.mxu0 %v668
        %v758 = vpop.f32.mrf.mxu0
        %v759 = vadd.f32 0.0, %v758
        %v760 = vpop.f32.mrf.mxu0
        %761 = vmatprep.mubr.f32.mxu0 0.0
        %762 = vmatmul.mubr.f32.gmra.mxu0 %v669
        %v763 = vpop.f32.mrf.mxu0
        %v764 = vadd.f32 0.0, %v763
        %v765 = vpop.f32.mrf.mxu0
        %766 = vmatprep.mubr.f32.mxu0 0.0
        %767 = vmatmul.mubr.f32.gmra.mxu0 %v670
        %v768 = vpop.f32.mrf.mxu0
        %v769 = vadd.f32 0.0, %v768
        %v770 = vpop.f32.mrf.mxu0
        %771 = vmatprep.mubr.f32.mxu0 0.0
        %772 = vmatmul.mubr.f32.gmra.mxu0 %v671
        %v773 = vpop.f32.mrf.mxu0
        %v774 = vadd.f32 0.0, %v773
        %v775 = vpop.f32.mrf.mxu0
        %776 = vmatprep.mubr.f32.mxu0 0.0
        %777 = vmatmul.mubr.f32.gmra.mxu0 %v672
        %v778 = vpop.f32.mrf.mxu0
        %v779 = vadd.f32 0.0, %v778
        %v780 = vpop.f32.mrf.mxu0
        %781 = vmatprep.mubr.f32.mxu0 0.0
        %782 = vmatmul.mubr.f32.gmra.mxu0 %v673
        %v783 = vpop.f32.mrf.mxu0
        %v784 = vadd.f32 0.0, %v783
        %v785 = vpop.f32.mrf.mxu0
        %786 = vmatprep.mubr.f32.mxu0 0.0
        %787 = vmatmul.mubr.f32.gmra.mxu0 %v674
        %v788 = vpop.f32.mrf.mxu0
        %v789 = vadd.f32 0.0, %v788
        %v790 = vpop.f32.mrf.mxu0
        %791 = vmatprep.mubr.f32.mxu0 0.0
        %792 = vmatmul.mubr.f32.gmra.mxu0 %v675
        %v793 = vpop.f32.mrf.mxu0
        %v794 = vadd.f32 0.0, %v793
        %v795 = vpop.f32.mrf.mxu0
        %796 = vmatprep.mubr.f32.mxu0 0.0
        %797 = vmatmul.mubr.f32.gmra.mxu0 %v676
        %v798 = vpop.f32.mrf.mxu0
        %v799 = vadd.f32 0.0, %v798
        %v800 = vpop.f32.mrf.mxu0
        %801 = vmatprep.mubr.f32.mxu0 0.0
        %802 = vmatmul.mubr.f32.gmra.mxu0 %v677
        %v803 = vpop.f32.mrf.mxu0
        %v804 = vadd.f32 0.0, %v803
        %v805 = vpop.f32.mrf.mxu0
        %806 = vmatprep.mubr.f32.mxu0 0.0
        %807 = vmatmul.mubr.f32.gmra.mxu0 %v678
        %v808 = vpop.f32.mrf.mxu0
        %v809 = vadd.f32 0.0, %v808
        %v810 = vpop.f32.mrf.mxu0
        %811 = vmatprep.mubr.f32.mxu0 0.0
        %812 = vmatmul.mubr.f32.gmra.mxu0 %v679
        %v813 = vpop.f32.mrf.mxu0
        %v814 = vadd.f32 0.0, %v813
        %v815 = vpop.f32.mrf.mxu0
        %816 = vmatprep.mubr.f32.mxu0 0.0
        %817 = vmatmul.mubr.f32.gmra.mxu0 %v680
        %v818 = vpop.f32.mrf.mxu0
        %v819 = vadd.f32 0.0, %v818
        %v820 = vpop.f32.mrf.mxu0
        %821 = vmatprep.mubr.f32.mxu0 0.0
        %822 = vmatmul.mubr.f32.gmra.mxu0 %v681
        %v823 = vpop.f32.mrf.mxu0
        %v824 = vadd.f32 0.0, %v823
        %v825 = vpop.f32.mrf.mxu0
        %826 = vdwg.mxu0
        %v827 = vmul.f32 %v427, %v427
        %v828 = vmul.f32 %v432, %v432
        %v829 = vmul.f32 %v437, %v437
        %v830 = vmul.f32 %v442, %v442
        %v831 = vmul.f32 %v447, %v447
        %v832 = vmul.f32 %v452, %v452
        %v833 = vmul.f32 %v457, %v457
        %v834 = vmul.f32 %v462, %v462
        %v835 = vmul.f32 %v467, %v467
        %v836 = vmul.f32 %v472, %v472
        %v837 = vmul.f32 %v477, %v477
        %v838 = vmul.f32 %v482, %v482
        %v839 = vmul.f32 %v487, %v487
        %v840 = vmul.f32 %v492, %v492
        %v841 = vmul.f32 %v497, %v497
        %v842 = vmul.f32 %v502, %v502
        %vm843 = vcmask 523264
        %v844 = vsel %vm843, %v827, 0.0
        %845 = vadd.xlane.f32.xlu0 %v844
        %v846 = vpop.xlane.xlu0 %845
        %v847 = vsel %vm843, %v828, 0.0
        %848 = vadd.xlane.f32.xlu0 %v847
        %v849 = vpop.xlane.xlu0 %848
        %v850 = vsel %vm843, %v829, 0.0
        %851 = vadd.xlane.f32.xlu0 %v850
        %v852 = vpop.xlane.xlu0 %851
        %v853 = vsel %vm843, %v830, 0.0
        %854 = vadd.xlane.f32.xlu0 %v853
        %v855 = vpop.xlane.xlu0 %854
        %v856 = vsel %vm843, %v831, 0.0
        %857 = vadd.xlane.f32.xlu0 %v856
        %v858 = vpop.xlane.xlu0 %857
        %v859 = vsel %vm843, %v832, 0.0
        %860 = vadd.xlane.f32.xlu0 %v859
        %v861 = vpop.xlane.xlu0 %860
        %v862 = vsel %vm843, %v833, 0.0
        %863 = vadd.xlane.f32.xlu0 %v862
        %v864 = vpop.xlane.xlu0 %863
        %v865 = vsel %vm843, %v834, 0.0
        %866 = vadd.xlane.f32.xlu0 %v865
        %v867 = vpop.xlane.xlu0 %866
        %v868 = vsel %vm843, %v835, 0.0
        %869 = vadd.xlane.f32.xlu0 %v868
        %v870 = vpop.xlane.xlu0 %869
        %v871 = vsel %vm843, %v836, 0.0
        %872 = vadd.xlane.f32.xlu0 %v871
        %v873 = vpop.xlane.xlu0 %872
        %v874 = vsel %vm843, %v837, 0.0
        %875 = vadd.xlane.f32.xlu0 %v874
        %v876 = vpop.xlane.xlu0 %875
        %v877 = vsel %vm843, %v838, 0.0
        %878 = vadd.xlane.f32.xlu0 %v877
        %v879 = vpop.xlane.xlu0 %878
        %v880 = vsel %vm843, %v839, 0.0
        %881 = vadd.xlane.f32.xlu0 %v880
        %v882 = vpop.xlane.xlu0 %881
        %v883 = vsel %vm843, %v840, 0.0
        %884 = vadd.xlane.f32.xlu0 %v883
        %v885 = vpop.xlane.xlu0 %884
        %v886 = vsel %vm843, %v841, 0.0
        %887 = vadd.xlane.f32.xlu0 %v886
        %v888 = vpop.xlane.xlu0 %887
        %v889 = vsel %vm843, %v842, 0.0
        %890 = vadd.xlane.f32.xlu0 %v889
        %v891 = vpop.xlane.xlu0 %890
        %v892 = vmax.f32 %v846, 1e-24
        %v893 = vmax.f32 %v849, 1e-24
        %v894 = vmax.f32 %v852, 1e-24
        %v895 = vmax.f32 %v855, 1e-24
        %v896 = vmax.f32 %v858, 1e-24
        %v897 = vmax.f32 %v861, 1e-24
        %v898 = vmax.f32 %v864, 1e-24
        %v899 = vmax.f32 %v867, 1e-24
        %v900 = vmax.f32 %v870, 1e-24
        %v901 = vmax.f32 %v873, 1e-24
        %v902 = vmax.f32 %v876, 1e-24
        %v903 = vmax.f32 %v879, 1e-24
        %v904 = vmax.f32 %v882, 1e-24
        %v905 = vmax.f32 %v885, 1e-24
        %v906 = vmax.f32 %v888, 1e-24
        %v907 = vmax.f32 %v891, 1e-24
        %v908 = vrsqrt.pop %v892
        %v909 = vrsqrt.pop %v893
        %v910 = vrsqrt.pop %v894
        %v911 = vrsqrt.pop %v895
        %v912 = vrsqrt.pop %v896
        %v913 = vrsqrt.pop %v897
        %v914 = vrsqrt.pop %v898
        %v915 = vrsqrt.pop %v899
        %v916 = vrsqrt.pop %v900
        %v917 = vrsqrt.pop %v901
        %v918 = vrsqrt.pop %v902
        %v919 = vrsqrt.pop %v903
        %v920 = vrsqrt.pop %v904
        %v921 = vrsqrt.pop %v905
        %v922 = vrsqrt.pop %v906
        %v923 = vrsqrt.pop %v907
        %v924 = vmul.f32 %v427, %v908
        %v925 = vmul.f32 %v432, %v909
        %v926 = vmul.f32 %v437, %v910
        %v927 = vmul.f32 %v442, %v911
        %v928 = vmul.f32 %v447, %v912
        %v929 = vmul.f32 %v452, %v913
        %v930 = vmul.f32 %v457, %v914
        %v931 = vmul.f32 %v462, %v915
        %v932 = vmul.f32 %v467, %v916
        %v933 = vmul.f32 %v472, %v917
        %v934 = vmul.f32 %v477, %v918
        %v935 = vmul.f32 %v482, %v919
        %v936 = vmul.f32 %v487, %v920
        %v937 = vmul.f32 %v492, %v921
        %v938 = vmul.f32 %v497, %v922
        %v939 = vmul.f32 %v502, %v923
        %v940 = vmul.f32 %v588, %v588
        %v941 = vmul.f32 %v593, %v593
        %v942 = vmul.f32 %v598, %v598
        %v943 = vmul.f32 %v603, %v603
        %v944 = vmul.f32 %v608, %v608
        %v945 = vmul.f32 %v613, %v613
        %v946 = vmul.f32 %v618, %v618
        %v947 = vmul.f32 %v623, %v623
        %v948 = vmul.f32 %v628, %v628
        %v949 = vmul.f32 %v633, %v633
        %v950 = vmul.f32 %v638, %v638
        %v951 = vmul.f32 %v643, %v643
        %v952 = vmul.f32 %v648, %v648
        %v953 = vmul.f32 %v653, %v653
        %v954 = vmul.f32 %v658, %v658
        %v955 = vmul.f32 %v663, %v663
        %v956 = vsel %vm843, %v940, 0.0
        %957 = vadd.xlane.f32.xlu0 %v956
        %v958 = vpop.xlane.xlu0 %957
        %v959 = vsel %vm843, %v941, 0.0
        %960 = vadd.xlane.f32.xlu0 %v959
        %v961 = vpop.xlane.xlu0 %960
        %v962 = vsel %vm843, %v942, 0.0
        %963 = vadd.xlane.f32.xlu0 %v962
        %v964 = vpop.xlane.xlu0 %963
        %v965 = vsel %vm843, %v943, 0.0
        %966 = vadd.xlane.f32.xlu0 %v965
        %v967 = vpop.xlane.xlu0 %966
        %v968 = vsel %vm843, %v944, 0.0
        %969 = vadd.xlane.f32.xlu0 %v968
        %v970 = vpop.xlane.xlu0 %969
        %v971 = vsel %vm843, %v945, 0.0
        %972 = vadd.xlane.f32.xlu0 %v971
        %v973 = vpop.xlane.xlu0 %972
        %v974 = vsel %vm843, %v946, 0.0
        %975 = vadd.xlane.f32.xlu0 %v974
        %v976 = vpop.xlane.xlu0 %975
        %v977 = vsel %vm843, %v947, 0.0
        %978 = vadd.xlane.f32.xlu0 %v977
        %v979 = vpop.xlane.xlu0 %978
        %v980 = vsel %vm843, %v948, 0.0
        %981 = vadd.xlane.f32.xlu0 %v980
        %v982 = vpop.xlane.xlu0 %981
        %v983 = vsel %vm843, %v949, 0.0
        %984 = vadd.xlane.f32.xlu0 %v983
        %v985 = vpop.xlane.xlu0 %984
        %v986 = vsel %vm843, %v950, 0.0
        %987 = vadd.xlane.f32.xlu0 %v986
        %v988 = vpop.xlane.xlu0 %987
        %v989 = vsel %vm843, %v951, 0.0
        %990 = vadd.xlane.f32.xlu0 %v989
        %v991 = vpop.xlane.xlu0 %990
        %v992 = vsel %vm843, %v952, 0.0
        %993 = vadd.xlane.f32.xlu0 %v992
        %v994 = vpop.xlane.xlu0 %993
        %v995 = vsel %vm843, %v953, 0.0
        %996 = vadd.xlane.f32.xlu0 %v995
        %v997 = vpop.xlane.xlu0 %996
        %v998 = vsel %vm843, %v954, 0.0
        %999 = vadd.xlane.f32.xlu0 %v998
        %v1000 = vpop.xlane.xlu0 %999
        %v1001 = vsel %vm843, %v955, 0.0
        %1002 = vadd.xlane.f32.xlu0 %v1001
        %v1003 = vpop.xlane.xlu0 %1002
        %v1004 = vmax.f32 %v958, 1e-24
        %v1005 = vmax.f32 %v961, 1e-24
        %v1006 = vmax.f32 %v964, 1e-24
        %v1007 = vmax.f32 %v967, 1e-24
        %v1008 = vmax.f32 %v970, 1e-24
        %v1009 = vmax.f32 %v973, 1e-24
        %v1010 = vmax.f32 %v976, 1e-24
        %v1011 = vmax.f32 %v979, 1e-24
        %v1012 = vmax.f32 %v982, 1e-24
        %v1013 = vmax.f32 %v985, 1e-24
        %v1014 = vmax.f32 %v988, 1e-24
        %v1015 = vmax.f32 %v991, 1e-24
        %v1016 = vmax.f32 %v994, 1e-24
        %v1017 = vmax.f32 %v997, 1e-24
        %v1018 = vmax.f32 %v1000, 1e-24
        %v1019 = vmax.f32 %v1003, 1e-24
        %v1020 = vrsqrt.pop %v1004
        %v1021 = vrsqrt.pop %v1005
        %v1022 = vrsqrt.pop %v1006
        %v1023 = vrsqrt.pop %v1007
        %v1024 = vrsqrt.pop %v1008
        %v1025 = vrsqrt.pop %v1009
        %v1026 = vrsqrt.pop %v1010
        %v1027 = vrsqrt.pop %v1011
        %v1028 = vrsqrt.pop %v1012
        %v1029 = vrsqrt.pop %v1013
        %v1030 = vrsqrt.pop %v1014
        %v1031 = vrsqrt.pop %v1015
        %v1032 = vrsqrt.pop %v1016
        %v1033 = vrsqrt.pop %v1017
        %v1034 = vrsqrt.pop %v1018
        %v1035 = vrsqrt.pop %v1019
        %v1036 = vmul.f32 %v588, %v1020
        %v1037 = vmul.f32 %v593, %v1021
        %v1038 = vmul.f32 %v598, %v1022
        %v1039 = vmul.f32 %v603, %v1023
        %v1040 = vmul.f32 %v608, %v1024
        %v1041 = vmul.f32 %v613, %v1025
        %v1042 = vmul.f32 %v618, %v1026
        %v1043 = vmul.f32 %v623, %v1027
        %v1044 = vmul.f32 %v628, %v1028
        %v1045 = vmul.f32 %v633, %v1029
        %v1046 = vmul.f32 %v638, %v1030
        %v1047 = vmul.f32 %v643, %v1031
        %v1048 = vmul.f32 %v648, %v1032
        %v1049 = vmul.f32 %v653, %v1033
        %v1050 = vmul.f32 %v658, %v1034
        %v1051 = vmul.f32 %v663, %v1035
        %v1052 = vld [vmem:[%s4] sm:$0xff]
        %v1053 = vld [vmem:[%s4 + $0x8] sm:$0xff]
        %v1054 = vld [vmem:[%s4 + $0x10] sm:$0xff]
        %v1055 = vld [vmem:[%s4 + $0x18] sm:$0xff]
        %v1056 = vld [vmem:[%s4 + $0x20] sm:$0xff]
        %v1057 = vld [vmem:[%s4 + $0x28] sm:$0xff]
        %v1058 = vld [vmem:[%s4 + $0x30] sm:$0xff]
        %v1059 = vld [vmem:[%s4 + $0x38] sm:$0xff]
        %v1060 = vld [vmem:[%s4 + $0x40] sm:$0xff]
        %v1061 = vld [vmem:[%s4 + $0x48] sm:$0xff]
        %v1062 = vld [vmem:[%s4 + $0x50] sm:$0xff]
        %v1063 = vld [vmem:[%s4 + $0x58] sm:$0xff]
        %v1064 = vld [vmem:[%s4 + $0x60] sm:$0xff]
        %v1065 = vld [vmem:[%s4 + $0x68] sm:$0xff]
        %v1066 = vld [vmem:[%s4 + $0x70] sm:$0xff]
        %v1067 = vld [vmem:[%s4 + $0x78] sm:$0xff]
        %1069 = vset.pattern.permute.xlu0 0
        %1070 = vperm.xlu0 %1069, %v1052
        %v1071 = vpop.permute.xlu0 %1070
        %1074 = vset.pattern.permute.xlu0 0
        %1075 = vperm.xlu0 %1074, %v1053
        %v1076 = vpop.permute.xlu0 %1075
        %1079 = vset.pattern.permute.xlu0 0
        %1080 = vperm.xlu0 %1079, %v1054
        %v1081 = vpop.permute.xlu0 %1080
        %1084 = vset.pattern.permute.xlu0 0
        %1085 = vperm.xlu0 %1084, %v1055
        %v1086 = vpop.permute.xlu0 %1085
        %1089 = vset.pattern.permute.xlu0 0
        %1090 = vperm.xlu0 %1089, %v1056
        %v1091 = vpop.permute.xlu0 %1090
        %1094 = vset.pattern.permute.xlu0 0
        %1095 = vperm.xlu0 %1094, %v1057
        %v1096 = vpop.permute.xlu0 %1095
        %1099 = vset.pattern.permute.xlu0 0
        %1100 = vperm.xlu0 %1099, %v1058
        %v1101 = vpop.permute.xlu0 %1100
        %1104 = vset.pattern.permute.xlu0 0
        %1105 = vperm.xlu0 %1104, %v1059
        %v1106 = vpop.permute.xlu0 %1105
        %1109 = vset.pattern.permute.xlu0 0
        %1110 = vperm.xlu0 %1109, %v1060
        %v1111 = vpop.permute.xlu0 %1110
        %1114 = vset.pattern.permute.xlu0 0
        %1115 = vperm.xlu0 %1114, %v1061
        %v1116 = vpop.permute.xlu0 %1115
        %1119 = vset.pattern.permute.xlu0 0
        %1120 = vperm.xlu0 %1119, %v1062
        %v1121 = vpop.permute.xlu0 %1120
        %1124 = vset.pattern.permute.xlu0 0
        %1125 = vperm.xlu0 %1124, %v1063
        %v1126 = vpop.permute.xlu0 %1125
        %1129 = vset.pattern.permute.xlu0 0
        %1130 = vperm.xlu0 %1129, %v1064
        %v1131 = vpop.permute.xlu0 %1130
        %1134 = vset.pattern.permute.xlu0 0
        %1135 = vperm.xlu0 %1134, %v1065
        %v1136 = vpop.permute.xlu0 %1135
        %1139 = vset.pattern.permute.xlu0 0
        %1140 = vperm.xlu0 %1139, %v1066
        %v1141 = vpop.permute.xlu0 %1140
        %1144 = vset.pattern.permute.xlu0 0
        %1145 = vperm.xlu0 %1144, %v1067
        %v1146 = vpop.permute.xlu0 %1145
        %v1148 = vmul.f32 %v924, %v1071
        %v1149 = vmul.f32 %v925, %v1076
        %v1150 = vmul.f32 %v926, %v1081
        %v1151 = vmul.f32 %v927, %v1086
        %v1152 = vmul.f32 %v928, %v1091
        %v1153 = vmul.f32 %v929, %v1096
        %v1154 = vmul.f32 %v930, %v1101
        %v1155 = vmul.f32 %v931, %v1106
        %v1156 = vmul.f32 %v932, %v1111
        %v1157 = vmul.f32 %v933, %v1116
        %v1158 = vmul.f32 %v934, %v1121
        %v1159 = vmul.f32 %v935, %v1126
        %v1160 = vmul.f32 %v936, %v1131
        %v1161 = vmul.f32 %v937, %v1136
        %v1162 = vmul.f32 %v938, %v1141
        %v1163 = vmul.f32 %v939, %v1146
        %v1165 = vsel %vm843, %v1148, 0
        %v1168 = vsel %vm843, %v1149, 0
        %v1171 = vsel %vm843, %v1036, 0
        %v1174 = vsel %vm843, %v1037, 0
        %1176 = vmatprep.subr.mxu0 0.0
        %1177 = vmatpush1.xpose.msra.mxu0 0.0
        %1178 = vmatprep.subr.mxu0 0.0
        %1179 = vmatpush1.xpose.msra.mxu0 0.0
        %1180 = vmatprep.subr.mxu0 0.0
        %1181 = vmatpush1.xpose.msra.mxu0 0.0
        %1182 = vmatprep.subr.mxu0 0.0
        %1183 = vmatpush1.xpose.msra.mxu0 0.0
        %1184 = vmatprep.subr.mxu0 0.0
        %1185 = vmatpush1.xpose.msra.mxu0 0.0
        %1186 = vmatprep.subr.mxu0 0.0
        %1187 = vmatpush1.xpose.msra.mxu0 0.0
        %1188 = vmatprep.subr.mxu0 0.0
        %1189 = vmatpush1.xpose.msra.mxu0 0.0
        %1190 = vmatprep.subr.mxu0 0.0
        %1191 = vmatpush1.xpose.msra.mxu0 0.0
        %1192 = vmatprep.subr.mxu0 0.0
        %1193 = vmatpush1.xpose.msra.mxu0 0.0
        %1194 = vmatprep.subr.mxu0 0.0
        %1195 = vmatpush1.xpose.msra.mxu0 0.0
        %1196 = vmatprep.subr.mxu0 0.0
        %1197 = vmatpush1.xpose.msra.mxu0 0.0
        %1198 = vmatprep.subr.mxu0 0.0
        %1199 = vmatpush1.xpose.msra.mxu0 0.0
        %1200 = vmatprep.subr.mxu0 0.0
        %1201 = vmatpush1.xpose.msra.mxu0 0.0
        %1202 = vmatprep.subr.mxu0 0.0
        %1203 = vmatpush1.xpose.msra.mxu0 0.0
        %1204 = vmatprep.subr.mxu0 0.0
        %1205 = vmatpush1.xpose.msra.mxu0 %v1174
        %1206 = vmatprep.subr.mxu0 0.0
        %1207 = vmatpush1.xpose.msra.mxu0 %v1171
        %1208 = vmatprep.subr.mxu0 0.0
        %1209 = vmatpush2.xpose.msra.mxu0 0.0
        %1210 = vmatprep.subr.mxu0 0.0
        %1211 = vmatpush2.xpose.msra.mxu0 0.0
        %1212 = vmatprep.subr.mxu0 0.0
        %1213 = vmatpush2.xpose.msra.mxu0 0.0
        %1214 = vmatprep.subr.mxu0 0.0
        %1215 = vmatpush2.xpose.msra.mxu0 0.0
        %1216 = vmatprep.subr.mxu0 0.0
        %1217 = vmatpush2.xpose.msra.mxu0 0.0
        %1218 = vmatprep.subr.mxu0 0.0
        %1219 = vmatpush2.xpose.msra.mxu0 0.0
        %1220 = vmatprep.subr.mxu0 0.0
        %1221 = vmatpush2.xpose.msra.mxu0 0.0
        %1222 = vmatprep.subr.mxu0 0.0
        %1223 = vmatpush2.xpose.msra.mxu0 0.0
        %1224 = vmatprep.subr.mxu0 0.0
        %1225 = vmatpush2.xpose.msra.mxu0 0.0
        %1226 = vmatprep.subr.mxu0 0.0
        %1227 = vmatpush2.xpose.msra.mxu0 0.0
        %1228 = vmatprep.subr.mxu0 0.0
        %1229 = vmatpush2.xpose.msra.mxu0 0.0
        %1230 = vmatprep.subr.mxu0 0.0
        %1231 = vmatpush2.xpose.msra.mxu0 0.0
        %1232 = vmatprep.subr.mxu0 0.0
        %1233 = vmatpush2.xpose.msra.mxu0 0.0
        %1234 = vmatprep.subr.mxu0 0.0
        %1235 = vmatpush2.xpose.msra.mxu0 0.0
        %1236 = vmatprep.subr.mxu0 0.0
        %1237 = vmatpush2.xpose.msra.mxu0 0.0
        %1238 = vmatprep.subr.mxu0 0.0
        %1239 = vmatpush2.xpose.msra.mxu0 0.0
        %1240 = vmatprep.mubr.f32.mxu0 0.0
        %1241 = vmatmul.mubr.f32.gmra.mxu0 %v1165
        %v1242 = vpop.f32.mrf.mxu0
        %v1243 = vadd.f32 0.0, %v1242
        %v1244 = vpop.f32.mrf.mxu0
        %1245 = vmatprep.mubr.f32.mxu0 0.0
        %1246 = vmatmul.mubr.f32.gmra.mxu0 %v1168
        %v1247 = vpop.f32.mrf.mxu0
        %v1248 = vadd.f32 0.0, %v1247
        %v1249 = vpop.f32.mrf.mxu0
        %1250 = vdwg.mxu0
        %vm1251 = vcmask 130048
        %v1252 = vsel %vm1251, %v1243, -inf
        %1253 = vmax.xlane.f32.xlu0 %v1252
        %v1254 = vpop.xlane.xlu0 %1253
        %v1255 = vsel %vm1251, %v1248, -inf
        %1256 = vmax.xlane.f32.xlu0 %v1255
        %v1257 = vpop.xlane.xlu0 %1256
        %v1258 = vsub.f32 %v1243, %v1254
        %v1259 = vsub.f32 %v1248, %v1257
        %v1260 = vmul.f32 %v1258, 1.442695
        %v1261 = vpow.pop %v1260
        %v1262 = vmul.f32 %v1259, 1.442695
        %v1263 = vpow.pop %v1262
        %v1264 = vsel %vm1251, %v1261, 0.0
        %1265 = vadd.xlane.f32.xlu0 %v1264
        %v1266 = vpop.xlane.xlu0 %1265
        %v1267 = vsel %vm1251, %v1263, 0.0
        %1268 = vadd.xlane.f32.xlu0 %v1267
        %v1269 = vpop.xlane.xlu0 %1268
        %v1270 = vrcp.pop %v1266
        %v1271 = vmul.f32 %v1261, %v1270
        %v1272 = vrcp.pop %v1269
        %v1273 = vmul.f32 %v1263, %v1272
        %v1275 = vsel %vm1251, %v1271, 0
        %v1278 = vsel %vm1251, %v1273, 0
        %1280 = vmatprep.subr.mxu0 0.0
        %1281 = vmatpush1.msra.mxu0 0.0
        %1282 = vmatprep.subr.mxu0 0.0
        %1283 = vmatpush1.msra.mxu0 0.0
        %1284 = vmatprep.subr.mxu0 0.0
        %1285 = vmatpush1.msra.mxu0 0.0
        %1286 = vmatprep.subr.mxu0 0.0
        %1287 = vmatpush1.msra.mxu0 0.0
        %1288 = vmatprep.subr.mxu0 0.0
        %1289 = vmatpush1.msra.mxu0 0.0
        %1290 = vmatprep.subr.mxu0 0.0
        %1291 = vmatpush1.msra.mxu0 0.0
        %1292 = vmatprep.subr.mxu0 0.0
        %1293 = vmatpush1.msra.mxu0 0.0
        %1294 = vmatprep.subr.mxu0 0.0
        %1295 = vmatpush1.msra.mxu0 0.0
        %1296 = vmatprep.subr.mxu0 0.0
        %1297 = vmatpush1.msra.mxu0 0.0
        %1298 = vmatprep.subr.mxu0 0.0
        %1299 = vmatpush1.msra.mxu0 0.0
        %1300 = vmatprep.subr.mxu0 0.0
        %1301 = vmatpush1.msra.mxu0 0.0
        %1302 = vmatprep.subr.mxu0 0.0
        %1303 = vmatpush1.msra.mxu0 0.0
        %1304 = vmatprep.subr.mxu0 0.0
        %1305 = vmatpush1.msra.mxu0 0.0
        %1306 = vmatprep.subr.mxu0 0.0
        %1307 = vmatpush1.msra.mxu0 0.0
        %1308 = vmatprep.subr.mxu0 0.0
        %1309 = vmatpush1.msra.mxu0 %v754
        %1310 = vmatprep.subr.mxu0 0.0
        %1311 = vmatpush1.msra.mxu0 %v749
        %1312 = vmatprep.subr.mxu0 0.0
        %1313 = vmatpush2.msra.mxu0 0.0
        %1314 = vmatprep.subr.mxu0 0.0
        %1315 = vmatpush2.msra.mxu0 0.0
        %1316 = vmatprep.subr.mxu0 0.0
        %1317 = vmatpush2.msra.mxu0 0.0
        %1318 = vmatprep.subr.mxu0 0.0
        %1319 = vmatpush2.msra.mxu0 0.0
        %1320 = vmatprep.subr.mxu0 0.0
        %1321 = vmatpush2.msra.mxu0 0.0
        %1322 = vmatprep.subr.mxu0 0.0
        %1323 = vmatpush2.msra.mxu0 0.0
        %1324 = vmatprep.subr.mxu0 0.0
        %1325 = vmatpush2.msra.mxu0 0.0
        %1326 = vmatprep.subr.mxu0 0.0
        %1327 = vmatpush2.msra.mxu0 0.0
        %1328 = vmatprep.subr.mxu0 0.0
        %1329 = vmatpush2.msra.mxu0 0.0
        %1330 = vmatprep.subr.mxu0 0.0
        %1331 = vmatpush2.msra.mxu0 0.0
        %1332 = vmatprep.subr.mxu0 0.0
        %1333 = vmatpush2.msra.mxu0 0.0
        %1334 = vmatprep.subr.mxu0 0.0
        %1335 = vmatpush2.msra.mxu0 0.0
        %1336 = vmatprep.subr.mxu0 0.0
        %1337 = vmatpush2.msra.mxu0 0.0
        %1338 = vmatprep.subr.mxu0 0.0
        %1339 = vmatpush2.msra.mxu0 0.0
        %1340 = vmatprep.subr.mxu0 0.0
        %1341 = vmatpush2.msra.mxu0 0.0
        %1342 = vmatprep.subr.mxu0 0.0
        %1343 = vmatpush2.msra.mxu0 0.0
        %1344 = vmatprep.mubr.f32.mxu0 0.0
        %1345 = vmatmul.mubr.f32.gmra.mxu0 %v1275
        %v1346 = vpop.f32.mrf.mxu0
        %v1347 = vadd.f32 0.0, %v1346
        %v1348 = vpop.f32.mrf.mxu0
        %1349 = vmatprep.mubr.f32.mxu0 0.0
        %1350 = vmatmul.mubr.f32.gmra.mxu0 %v1278
        %v1351 = vpop.f32.mrf.mxu0
        %v1352 = vadd.f32 0.0, %v1351
        %v1353 = vpop.f32.mrf.mxu0
        %1354 = vdwg.mxu0
        %v1356 = vsel %vm843, %v1150, 0
        %v1359 = vsel %vm843, %v1151, 0
        %v1362 = vsel %vm843, %v1038, 0
        %v1365 = vsel %vm843, %v1039, 0
        %1367 = vmatprep.subr.mxu0 0.0
        %1368 = vmatpush1.xpose.msra.mxu0 0.0
        %1369 = vmatprep.subr.mxu0 0.0
        %1370 = vmatpush1.xpose.msra.mxu0 0.0
        %1371 = vmatprep.subr.mxu0 0.0
        %1372 = vmatpush1.xpose.msra.mxu0 0.0
        %1373 = vmatprep.subr.mxu0 0.0
        %1374 = vmatpush1.xpose.msra.mxu0 0.0
        %1375 = vmatprep.subr.mxu0 0.0
        %1376 = vmatpush1.xpose.msra.mxu0 0.0
        %1377 = vmatprep.subr.mxu0 0.0
        %1378 = vmatpush1.xpose.msra.mxu0 0.0
        %1379 = vmatprep.subr.mxu0 0.0
        %1380 = vmatpush1.xpose.msra.mxu0 0.0
        %1381 = vmatprep.subr.mxu0 0.0
        %1382 = vmatpush1.xpose.msra.mxu0 0.0
        %1383 = vmatprep.subr.mxu0 0.0
        %1384 = vmatpush1.xpose.msra.mxu0 0.0
        %1385 = vmatprep.subr.mxu0 0.0
        %1386 = vmatpush1.xpose.msra.mxu0 0.0
        %1387 = vmatprep.subr.mxu0 0.0
        %1388 = vmatpush1.xpose.msra.mxu0 0.0
        %1389 = vmatprep.subr.mxu0 0.0
        %1390 = vmatpush1.xpose.msra.mxu0 0.0
        %1391 = vmatprep.subr.mxu0 0.0
        %1392 = vmatpush1.xpose.msra.mxu0 0.0
        %1393 = vmatprep.subr.mxu0 0.0
        %1394 = vmatpush1.xpose.msra.mxu0 0.0
        %1395 = vmatprep.subr.mxu0 0.0
        %1396 = vmatpush1.xpose.msra.mxu0 %v1365
        %1397 = vmatprep.subr.mxu0 0.0
        %1398 = vmatpush1.xpose.msra.mxu0 %v1362
        %1399 = vmatprep.subr.mxu0 0.0
        %1400 = vmatpush2.xpose.msra.mxu0 0.0
        %1401 = vmatprep.subr.mxu0 0.0
        %1402 = vmatpush2.xpose.msra.mxu0 0.0
        %1403 = vmatprep.subr.mxu0 0.0
        %1404 = vmatpush2.xpose.msra.mxu0 0.0
        %1405 = vmatprep.subr.mxu0 0.0
        %1406 = vmatpush2.xpose.msra.mxu0 0.0
        %1407 = vmatprep.subr.mxu0 0.0
        %1408 = vmatpush2.xpose.msra.mxu0 0.0
        %1409 = vmatprep.subr.mxu0 0.0
        %1410 = vmatpush2.xpose.msra.mxu0 0.0
        %1411 = vmatprep.subr.mxu0 0.0
        %1412 = vmatpush2.xpose.msra.mxu0 0.0
        %1413 = vmatprep.subr.mxu0 0.0
        %1414 = vmatpush2.xpose.msra.mxu0 0.0
        %1415 = vmatprep.subr.mxu0 0.0
        %1416 = vmatpush2.xpose.msra.mxu0 0.0
        %1417 = vmatprep.subr.mxu0 0.0
        %1418 = vmatpush2.xpose.msra.mxu0 0.0
        %1419 = vmatprep.subr.mxu0 0.0
        %1420 = vmatpush2.xpose.msra.mxu0 0.0
        %1421 = vmatprep.subr.mxu0 0.0
        %1422 = vmatpush2.xpose.msra.mxu0 0.0
        %1423 = vmatprep.subr.mxu0 0.0
        %1424 = vmatpush2.xpose.msra.mxu0 0.0
        %1425 = vmatprep.subr.mxu0 0.0
        %1426 = vmatpush2.xpose.msra.mxu0 0.0
        %1427 = vmatprep.subr.mxu0 0.0
        %1428 = vmatpush2.xpose.msra.mxu0 0.0
        %1429 = vmatprep.subr.mxu0 0.0
        %1430 = vmatpush2.xpose.msra.mxu0 0.0
        %1431 = vmatprep.mubr.f32.mxu0 0.0
        %1432 = vmatmul.mubr.f32.gmra.mxu0 %v1356
        %v1433 = vpop.f32.mrf.mxu0
        %v1434 = vadd.f32 0.0, %v1433
        %v1435 = vpop.f32.mrf.mxu0
        %1436 = vmatprep.mubr.f32.mxu0 0.0
        %1437 = vmatmul.mubr.f32.gmra.mxu0 %v1359
        %v1438 = vpop.f32.mrf.mxu0
        %v1439 = vadd.f32 0.0, %v1438
        %v1440 = vpop.f32.mrf.mxu0
        %1441 = vdwg.mxu0
        %v1442 = vsel %vm1251, %v1434, -inf
        %1443 = vmax.xlane.f32.xlu0 %v1442
        %v1444 = vpop.xlane.xlu0 %1443
        %v1445 = vsel %vm1251, %v1439, -inf
        %1446 = vmax.xlane.f32.xlu0 %v1445
        %v1447 = vpop.xlane.xlu0 %1446
        %v1448 = vsub.f32 %v1434, %v1444
        %v1449 = vsub.f32 %v1439, %v1447
        %v1450 = vmul.f32 %v1448, 1.442695
        %v1451 = vpow.pop %v1450
        %v1452 = vmul.f32 %v1449, 1.442695
        %v1453 = vpow.pop %v1452
        %v1454 = vsel %vm1251, %v1451, 0.0
        %1455 = vadd.xlane.f32.xlu0 %v1454
        %v1456 = vpop.xlane.xlu0 %1455
        %v1457 = vsel %vm1251, %v1453, 0.0
        %1458 = vadd.xlane.f32.xlu0 %v1457
        %v1459 = vpop.xlane.xlu0 %1458
        %v1460 = vrcp.pop %v1456
        %v1461 = vmul.f32 %v1451, %v1460
        %v1462 = vrcp.pop %v1459
        %v1463 = vmul.f32 %v1453, %v1462
        %v1465 = vsel %vm1251, %v1461, 0
        %v1468 = vsel %vm1251, %v1463, 0
        %1470 = vmatprep.subr.mxu0 0.0
        %1471 = vmatpush1.msra.mxu0 0.0
        %1472 = vmatprep.subr.mxu0 0.0
        %1473 = vmatpush1.msra.mxu0 0.0
        %1474 = vmatprep.subr.mxu0 0.0
        %1475 = vmatpush1.msra.mxu0 0.0
        %1476 = vmatprep.subr.mxu0 0.0
        %1477 = vmatpush1.msra.mxu0 0.0
        %1478 = vmatprep.subr.mxu0 0.0
        %1479 = vmatpush1.msra.mxu0 0.0
        %1480 = vmatprep.subr.mxu0 0.0
        %1481 = vmatpush1.msra.mxu0 0.0
        %1482 = vmatprep.subr.mxu0 0.0
        %1483 = vmatpush1.msra.mxu0 0.0
        %1484 = vmatprep.subr.mxu0 0.0
        %1485 = vmatpush1.msra.mxu0 0.0
        %1486 = vmatprep.subr.mxu0 0.0
        %1487 = vmatpush1.msra.mxu0 0.0
        %1488 = vmatprep.subr.mxu0 0.0
        %1489 = vmatpush1.msra.mxu0 0.0
        %1490 = vmatprep.subr.mxu0 0.0
        %1491 = vmatpush1.msra.mxu0 0.0
        %1492 = vmatprep.subr.mxu0 0.0
        %1493 = vmatpush1.msra.mxu0 0.0
        %1494 = vmatprep.subr.mxu0 0.0
        %1495 = vmatpush1.msra.mxu0 0.0
        %1496 = vmatprep.subr.mxu0 0.0
        %1497 = vmatpush1.msra.mxu0 0.0
        %1498 = vmatprep.subr.mxu0 0.0
        %1499 = vmatpush1.msra.mxu0 %v764
        %1500 = vmatprep.subr.mxu0 0.0
        %1501 = vmatpush1.msra.mxu0 %v759
        %1502 = vmatprep.subr.mxu0 0.0
        %1503 = vmatpush2.msra.mxu0 0.0
        %1504 = vmatprep.subr.mxu0 0.0
        %1505 = vmatpush2.msra.mxu0 0.0
        %1506 = vmatprep.subr.mxu0 0.0
        %1507 = vmatpush2.msra.mxu0 0.0
        %1508 = vmatprep.subr.mxu0 0.0
        %1509 = vmatpush2.msra.mxu0 0.0
        %1510 = vmatprep.subr.mxu0 0.0
        %1511 = vmatpush2.msra.mxu0 0.0
        %1512 = vmatprep.subr.mxu0 0.0
        %1513 = vmatpush2.msra.mxu0 0.0
        %1514 = vmatprep.subr.mxu0 0.0
        %1515 = vmatpush2.msra.mxu0 0.0
        %1516 = vmatprep.subr.mxu0 0.0
        %1517 = vmatpush2.msra.mxu0 0.0
        %1518 = vmatprep.subr.mxu0 0.0
        %1519 = vmatpush2.msra.mxu0 0.0
        %1520 = vmatprep.subr.mxu0 0.0
        %1521 = vmatpush2.msra.mxu0 0.0
        %1522 = vmatprep.subr.mxu0 0.0
        %1523 = vmatpush2.msra.mxu0 0.0
        %1524 = vmatprep.subr.mxu0 0.0
        %1525 = vmatpush2.msra.mxu0 0.0
        %1526 = vmatprep.subr.mxu0 0.0
        %1527 = vmatpush2.msra.mxu0 0.0
        %1528 = vmatprep.subr.mxu0 0.0
        %1529 = vmatpush2.msra.mxu0 0.0
        %1530 = vmatprep.subr.mxu0 0.0
        %1531 = vmatpush2.msra.mxu0 0.0
        %1532 = vmatprep.subr.mxu0 0.0
        %1533 = vmatpush2.msra.mxu0 0.0
        %1534 = vmatprep.mubr.f32.mxu0 0.0
        %1535 = vmatmul.mubr.f32.gmra.mxu0 %v1465
        %v1536 = vpop.f32.mrf.mxu0
        %v1537 = vadd.f32 0.0, %v1536
        %v1538 = vpop.f32.mrf.mxu0
        %1539 = vmatprep.mubr.f32.mxu0 0.0
        %1540 = vmatmul.mubr.f32.gmra.mxu0 %v1468
        %v1541 = vpop.f32.mrf.mxu0
        %v1542 = vadd.f32 0.0, %v1541
        %v1543 = vpop.f32.mrf.mxu0
        %1544 = vdwg.mxu0
        %v1546 = vsel %vm843, %v1152, 0
        %v1549 = vsel %vm843, %v1153, 0
        %v1552 = vsel %vm843, %v1040, 0
        %v1555 = vsel %vm843, %v1041, 0
        %1557 = vmatprep.subr.mxu0 0.0
        %1558 = vmatpush1.xpose.msra.mxu0 0.0
        %1559 = vmatprep.subr.mxu0 0.0
        %1560 = vmatpush1.xpose.msra.mxu0 0.0
        %1561 = vmatprep.subr.mxu0 0.0
        %1562 = vmatpush1.xpose.msra.mxu0 0.0
        %1563 = vmatprep.subr.mxu0 0.0
        %1564 = vmatpush1.xpose.msra.mxu0 0.0
        %1565 = vmatprep.subr.mxu0 0.0
        %1566 = vmatpush1.xpose.msra.mxu0 0.0
        %1567 = vmatprep.subr.mxu0 0.0
        %1568 = vmatpush1.xpose.msra.mxu0 0.0
        %1569 = vmatprep.subr.mxu0 0.0
        %1570 = vmatpush1.xpose.msra.mxu0 0.0
        %1571 = vmatprep.subr.mxu0 0.0
        %1572 = vmatpush1.xpose.msra.mxu0 0.0
        %1573 = vmatprep.subr.mxu0 0.0
        %1574 = vmatpush1.xpose.msra.mxu0 0.0
        %1575 = vmatprep.subr.mxu0 0.0
        %1576 = vmatpush1.xpose.msra.mxu0 0.0
        %1577 = vmatprep.subr.mxu0 0.0
        %1578 = vmatpush1.xpose.msra.mxu0 0.0
        %1579 = vmatprep.subr.mxu0 0.0
        %1580 = vmatpush1.xpose.msra.mxu0 0.0
        %1581 = vmatprep.subr.mxu0 0.0
        %1582 = vmatpush1.xpose.msra.mxu0 0.0
        %1583 = vmatprep.subr.mxu0 0.0
        %1584 = vmatpush1.xpose.msra.mxu0 0.0
        %1585 = vmatprep.subr.mxu0 0.0
        %1586 = vmatpush1.xpose.msra.mxu0 %v1555
        %1587 = vmatprep.subr.mxu0 0.0
        %1588 = vmatpush1.xpose.msra.mxu0 %v1552
        %1589 = vmatprep.subr.mxu0 0.0
        %1590 = vmatpush2.xpose.msra.mxu0 0.0
        %1591 = vmatprep.subr.mxu0 0.0
        %1592 = vmatpush2.xpose.msra.mxu0 0.0
        %1593 = vmatprep.subr.mxu0 0.0
        %1594 = vmatpush2.xpose.msra.mxu0 0.0
        %1595 = vmatprep.subr.mxu0 0.0
        %1596 = vmatpush2.xpose.msra.mxu0 0.0
        %1597 = vmatprep.subr.mxu0 0.0
        %1598 = vmatpush2.xpose.msra.mxu0 0.0
        %1599 = vmatprep.subr.mxu0 0.0
        %1600 = vmatpush2.xpose.msra.mxu0 0.0
        %1601 = vmatprep.subr.mxu0 0.0
        %1602 = vmatpush2.xpose.msra.mxu0 0.0
        %1603 = vmatprep.subr.mxu0 0.0
        %1604 = vmatpush2.xpose.msra.mxu0 0.0
        %1605 = vmatprep.subr.mxu0 0.0
        %1606 = vmatpush2.xpose.msra.mxu0 0.0
        %1607 = vmatprep.subr.mxu0 0.0
        %1608 = vmatpush2.xpose.msra.mxu0 0.0
        %1609 = vmatprep.subr.mxu0 0.0
        %1610 = vmatpush2.xpose.msra.mxu0 0.0
        %1611 = vmatprep.subr.mxu0 0.0
        %1612 = vmatpush2.xpose.msra.mxu0 0.0
        %1613 = vmatprep.subr.mxu0 0.0
        %1614 = vmatpush2.xpose.msra.mxu0 0.0
        %1615 = vmatprep.subr.mxu0 0.0
        %1616 = vmatpush2.xpose.msra.mxu0 0.0
        %1617 = vmatprep.subr.mxu0 0.0
        %1618 = vmatpush2.xpose.msra.mxu0 0.0
        %1619 = vmatprep.subr.mxu0 0.0
        %1620 = vmatpush2.xpose.msra.mxu0 0.0
        %1621 = vmatprep.mubr.f32.mxu0 0.0
        %1622 = vmatmul.mubr.f32.gmra.mxu0 %v1546
        %v1623 = vpop.f32.mrf.mxu0
        %v1624 = vadd.f32 0.0, %v1623
        %v1625 = vpop.f32.mrf.mxu0
        %1626 = vmatprep.mubr.f32.mxu0 0.0
        %1627 = vmatmul.mubr.f32.gmra.mxu0 %v1549
        %v1628 = vpop.f32.mrf.mxu0
        %v1629 = vadd.f32 0.0, %v1628
        %v1630 = vpop.f32.mrf.mxu0
        %1631 = vdwg.mxu0
        %v1632 = vsel %vm1251, %v1624, -inf
        %1633 = vmax.xlane.f32.xlu0 %v1632
        %v1634 = vpop.xlane.xlu0 %1633
        %v1635 = vsel %vm1251, %v1629, -inf
        %1636 = vmax.xlane.f32.xlu0 %v1635
        %v1637 = vpop.xlane.xlu0 %1636
        %v1638 = vsub.f32 %v1624, %v1634
        %v1639 = vsub.f32 %v1629, %v1637
        %v1640 = vmul.f32 %v1638, 1.442695
        %v1641 = vpow.pop %v1640
        %v1642 = vmul.f32 %v1639, 1.442695
        %v1643 = vpow.pop %v1642
        %v1644 = vsel %vm1251, %v1641, 0.0
        %1645 = vadd.xlane.f32.xlu0 %v1644
        %v1646 = vpop.xlane.xlu0 %1645
        %v1647 = vsel %vm1251, %v1643, 0.0
        %1648 = vadd.xlane.f32.xlu0 %v1647
        %v1649 = vpop.xlane.xlu0 %1648
        %v1650 = vrcp.pop %v1646
        %v1651 = vmul.f32 %v1641, %v1650
        %v1652 = vrcp.pop %v1649
        %v1653 = vmul.f32 %v1643, %v1652
        %v1655 = vsel %vm1251, %v1651, 0
        %v1658 = vsel %vm1251, %v1653, 0
        %1660 = vmatprep.subr.mxu0 0.0
        %1661 = vmatpush1.msra.mxu0 0.0
        %1662 = vmatprep.subr.mxu0 0.0
        %1663 = vmatpush1.msra.mxu0 0.0
        %1664 = vmatprep.subr.mxu0 0.0
        %1665 = vmatpush1.msra.mxu0 0.0
        %1666 = vmatprep.subr.mxu0 0.0
        %1667 = vmatpush1.msra.mxu0 0.0
        %1668 = vmatprep.subr.mxu0 0.0
        %1669 = vmatpush1.msra.mxu0 0.0
        %1670 = vmatprep.subr.mxu0 0.0
        %1671 = vmatpush1.msra.mxu0 0.0
        %1672 = vmatprep.subr.mxu0 0.0
        %1673 = vmatpush1.msra.mxu0 0.0
        %1674 = vmatprep.subr.mxu0 0.0
        %1675 = vmatpush1.msra.mxu0 0.0
        %1676 = vmatprep.subr.mxu0 0.0
        %1677 = vmatpush1.msra.mxu0 0.0
        %1678 = vmatprep.subr.mxu0 0.0
        %1679 = vmatpush1.msra.mxu0 0.0
        %1680 = vmatprep.subr.mxu0 0.0
        %1681 = vmatpush1.msra.mxu0 0.0
        %1682 = vmatprep.subr.mxu0 0.0
        %1683 = vmatpush1.msra.mxu0 0.0
        %1684 = vmatprep.subr.mxu0 0.0
        %1685 = vmatpush1.msra.mxu0 0.0
        %1686 = vmatprep.subr.mxu0 0.0
        %1687 = vmatpush1.msra.mxu0 0.0
        %1688 = vmatprep.subr.mxu0 0.0
        %1689 = vmatpush1.msra.mxu0 %v774
        %1690 = vmatprep.subr.mxu0 0.0
        %1691 = vmatpush1.msra.mxu0 %v769
        %1692 = vmatprep.subr.mxu0 0.0
        %1693 = vmatpush2.msra.mxu0 0.0
        %1694 = vmatprep.subr.mxu0 0.0
        %1695 = vmatpush2.msra.mxu0 0.0
        %1696 = vmatprep.subr.mxu0 0.0
        %1697 = vmatpush2.msra.mxu0 0.0
        %1698 = vmatprep.subr.mxu0 0.0
        %1699 = vmatpush2.msra.mxu0 0.0
        %1700 = vmatprep.subr.mxu0 0.0
        %1701 = vmatpush2.msra.mxu0 0.0
        %1702 = vmatprep.subr.mxu0 0.0
        %1703 = vmatpush2.msra.mxu0 0.0
        %1704 = vmatprep.subr.mxu0 0.0
        %1705 = vmatpush2.msra.mxu0 0.0
        %1706 = vmatprep.subr.mxu0 0.0
        %1707 = vmatpush2.msra.mxu0 0.0
        %1708 = vmatprep.subr.mxu0 0.0
        %1709 = vmatpush2.msra.mxu0 0.0
        %1710 = vmatprep.subr.mxu0 0.0
        %1711 = vmatpush2.msra.mxu0 0.0
        %1712 = vmatprep.subr.mxu0 0.0
        %1713 = vmatpush2.msra.mxu0 0.0
        %1714 = vmatprep.subr.mxu0 0.0
        %1715 = vmatpush2.msra.mxu0 0.0
        %1716 = vmatprep.subr.mxu0 0.0
        %1717 = vmatpush2.msra.mxu0 0.0
        %1718 = vmatprep.subr.mxu0 0.0
        %1719 = vmatpush2.msra.mxu0 0.0
        %1720 = vmatprep.subr.mxu0 0.0
        %1721 = vmatpush2.msra.mxu0 0.0
        %1722 = vmatprep.subr.mxu0 0.0
        %1723 = vmatpush2.msra.mxu0 0.0
        %1724 = vmatprep.mubr.f32.mxu0 0.0
        %1725 = vmatmul.mubr.f32.gmra.mxu0 %v1655
        %v1726 = vpop.f32.mrf.mxu0
        %v1727 = vadd.f32 0.0, %v1726
        %v1728 = vpop.f32.mrf.mxu0
        %1729 = vmatprep.mubr.f32.mxu0 0.0
        %1730 = vmatmul.mubr.f32.gmra.mxu0 %v1658
        %v1731 = vpop.f32.mrf.mxu0
        %v1732 = vadd.f32 0.0, %v1731
        %v1733 = vpop.f32.mrf.mxu0
        %1734 = vdwg.mxu0
        %v1736 = vsel %vm843, %v1154, 0
        %v1739 = vsel %vm843, %v1155, 0
        %v1742 = vsel %vm843, %v1042, 0
        %v1745 = vsel %vm843, %v1043, 0
        %1747 = vmatprep.subr.mxu0 0.0
        %1748 = vmatpush1.xpose.msra.mxu0 0.0
        %1749 = vmatprep.subr.mxu0 0.0
        %1750 = vmatpush1.xpose.msra.mxu0 0.0
        %1751 = vmatprep.subr.mxu0 0.0
        %1752 = vmatpush1.xpose.msra.mxu0 0.0
        %1753 = vmatprep.subr.mxu0 0.0
        %1754 = vmatpush1.xpose.msra.mxu0 0.0
        %1755 = vmatprep.subr.mxu0 0.0
        %1756 = vmatpush1.xpose.msra.mxu0 0.0
        %1757 = vmatprep.subr.mxu0 0.0
        %1758 = vmatpush1.xpose.msra.mxu0 0.0
        %1759 = vmatprep.subr.mxu0 0.0
        %1760 = vmatpush1.xpose.msra.mxu0 0.0
        %1761 = vmatprep.subr.mxu0 0.0
        %1762 = vmatpush1.xpose.msra.mxu0 0.0
        %1763 = vmatprep.subr.mxu0 0.0
        %1764 = vmatpush1.xpose.msra.mxu0 0.0
        %1765 = vmatprep.subr.mxu0 0.0
        %1766 = vmatpush1.xpose.msra.mxu0 0.0
        %1767 = vmatprep.subr.mxu0 0.0
        %1768 = vmatpush1.xpose.msra.mxu0 0.0
        %1769 = vmatprep.subr.mxu0 0.0
        %1770 = vmatpush1.xpose.msra.mxu0 0.0
        %1771 = vmatprep.subr.mxu0 0.0
        %1772 = vmatpush1.xpose.msra.mxu0 0.0
        %1773 = vmatprep.subr.mxu0 0.0
        %1774 = vmatpush1.xpose.msra.mxu0 0.0
        %1775 = vmatprep.subr.mxu0 0.0
        %1776 = vmatpush1.xpose.msra.mxu0 %v1745
        %1777 = vmatprep.subr.mxu0 0.0
        %1778 = vmatpush1.xpose.msra.mxu0 %v1742
        %1779 = vmatprep.subr.mxu0 0.0
        %1780 = vmatpush2.xpose.msra.mxu0 0.0
        %1781 = vmatprep.subr.mxu0 0.0
        %1782 = vmatpush2.xpose.msra.mxu0 0.0
        %1783 = vmatprep.subr.mxu0 0.0
        %1784 = vmatpush2.xpose.msra.mxu0 0.0
        %1785 = vmatprep.subr.mxu0 0.0
        %1786 = vmatpush2.xpose.msra.mxu0 0.0
        %1787 = vmatprep.subr.mxu0 0.0
        %1788 = vmatpush2.xpose.msra.mxu0 0.0
        %1789 = vmatprep.subr.mxu0 0.0
        %1790 = vmatpush2.xpose.msra.mxu0 0.0
        %1791 = vmatprep.subr.mxu0 0.0
        %1792 = vmatpush2.xpose.msra.mxu0 0.0
        %1793 = vmatprep.subr.mxu0 0.0
        %1794 = vmatpush2.xpose.msra.mxu0 0.0
        %1795 = vmatprep.subr.mxu0 0.0
        %1796 = vmatpush2.xpose.msra.mxu0 0.0
        %1797 = vmatprep.subr.mxu0 0.0
        %1798 = vmatpush2.xpose.msra.mxu0 0.0
        %1799 = vmatprep.subr.mxu0 0.0
        %1800 = vmatpush2.xpose.msra.mxu0 0.0
        %1801 = vmatprep.subr.mxu0 0.0
        %1802 = vmatpush2.xpose.msra.mxu0 0.0
        %1803 = vmatprep.subr.mxu0 0.0
        %1804 = vmatpush2.xpose.msra.mxu0 0.0
        %1805 = vmatprep.subr.mxu0 0.0
        %1806 = vmatpush2.xpose.msra.mxu0 0.0
        %1807 = vmatprep.subr.mxu0 0.0
        %1808 = vmatpush2.xpose.msra.mxu0 0.0
        %1809 = vmatprep.subr.mxu0 0.0
        %1810 = vmatpush2.xpose.msra.mxu0 0.0
        %1811 = vmatprep.mubr.f32.mxu0 0.0
        %1812 = vmatmul.mubr.f32.gmra.mxu0 %v1736
        %v1813 = vpop.f32.mrf.mxu0
        %v1814 = vadd.f32 0.0, %v1813
        %v1815 = vpop.f32.mrf.mxu0
        %1816 = vmatprep.mubr.f32.mxu0 0.0
        %1817 = vmatmul.mubr.f32.gmra.mxu0 %v1739
        %v1818 = vpop.f32.mrf.mxu0
        %v1819 = vadd.f32 0.0, %v1818
        %v1820 = vpop.f32.mrf.mxu0
        %1821 = vdwg.mxu0
        %v1822 = vsel %vm1251, %v1814, -inf
        %1823 = vmax.xlane.f32.xlu0 %v1822
        %v1824 = vpop.xlane.xlu0 %1823
        %v1825 = vsel %vm1251, %v1819, -inf
        %1826 = vmax.xlane.f32.xlu0 %v1825
        %v1827 = vpop.xlane.xlu0 %1826
        %v1828 = vsub.f32 %v1814, %v1824
        %v1829 = vsub.f32 %v1819, %v1827
        %v1830 = vmul.f32 %v1828, 1.442695
        %v1831 = vpow.pop %v1830
        %v1832 = vmul.f32 %v1829, 1.442695
        %v1833 = vpow.pop %v1832
        %v1834 = vsel %vm1251, %v1831, 0.0
        %1835 = vadd.xlane.f32.xlu0 %v1834
        %v1836 = vpop.xlane.xlu0 %1835
        %v1837 = vsel %vm1251, %v1833, 0.0
        %1838 = vadd.xlane.f32.xlu0 %v1837
        %v1839 = vpop.xlane.xlu0 %1838
        %v1840 = vrcp.pop %v1836
        %v1841 = vmul.f32 %v1831, %v1840
        %v1842 = vrcp.pop %v1839
        %v1843 = vmul.f32 %v1833, %v1842
        %v1845 = vsel %vm1251, %v1841, 0
        %v1848 = vsel %vm1251, %v1843, 0
        %1850 = vmatprep.subr.mxu0 0.0
        %1851 = vmatpush1.msra.mxu0 0.0
        %1852 = vmatprep.subr.mxu0 0.0
        %1853 = vmatpush1.msra.mxu0 0.0
        %1854 = vmatprep.subr.mxu0 0.0
        %1855 = vmatpush1.msra.mxu0 0.0
        %1856 = vmatprep.subr.mxu0 0.0
        %1857 = vmatpush1.msra.mxu0 0.0
        %1858 = vmatprep.subr.mxu0 0.0
        %1859 = vmatpush1.msra.mxu0 0.0
        %1860 = vmatprep.subr.mxu0 0.0
        %1861 = vmatpush1.msra.mxu0 0.0
        %1862 = vmatprep.subr.mxu0 0.0
        %1863 = vmatpush1.msra.mxu0 0.0
        %1864 = vmatprep.subr.mxu0 0.0
        %1865 = vmatpush1.msra.mxu0 0.0
        %1866 = vmatprep.subr.mxu0 0.0
        %1867 = vmatpush1.msra.mxu0 0.0
        %1868 = vmatprep.subr.mxu0 0.0
        %1869 = vmatpush1.msra.mxu0 0.0
        %1870 = vmatprep.subr.mxu0 0.0
        %1871 = vmatpush1.msra.mxu0 0.0
        %1872 = vmatprep.subr.mxu0 0.0
        %1873 = vmatpush1.msra.mxu0 0.0
        %1874 = vmatprep.subr.mxu0 0.0
        %1875 = vmatpush1.msra.mxu0 0.0
        %1876 = vmatprep.subr.mxu0 0.0
        %1877 = vmatpush1.msra.mxu0 0.0
        %1878 = vmatprep.subr.mxu0 0.0
        %1879 = vmatpush1.msra.mxu0 %v784
        %1880 = vmatprep.subr.mxu0 0.0
        %1881 = vmatpush1.msra.mxu0 %v779
        %1882 = vmatprep.subr.mxu0 0.0
        %1883 = vmatpush2.msra.mxu0 0.0
        %1884 = vmatprep.subr.mxu0 0.0
        %1885 = vmatpush2.msra.mxu0 0.0
        %1886 = vmatprep.subr.mxu0 0.0
        %1887 = vmatpush2.msra.mxu0 0.0
        %1888 = vmatprep.subr.mxu0 0.0
        %1889 = vmatpush2.msra.mxu0 0.0
        %1890 = vmatprep.subr.mxu0 0.0
        %1891 = vmatpush2.msra.mxu0 0.0
        %1892 = vmatprep.subr.mxu0 0.0
        %1893 = vmatpush2.msra.mxu0 0.0
        %1894 = vmatprep.subr.mxu0 0.0
        %1895 = vmatpush2.msra.mxu0 0.0
        %1896 = vmatprep.subr.mxu0 0.0
        %1897 = vmatpush2.msra.mxu0 0.0
        %1898 = vmatprep.subr.mxu0 0.0
        %1899 = vmatpush2.msra.mxu0 0.0
        %1900 = vmatprep.subr.mxu0 0.0
        %1901 = vmatpush2.msra.mxu0 0.0
        %1902 = vmatprep.subr.mxu0 0.0
        %1903 = vmatpush2.msra.mxu0 0.0
        %1904 = vmatprep.subr.mxu0 0.0
        %1905 = vmatpush2.msra.mxu0 0.0
        %1906 = vmatprep.subr.mxu0 0.0
        %1907 = vmatpush2.msra.mxu0 0.0
        %1908 = vmatprep.subr.mxu0 0.0
        %1909 = vmatpush2.msra.mxu0 0.0
        %1910 = vmatprep.subr.mxu0 0.0
        %1911 = vmatpush2.msra.mxu0 0.0
        %1912 = vmatprep.subr.mxu0 0.0
        %1913 = vmatpush2.msra.mxu0 0.0
        %1914 = vmatprep.mubr.f32.mxu0 0.0
        %1915 = vmatmul.mubr.f32.gmra.mxu0 %v1845
        %v1916 = vpop.f32.mrf.mxu0
        %v1917 = vadd.f32 0.0, %v1916
        %v1918 = vpop.f32.mrf.mxu0
        %1919 = vmatprep.mubr.f32.mxu0 0.0
        %1920 = vmatmul.mubr.f32.gmra.mxu0 %v1848
        %v1921 = vpop.f32.mrf.mxu0
        %v1922 = vadd.f32 0.0, %v1921
        %v1923 = vpop.f32.mrf.mxu0
        %1924 = vdwg.mxu0
        %v1926 = vsel %vm843, %v1156, 0
        %v1929 = vsel %vm843, %v1157, 0
        %v1932 = vsel %vm843, %v1044, 0
        %v1935 = vsel %vm843, %v1045, 0
        %1937 = vmatprep.subr.mxu0 0.0
        %1938 = vmatpush1.xpose.msra.mxu0 0.0
        %1939 = vmatprep.subr.mxu0 0.0
        %1940 = vmatpush1.xpose.msra.mxu0 0.0
        %1941 = vmatprep.subr.mxu0 0.0
        %1942 = vmatpush1.xpose.msra.mxu0 0.0
        %1943 = vmatprep.subr.mxu0 0.0
        %1944 = vmatpush1.xpose.msra.mxu0 0.0
        %1945 = vmatprep.subr.mxu0 0.0
        %1946 = vmatpush1.xpose.msra.mxu0 0.0
        %1947 = vmatprep.subr.mxu0 0.0
        %1948 = vmatpush1.xpose.msra.mxu0 0.0
        %1949 = vmatprep.subr.mxu0 0.0
        %1950 = vmatpush1.xpose.msra.mxu0 0.0
        %1951 = vmatprep.subr.mxu0 0.0
        %1952 = vmatpush1.xpose.msra.mxu0 0.0
        %1953 = vmatprep.subr.mxu0 0.0
        %1954 = vmatpush1.xpose.msra.mxu0 0.0
        %1955 = vmatprep.subr.mxu0 0.0
        %1956 = vmatpush1.xpose.msra.mxu0 0.0
        %1957 = vmatprep.subr.mxu0 0.0
        %1958 = vmatpush1.xpose.msra.mxu0 0.0
        %1959 = vmatprep.subr.mxu0 0.0
        %1960 = vmatpush1.xpose.msra.mxu0 0.0
        %1961 = vmatprep.subr.mxu0 0.0
        %1962 = vmatpush1.xpose.msra.mxu0 0.0
        %1963 = vmatprep.subr.mxu0 0.0
        %1964 = vmatpush1.xpose.msra.mxu0 0.0
        %1965 = vmatprep.subr.mxu0 0.0
        %1966 = vmatpush1.xpose.msra.mxu0 %v1935
        %1967 = vmatprep.subr.mxu0 0.0
        %1968 = vmatpush1.xpose.msra.mxu0 %v1932
        %1969 = vmatprep.subr.mxu0 0.0
        %1970 = vmatpush2.xpose.msra.mxu0 0.0
        %1971 = vmatprep.subr.mxu0 0.0
        %1972 = vmatpush2.xpose.msra.mxu0 0.0
        %1973 = vmatprep.subr.mxu0 0.0
        %1974 = vmatpush2.xpose.msra.mxu0 0.0
        %1975 = vmatprep.subr.mxu0 0.0
        %1976 = vmatpush2.xpose.msra.mxu0 0.0
        %1977 = vmatprep.subr.mxu0 0.0
        %1978 = vmatpush2.xpose.msra.mxu0 0.0
        %1979 = vmatprep.subr.mxu0 0.0
        %1980 = vmatpush2.xpose.msra.mxu0 0.0
        %1981 = vmatprep.subr.mxu0 0.0
        %1982 = vmatpush2.xpose.msra.mxu0 0.0
        %1983 = vmatprep.subr.mxu0 0.0
        %1984 = vmatpush2.xpose.msra.mxu0 0.0
        %1985 = vmatprep.subr.mxu0 0.0
        %1986 = vmatpush2.xpose.msra.mxu0 0.0
        %1987 = vmatprep.subr.mxu0 0.0
        %1988 = vmatpush2.xpose.msra.mxu0 0.0
        %1989 = vmatprep.subr.mxu0 0.0
        %1990 = vmatpush2.xpose.msra.mxu0 0.0
        %1991 = vmatprep.subr.mxu0 0.0
        %1992 = vmatpush2.xpose.msra.mxu0 0.0
        %1993 = vmatprep.subr.mxu0 0.0
        %1994 = vmatpush2.xpose.msra.mxu0 0.0
        %1995 = vmatprep.subr.mxu0 0.0
        %1996 = vmatpush2.xpose.msra.mxu0 0.0
        %1997 = vmatprep.subr.mxu0 0.0
        %1998 = vmatpush2.xpose.msra.mxu0 0.0
        %1999 = vmatprep.subr.mxu0 0.0
        %2000 = vmatpush2.xpose.msra.mxu0 0.0
        %2001 = vmatprep.mubr.f32.mxu0 0.0
        %2002 = vmatmul.mubr.f32.gmra.mxu0 %v1926
        %v2003 = vpop.f32.mrf.mxu0
        %v2004 = vadd.f32 0.0, %v2003
        %v2005 = vpop.f32.mrf.mxu0
        %2006 = vmatprep.mubr.f32.mxu0 0.0
        %2007 = vmatmul.mubr.f32.gmra.mxu0 %v1929
        %v2008 = vpop.f32.mrf.mxu0
        %v2009 = vadd.f32 0.0, %v2008
        %v2010 = vpop.f32.mrf.mxu0
        %2011 = vdwg.mxu0
        %v2012 = vsel %vm1251, %v2004, -inf
        %2013 = vmax.xlane.f32.xlu0 %v2012
        %v2014 = vpop.xlane.xlu0 %2013
        %v2015 = vsel %vm1251, %v2009, -inf
        %2016 = vmax.xlane.f32.xlu0 %v2015
        %v2017 = vpop.xlane.xlu0 %2016
        %v2018 = vsub.f32 %v2004, %v2014
        %v2019 = vsub.f32 %v2009, %v2017
        %v2020 = vmul.f32 %v2018, 1.442695
        %v2021 = vpow.pop %v2020
        %v2022 = vmul.f32 %v2019, 1.442695
        %v2023 = vpow.pop %v2022
        %v2024 = vsel %vm1251, %v2021, 0.0
        %2025 = vadd.xlane.f32.xlu0 %v2024
        %v2026 = vpop.xlane.xlu0 %2025
        %v2027 = vsel %vm1251, %v2023, 0.0
        %2028 = vadd.xlane.f32.xlu0 %v2027
        %v2029 = vpop.xlane.xlu0 %2028
        %v2030 = vrcp.pop %v2026
        %v2031 = vmul.f32 %v2021, %v2030
        %v2032 = vrcp.pop %v2029
        %v2033 = vmul.f32 %v2023, %v2032
        %v2035 = vsel %vm1251, %v2031, 0
        %v2038 = vsel %vm1251, %v2033, 0
        %2040 = vmatprep.subr.mxu0 0.0
        %2041 = vmatpush1.msra.mxu0 0.0
        %2042 = vmatprep.subr.mxu0 0.0
        %2043 = vmatpush1.msra.mxu0 0.0
        %2044 = vmatprep.subr.mxu0 0.0
        %2045 = vmatpush1.msra.mxu0 0.0
        %2046 = vmatprep.subr.mxu0 0.0
        %2047 = vmatpush1.msra.mxu0 0.0
        %2048 = vmatprep.subr.mxu0 0.0
        %2049 = vmatpush1.msra.mxu0 0.0
        %2050 = vmatprep.subr.mxu0 0.0
        %2051 = vmatpush1.msra.mxu0 0.0
        %2052 = vmatprep.subr.mxu0 0.0
        %2053 = vmatpush1.msra.mxu0 0.0
        %2054 = vmatprep.subr.mxu0 0.0
        %2055 = vmatpush1.msra.mxu0 0.0
        %2056 = vmatprep.subr.mxu0 0.0
        %2057 = vmatpush1.msra.mxu0 0.0
        %2058 = vmatprep.subr.mxu0 0.0
        %2059 = vmatpush1.msra.mxu0 0.0
        %2060 = vmatprep.subr.mxu0 0.0
        %2061 = vmatpush1.msra.mxu0 0.0
        %2062 = vmatprep.subr.mxu0 0.0
        %2063 = vmatpush1.msra.mxu0 0.0
        %2064 = vmatprep.subr.mxu0 0.0
        %2065 = vmatpush1.msra.mxu0 0.0
        %2066 = vmatprep.subr.mxu0 0.0
        %2067 = vmatpush1.msra.mxu0 0.0
        %2068 = vmatprep.subr.mxu0 0.0
        %2069 = vmatpush1.msra.mxu0 %v794
        %2070 = vmatprep.subr.mxu0 0.0
        %2071 = vmatpush1.msra.mxu0 %v789
        %2072 = vmatprep.subr.mxu0 0.0
        %2073 = vmatpush2.msra.mxu0 0.0
        %2074 = vmatprep.subr.mxu0 0.0
        %2075 = vmatpush2.msra.mxu0 0.0
        %2076 = vmatprep.subr.mxu0 0.0
        %2077 = vmatpush2.msra.mxu0 0.0
        %2078 = vmatprep.subr.mxu0 0.0
        %2079 = vmatpush2.msra.mxu0 0.0
        %2080 = vmatprep.subr.mxu0 0.0
        %2081 = vmatpush2.msra.mxu0 0.0
        %2082 = vmatprep.subr.mxu0 0.0
        %2083 = vmatpush2.msra.mxu0 0.0
        %2084 = vmatprep.subr.mxu0 0.0
        %2085 = vmatpush2.msra.mxu0 0.0
        %2086 = vmatprep.subr.mxu0 0.0
        %2087 = vmatpush2.msra.mxu0 0.0
        %2088 = vmatprep.subr.mxu0 0.0
        %2089 = vmatpush2.msra.mxu0 0.0
        %2090 = vmatprep.subr.mxu0 0.0
        %2091 = vmatpush2.msra.mxu0 0.0
        %2092 = vmatprep.subr.mxu0 0.0
        %2093 = vmatpush2.msra.mxu0 0.0
        %2094 = vmatprep.subr.mxu0 0.0
        %2095 = vmatpush2.msra.mxu0 0.0
        %2096 = vmatprep.subr.mxu0 0.0
        %2097 = vmatpush2.msra.mxu0 0.0
        %2098 = vmatprep.subr.mxu0 0.0
        %2099 = vmatpush2.msra.mxu0 0.0
        %2100 = vmatprep.subr.mxu0 0.0
        %2101 = vmatpush2.msra.mxu0 0.0
        %2102 = vmatprep.subr.mxu0 0.0
        %2103 = vmatpush2.msra.mxu0 0.0
        %2104 = vmatprep.mubr.f32.mxu0 0.0
        %2105 = vmatmul.mubr.f32.gmra.mxu0 %v2035
        %v2106 = vpop.f32.mrf.mxu0
        %v2107 = vadd.f32 0.0, %v2106
        %v2108 = vpop.f32.mrf.mxu0
        %2109 = vmatprep.mubr.f32.mxu0 0.0
        %2110 = vmatmul.mubr.f32.gmra.mxu0 %v2038
        %v2111 = vpop.f32.mrf.mxu0
        %v2112 = vadd.f32 0.0, %v2111
        %v2113 = vpop.f32.mrf.mxu0
        %2114 = vdwg.mxu0
        %v2116 = vsel %vm843, %v1158, 0
        %v2119 = vsel %vm843, %v1159, 0
        %v2122 = vsel %vm843, %v1046, 0
        %v2125 = vsel %vm843, %v1047, 0
        %2127 = vmatprep.subr.mxu0 0.0
        %2128 = vmatpush1.xpose.msra.mxu0 0.0
        %2129 = vmatprep.subr.mxu0 0.0
        %2130 = vmatpush1.xpose.msra.mxu0 0.0
        %2131 = vmatprep.subr.mxu0 0.0
        %2132 = vmatpush1.xpose.msra.mxu0 0.0
        %2133 = vmatprep.subr.mxu0 0.0
        %2134 = vmatpush1.xpose.msra.mxu0 0.0
        %2135 = vmatprep.subr.mxu0 0.0
        %2136 = vmatpush1.xpose.msra.mxu0 0.0
        %2137 = vmatprep.subr.mxu0 0.0
        %2138 = vmatpush1.xpose.msra.mxu0 0.0
        %2139 = vmatprep.subr.mxu0 0.0
        %2140 = vmatpush1.xpose.msra.mxu0 0.0
        %2141 = vmatprep.subr.mxu0 0.0
        %2142 = vmatpush1.xpose.msra.mxu0 0.0
        %2143 = vmatprep.subr.mxu0 0.0
        %2144 = vmatpush1.xpose.msra.mxu0 0.0
        %2145 = vmatprep.subr.mxu0 0.0
        %2146 = vmatpush1.xpose.msra.mxu0 0.0
        %2147 = vmatprep.subr.mxu0 0.0
        %2148 = vmatpush1.xpose.msra.mxu0 0.0
        %2149 = vmatprep.subr.mxu0 0.0
        %2150 = vmatpush1.xpose.msra.mxu0 0.0
        %2151 = vmatprep.subr.mxu0 0.0
        %2152 = vmatpush1.xpose.msra.mxu0 0.0
        %2153 = vmatprep.subr.mxu0 0.0
        %2154 = vmatpush1.xpose.msra.mxu0 0.0
        %2155 = vmatprep.subr.mxu0 0.0
        %2156 = vmatpush1.xpose.msra.mxu0 %v2125
        %2157 = vmatprep.subr.mxu0 0.0
        %2158 = vmatpush1.xpose.msra.mxu0 %v2122
        %2159 = vmatprep.subr.mxu0 0.0
        %2160 = vmatpush2.xpose.msra.mxu0 0.0
        %2161 = vmatprep.subr.mxu0 0.0
        %2162 = vmatpush2.xpose.msra.mxu0 0.0
        %2163 = vmatprep.subr.mxu0 0.0
        %2164 = vmatpush2.xpose.msra.mxu0 0.0
        %2165 = vmatprep.subr.mxu0 0.0
        %2166 = vmatpush2.xpose.msra.mxu0 0.0
        %2167 = vmatprep.subr.mxu0 0.0
        %2168 = vmatpush2.xpose.msra.mxu0 0.0
        %2169 = vmatprep.subr.mxu0 0.0
        %2170 = vmatpush2.xpose.msra.mxu0 0.0
        %2171 = vmatprep.subr.mxu0 0.0
        %2172 = vmatpush2.xpose.msra.mxu0 0.0
        %2173 = vmatprep.subr.mxu0 0.0
        %2174 = vmatpush2.xpose.msra.mxu0 0.0
        %2175 = vmatprep.subr.mxu0 0.0
        %2176 = vmatpush2.xpose.msra.mxu0 0.0
        %2177 = vmatprep.subr.mxu0 0.0
        %2178 = vmatpush2.xpose.msra.mxu0 0.0
        %2179 = vmatprep.subr.mxu0 0.0
        %2180 = vmatpush2.xpose.msra.mxu0 0.0
        %2181 = vmatprep.subr.mxu0 0.0
        %2182 = vmatpush2.xpose.msra.mxu0 0.0
        %2183 = vmatprep.subr.mxu0 0.0
        %2184 = vmatpush2.xpose.msra.mxu0 0.0
        %2185 = vmatprep.subr.mxu0 0.0
        %2186 = vmatpush2.xpose.msra.mxu0 0.0
        %2187 = vmatprep.subr.mxu0 0.0
        %2188 = vmatpush2.xpose.msra.mxu0 0.0
        %2189 = vmatprep.subr.mxu0 0.0
        %2190 = vmatpush2.xpose.msra.mxu0 0.0
        %2191 = vmatprep.mubr.f32.mxu0 0.0
        %2192 = vmatmul.mubr.f32.gmra.mxu0 %v2116
        %v2193 = vpop.f32.mrf.mxu0
        %v2194 = vadd.f32 0.0, %v2193
        %v2195 = vpop.f32.mrf.mxu0
        %2196 = vmatprep.mubr.f32.mxu0 0.0
        %2197 = vmatmul.mubr.f32.gmra.mxu0 %v2119
        %v2198 = vpop.f32.mrf.mxu0
        %v2199 = vadd.f32 0.0, %v2198
        %v2200 = vpop.f32.mrf.mxu0
        %2201 = vdwg.mxu0
        %v2202 = vsel %vm1251, %v2194, -inf
        %2203 = vmax.xlane.f32.xlu0 %v2202
        %v2204 = vpop.xlane.xlu0 %2203
        %v2205 = vsel %vm1251, %v2199, -inf
        %2206 = vmax.xlane.f32.xlu0 %v2205
        %v2207 = vpop.xlane.xlu0 %2206
        %v2208 = vsub.f32 %v2194, %v2204
        %v2209 = vsub.f32 %v2199, %v2207
        %v2210 = vmul.f32 %v2208, 1.442695
        %v2211 = vpow.pop %v2210
        %v2212 = vmul.f32 %v2209, 1.442695
        %v2213 = vpow.pop %v2212
        %v2214 = vsel %vm1251, %v2211, 0.0
        %2215 = vadd.xlane.f32.xlu0 %v2214
        %v2216 = vpop.xlane.xlu0 %2215
        %v2217 = vsel %vm1251, %v2213, 0.0
        %2218 = vadd.xlane.f32.xlu0 %v2217
        %v2219 = vpop.xlane.xlu0 %2218
        %v2220 = vrcp.pop %v2216
        %v2221 = vmul.f32 %v2211, %v2220
        %v2222 = vrcp.pop %v2219
        %v2223 = vmul.f32 %v2213, %v2222
        %v2225 = vsel %vm1251, %v2221, 0
        %v2228 = vsel %vm1251, %v2223, 0
        %2230 = vmatprep.subr.mxu0 0.0
        %2231 = vmatpush1.msra.mxu0 0.0
        %2232 = vmatprep.subr.mxu0 0.0
        %2233 = vmatpush1.msra.mxu0 0.0
        %2234 = vmatprep.subr.mxu0 0.0
        %2235 = vmatpush1.msra.mxu0 0.0
        %2236 = vmatprep.subr.mxu0 0.0
        %2237 = vmatpush1.msra.mxu0 0.0
        %2238 = vmatprep.subr.mxu0 0.0
        %2239 = vmatpush1.msra.mxu0 0.0
        %2240 = vmatprep.subr.mxu0 0.0
        %2241 = vmatpush1.msra.mxu0 0.0
        %2242 = vmatprep.subr.mxu0 0.0
        %2243 = vmatpush1.msra.mxu0 0.0
        %2244 = vmatprep.subr.mxu0 0.0
        %2245 = vmatpush1.msra.mxu0 0.0
        %2246 = vmatprep.subr.mxu0 0.0
        %2247 = vmatpush1.msra.mxu0 0.0
        %2248 = vmatprep.subr.mxu0 0.0
        %2249 = vmatpush1.msra.mxu0 0.0
        %2250 = vmatprep.subr.mxu0 0.0
        %2251 = vmatpush1.msra.mxu0 0.0
        %2252 = vmatprep.subr.mxu0 0.0
        %2253 = vmatpush1.msra.mxu0 0.0
        %2254 = vmatprep.subr.mxu0 0.0
        %2255 = vmatpush1.msra.mxu0 0.0
        %2256 = vmatprep.subr.mxu0 0.0
        %2257 = vmatpush1.msra.mxu0 0.0
        %2258 = vmatprep.subr.mxu0 0.0
        %2259 = vmatpush1.msra.mxu0 %v804
        %2260 = vmatprep.subr.mxu0 0.0
        %2261 = vmatpush1.msra.mxu0 %v799
        %2262 = vmatprep.subr.mxu0 0.0
        %2263 = vmatpush2.msra.mxu0 0.0
        %2264 = vmatprep.subr.mxu0 0.0
        %2265 = vmatpush2.msra.mxu0 0.0
        %2266 = vmatprep.subr.mxu0 0.0
        %2267 = vmatpush2.msra.mxu0 0.0
        %2268 = vmatprep.subr.mxu0 0.0
        %2269 = vmatpush2.msra.mxu0 0.0
        %2270 = vmatprep.subr.mxu0 0.0
        %2271 = vmatpush2.msra.mxu0 0.0
        %2272 = vmatprep.subr.mxu0 0.0
        %2273 = vmatpush2.msra.mxu0 0.0
        %2274 = vmatprep.subr.mxu0 0.0
        %2275 = vmatpush2.msra.mxu0 0.0
        %2276 = vmatprep.subr.mxu0 0.0
        %2277 = vmatpush2.msra.mxu0 0.0
        %2278 = vmatprep.subr.mxu0 0.0
        %2279 = vmatpush2.msra.mxu0 0.0
        %2280 = vmatprep.subr.mxu0 0.0
        %2281 = vmatpush2.msra.mxu0 0.0
        %2282 = vmatprep.subr.mxu0 0.0
        %2283 = vmatpush2.msra.mxu0 0.0
        %2284 = vmatprep.subr.mxu0 0.0
        %2285 = vmatpush2.msra.mxu0 0.0
        %2286 = vmatprep.subr.mxu0 0.0
        %2287 = vmatpush2.msra.mxu0 0.0
        %2288 = vmatprep.subr.mxu0 0.0
        %2289 = vmatpush2.msra.mxu0 0.0
        %2290 = vmatprep.subr.mxu0 0.0
        %2291 = vmatpush2.msra.mxu0 0.0
        %2292 = vmatprep.subr.mxu0 0.0
        %2293 = vmatpush2.msra.mxu0 0.0
        %2294 = vmatprep.mubr.f32.mxu0 0.0
        %2295 = vmatmul.mubr.f32.gmra.mxu0 %v2225
        %v2296 = vpop.f32.mrf.mxu0
        %v2297 = vadd.f32 0.0, %v2296
        %v2298 = vpop.f32.mrf.mxu0
        %2299 = vmatprep.mubr.f32.mxu0 0.0
        %2300 = vmatmul.mubr.f32.gmra.mxu0 %v2228
        %v2301 = vpop.f32.mrf.mxu0
        %v2302 = vadd.f32 0.0, %v2301
        %v2303 = vpop.f32.mrf.mxu0
        %2304 = vdwg.mxu0
        %v2306 = vsel %vm843, %v1160, 0
        %v2309 = vsel %vm843, %v1161, 0
        %v2312 = vsel %vm843, %v1048, 0
        %v2315 = vsel %vm843, %v1049, 0
        %2317 = vmatprep.subr.mxu0 0.0
        %2318 = vmatpush1.xpose.msra.mxu0 0.0
        %2319 = vmatprep.subr.mxu0 0.0
        %2320 = vmatpush1.xpose.msra.mxu0 0.0
        %2321 = vmatprep.subr.mxu0 0.0
        %2322 = vmatpush1.xpose.msra.mxu0 0.0
        %2323 = vmatprep.subr.mxu0 0.0
        %2324 = vmatpush1.xpose.msra.mxu0 0.0
        %2325 = vmatprep.subr.mxu0 0.0
        %2326 = vmatpush1.xpose.msra.mxu0 0.0
        %2327 = vmatprep.subr.mxu0 0.0
        %2328 = vmatpush1.xpose.msra.mxu0 0.0
        %2329 = vmatprep.subr.mxu0 0.0
        %2330 = vmatpush1.xpose.msra.mxu0 0.0
        %2331 = vmatprep.subr.mxu0 0.0
        %2332 = vmatpush1.xpose.msra.mxu0 0.0
        %2333 = vmatprep.subr.mxu0 0.0
        %2334 = vmatpush1.xpose.msra.mxu0 0.0
        %2335 = vmatprep.subr.mxu0 0.0
        %2336 = vmatpush1.xpose.msra.mxu0 0.0
        %2337 = vmatprep.subr.mxu0 0.0
        %2338 = vmatpush1.xpose.msra.mxu0 0.0
        %2339 = vmatprep.subr.mxu0 0.0
        %2340 = vmatpush1.xpose.msra.mxu0 0.0
        %2341 = vmatprep.subr.mxu0 0.0
        %2342 = vmatpush1.xpose.msra.mxu0 0.0
        %2343 = vmatprep.subr.mxu0 0.0
        %2344 = vmatpush1.xpose.msra.mxu0 0.0
        %2345 = vmatprep.subr.mxu0 0.0
        %2346 = vmatpush1.xpose.msra.mxu0 %v2315
        %2347 = vmatprep.subr.mxu0 0.0
        %2348 = vmatpush1.xpose.msra.mxu0 %v2312
        %2349 = vmatprep.subr.mxu0 0.0
        %2350 = vmatpush2.xpose.msra.mxu0 0.0
        %2351 = vmatprep.subr.mxu0 0.0
        %2352 = vmatpush2.xpose.msra.mxu0 0.0
        %2353 = vmatprep.subr.mxu0 0.0
        %2354 = vmatpush2.xpose.msra.mxu0 0.0
        %2355 = vmatprep.subr.mxu0 0.0
        %2356 = vmatpush2.xpose.msra.mxu0 0.0
        %2357 = vmatprep.subr.mxu0 0.0
        %2358 = vmatpush2.xpose.msra.mxu0 0.0
        %2359 = vmatprep.subr.mxu0 0.0
        %2360 = vmatpush2.xpose.msra.mxu0 0.0
        %2361 = vmatprep.subr.mxu0 0.0
        %2362 = vmatpush2.xpose.msra.mxu0 0.0
        %2363 = vmatprep.subr.mxu0 0.0
        %2364 = vmatpush2.xpose.msra.mxu0 0.0
        %2365 = vmatprep.subr.mxu0 0.0
        %2366 = vmatpush2.xpose.msra.mxu0 0.0
        %2367 = vmatprep.subr.mxu0 0.0
        %2368 = vmatpush2.xpose.msra.mxu0 0.0
        %2369 = vmatprep.subr.mxu0 0.0
        %2370 = vmatpush2.xpose.msra.mxu0 0.0
        %2371 = vmatprep.subr.mxu0 0.0
        %2372 = vmatpush2.xpose.msra.mxu0 0.0
        %2373 = vmatprep.subr.mxu0 0.0
        %2374 = vmatpush2.xpose.msra.mxu0 0.0
        %2375 = vmatprep.subr.mxu0 0.0
        %2376 = vmatpush2.xpose.msra.mxu0 0.0
        %2377 = vmatprep.subr.mxu0 0.0
        %2378 = vmatpush2.xpose.msra.mxu0 0.0
        %2379 = vmatprep.subr.mxu0 0.0
        %2380 = vmatpush2.xpose.msra.mxu0 0.0
        %2381 = vmatprep.mubr.f32.mxu0 0.0
        %2382 = vmatmul.mubr.f32.gmra.mxu0 %v2306
        %v2383 = vpop.f32.mrf.mxu0
        %v2384 = vadd.f32 0.0, %v2383
        %v2385 = vpop.f32.mrf.mxu0
        %2386 = vmatprep.mubr.f32.mxu0 0.0
        %2387 = vmatmul.mubr.f32.gmra.mxu0 %v2309
        %v2388 = vpop.f32.mrf.mxu0
        %v2389 = vadd.f32 0.0, %v2388
        %v2390 = vpop.f32.mrf.mxu0
        %2391 = vdwg.mxu0
        %v2392 = vsel %vm1251, %v2384, -inf
        %2393 = vmax.xlane.f32.xlu0 %v2392
        %v2394 = vpop.xlane.xlu0 %2393
        %v2395 = vsel %vm1251, %v2389, -inf
        %2396 = vmax.xlane.f32.xlu0 %v2395
        %v2397 = vpop.xlane.xlu0 %2396
        %v2398 = vsub.f32 %v2384, %v2394
        %v2399 = vsub.f32 %v2389, %v2397
        %v2400 = vmul.f32 %v2398, 1.442695
        %v2401 = vpow.pop %v2400
        %v2402 = vmul.f32 %v2399, 1.442695
        %v2403 = vpow.pop %v2402
        %v2404 = vsel %vm1251, %v2401, 0.0
        %2405 = vadd.xlane.f32.xlu0 %v2404
        %v2406 = vpop.xlane.xlu0 %2405
        %v2407 = vsel %vm1251, %v2403, 0.0
        %2408 = vadd.xlane.f32.xlu0 %v2407
        %v2409 = vpop.xlane.xlu0 %2408
        %v2410 = vrcp.pop %v2406
        %v2411 = vmul.f32 %v2401, %v2410
        %v2412 = vrcp.pop %v2409
        %v2413 = vmul.f32 %v2403, %v2412
        %v2415 = vsel %vm1251, %v2411, 0
        %v2418 = vsel %vm1251, %v2413, 0
        %2420 = vmatprep.subr.mxu0 0.0
        %2421 = vmatpush1.msra.mxu0 0.0
        %2422 = vmatprep.subr.mxu0 0.0
        %2423 = vmatpush1.msra.mxu0 0.0
        %2424 = vmatprep.subr.mxu0 0.0
        %2425 = vmatpush1.msra.mxu0 0.0
        %2426 = vmatprep.subr.mxu0 0.0
        %2427 = vmatpush1.msra.mxu0 0.0
        %2428 = vmatprep.subr.mxu0 0.0
        %2429 = vmatpush1.msra.mxu0 0.0
        %2430 = vmatprep.subr.mxu0 0.0
        %2431 = vmatpush1.msra.mxu0 0.0
        %2432 = vmatprep.subr.mxu0 0.0
        %2433 = vmatpush1.msra.mxu0 0.0
        %2434 = vmatprep.subr.mxu0 0.0
        %2435 = vmatpush1.msra.mxu0 0.0
        %2436 = vmatprep.subr.mxu0 0.0
        %2437 = vmatpush1.msra.mxu0 0.0
        %2438 = vmatprep.subr.mxu0 0.0
        %2439 = vmatpush1.msra.mxu0 0.0
        %2440 = vmatprep.subr.mxu0 0.0
        %2441 = vmatpush1.msra.mxu0 0.0
        %2442 = vmatprep.subr.mxu0 0.0
        %2443 = vmatpush1.msra.mxu0 0.0
        %2444 = vmatprep.subr.mxu0 0.0
        %2445 = vmatpush1.msra.mxu0 0.0
        %2446 = vmatprep.subr.mxu0 0.0
        %2447 = vmatpush1.msra.mxu0 0.0
        %2448 = vmatprep.subr.mxu0 0.0
        %2449 = vmatpush1.msra.mxu0 %v814
        %2450 = vmatprep.subr.mxu0 0.0
        %2451 = vmatpush1.msra.mxu0 %v809
        %2452 = vmatprep.subr.mxu0 0.0
        %2453 = vmatpush2.msra.mxu0 0.0
        %2454 = vmatprep.subr.mxu0 0.0
        %2455 = vmatpush2.msra.mxu0 0.0
        %2456 = vmatprep.subr.mxu0 0.0
        %2457 = vmatpush2.msra.mxu0 0.0
        %2458 = vmatprep.subr.mxu0 0.0
        %2459 = vmatpush2.msra.mxu0 0.0
        %2460 = vmatprep.subr.mxu0 0.0
        %2461 = vmatpush2.msra.mxu0 0.0
        %2462 = vmatprep.subr.mxu0 0.0
        %2463 = vmatpush2.msra.mxu0 0.0
        %2464 = vmatprep.subr.mxu0 0.0
        %2465 = vmatpush2.msra.mxu0 0.0
        %2466 = vmatprep.subr.mxu0 0.0
        %2467 = vmatpush2.msra.mxu0 0.0
        %2468 = vmatprep.subr.mxu0 0.0
        %2469 = vmatpush2.msra.mxu0 0.0
        %2470 = vmatprep.subr.mxu0 0.0
        %2471 = vmatpush2.msra.mxu0 0.0
        %2472 = vmatprep.subr.mxu0 0.0
        %2473 = vmatpush2.msra.mxu0 0.0
        %2474 = vmatprep.subr.mxu0 0.0
        %2475 = vmatpush2.msra.mxu0 0.0
        %2476 = vmatprep.subr.mxu0 0.0
        %2477 = vmatpush2.msra.mxu0 0.0
        %2478 = vmatprep.subr.mxu0 0.0
        %2479 = vmatpush2.msra.mxu0 0.0
        %2480 = vmatprep.subr.mxu0 0.0
        %2481 = vmatpush2.msra.mxu0 0.0
        %2482 = vmatprep.subr.mxu0 0.0
        %2483 = vmatpush2.msra.mxu0 0.0
        %2484 = vmatprep.mubr.f32.mxu0 0.0
        %2485 = vmatmul.mubr.f32.gmra.mxu0 %v2415
        %v2486 = vpop.f32.mrf.mxu0
        %v2487 = vadd.f32 0.0, %v2486
        %v2488 = vpop.f32.mrf.mxu0
        %2489 = vmatprep.mubr.f32.mxu0 0.0
        %2490 = vmatmul.mubr.f32.gmra.mxu0 %v2418
        %v2491 = vpop.f32.mrf.mxu0
        %v2492 = vadd.f32 0.0, %v2491
        %v2493 = vpop.f32.mrf.mxu0
        %2494 = vdwg.mxu0
        %v2496 = vsel %vm843, %v1162, 0
        %v2499 = vsel %vm843, %v1163, 0
        %v2502 = vsel %vm843, %v1050, 0
        %v2505 = vsel %vm843, %v1051, 0
        %2507 = vmatprep.subr.mxu0 0.0
        %2508 = vmatpush1.xpose.msra.mxu0 0.0
        %2509 = vmatprep.subr.mxu0 0.0
        %2510 = vmatpush1.xpose.msra.mxu0 0.0
        %2511 = vmatprep.subr.mxu0 0.0
        %2512 = vmatpush1.xpose.msra.mxu0 0.0
        %2513 = vmatprep.subr.mxu0 0.0
        %2514 = vmatpush1.xpose.msra.mxu0 0.0
        %2515 = vmatprep.subr.mxu0 0.0
        %2516 = vmatpush1.xpose.msra.mxu0 0.0
        %2517 = vmatprep.subr.mxu0 0.0
        %2518 = vmatpush1.xpose.msra.mxu0 0.0
        %2519 = vmatprep.subr.mxu0 0.0
        %2520 = vmatpush1.xpose.msra.mxu0 0.0
        %2521 = vmatprep.subr.mxu0 0.0
        %2522 = vmatpush1.xpose.msra.mxu0 0.0
        %2523 = vmatprep.subr.mxu0 0.0
        %2524 = vmatpush1.xpose.msra.mxu0 0.0
        %2525 = vmatprep.subr.mxu0 0.0
        %2526 = vmatpush1.xpose.msra.mxu0 0.0
        %2527 = vmatprep.subr.mxu0 0.0
        %2528 = vmatpush1.xpose.msra.mxu0 0.0
        %2529 = vmatprep.subr.mxu0 0.0
        %2530 = vmatpush1.xpose.msra.mxu0 0.0
        %2531 = vmatprep.subr.mxu0 0.0
        %2532 = vmatpush1.xpose.msra.mxu0 0.0
        %2533 = vmatprep.subr.mxu0 0.0
        %2534 = vmatpush1.xpose.msra.mxu0 0.0
        %2535 = vmatprep.subr.mxu0 0.0
        %2536 = vmatpush1.xpose.msra.mxu0 %v2505
        %2537 = vmatprep.subr.mxu0 0.0
        %2538 = vmatpush1.xpose.msra.mxu0 %v2502
        %2539 = vmatprep.subr.mxu0 0.0
        %2540 = vmatpush2.xpose.msra.mxu0 0.0
        %2541 = vmatprep.subr.mxu0 0.0
        %2542 = vmatpush2.xpose.msra.mxu0 0.0
        %2543 = vmatprep.subr.mxu0 0.0
        %2544 = vmatpush2.xpose.msra.mxu0 0.0
        %2545 = vmatprep.subr.mxu0 0.0
        %2546 = vmatpush2.xpose.msra.mxu0 0.0
        %2547 = vmatprep.subr.mxu0 0.0
        %2548 = vmatpush2.xpose.msra.mxu0 0.0
        %2549 = vmatprep.subr.mxu0 0.0
        %2550 = vmatpush2.xpose.msra.mxu0 0.0
        %2551 = vmatprep.subr.mxu0 0.0
        %2552 = vmatpush2.xpose.msra.mxu0 0.0
        %2553 = vmatprep.subr.mxu0 0.0
        %2554 = vmatpush2.xpose.msra.mxu0 0.0
        %2555 = vmatprep.subr.mxu0 0.0
        %2556 = vmatpush2.xpose.msra.mxu0 0.0
        %2557 = vmatprep.subr.mxu0 0.0
        %2558 = vmatpush2.xpose.msra.mxu0 0.0
        %2559 = vmatprep.subr.mxu0 0.0
        %2560 = vmatpush2.xpose.msra.mxu0 0.0
        %2561 = vmatprep.subr.mxu0 0.0
        %2562 = vmatpush2.xpose.msra.mxu0 0.0
        %2563 = vmatprep.subr.mxu0 0.0
        %2564 = vmatpush2.xpose.msra.mxu0 0.0
        %2565 = vmatprep.subr.mxu0 0.0
        %2566 = vmatpush2.xpose.msra.mxu0 0.0
        %2567 = vmatprep.subr.mxu0 0.0
        %2568 = vmatpush2.xpose.msra.mxu0 0.0
        %2569 = vmatprep.subr.mxu0 0.0
        %2570 = vmatpush2.xpose.msra.mxu0 0.0
        %2571 = vmatprep.mubr.f32.mxu0 0.0
        %2572 = vmatmul.mubr.f32.gmra.mxu0 %v2496
        %v2573 = vpop.f32.mrf.mxu0
        %v2574 = vadd.f32 0.0, %v2573
        %v2575 = vpop.f32.mrf.mxu0
        %2576 = vmatprep.mubr.f32.mxu0 0.0
        %2577 = vmatmul.mubr.f32.gmra.mxu0 %v2499
        %v2578 = vpop.f32.mrf.mxu0
        %v2579 = vadd.f32 0.0, %v2578
        %v2580 = vpop.f32.mrf.mxu0
        %2581 = vdwg.mxu0
        %v2582 = vsel %vm1251, %v2574, -inf
        %2583 = vmax.xlane.f32.xlu0 %v2582
        %v2584 = vpop.xlane.xlu0 %2583
        %v2585 = vsel %vm1251, %v2579, -inf
        %2586 = vmax.xlane.f32.xlu0 %v2585
        %v2587 = vpop.xlane.xlu0 %2586
        %v2588 = vsub.f32 %v2574, %v2584
        %v2589 = vsub.f32 %v2579, %v2587
        %v2590 = vmul.f32 %v2588, 1.442695
        %v2591 = vpow.pop %v2590
        %v2592 = vmul.f32 %v2589, 1.442695
        %v2593 = vpow.pop %v2592
        %v2594 = vsel %vm1251, %v2591, 0.0
        %2595 = vadd.xlane.f32.xlu0 %v2594
        %v2596 = vpop.xlane.xlu0 %2595
        %v2597 = vsel %vm1251, %v2593, 0.0
        %2598 = vadd.xlane.f32.xlu0 %v2597
        %v2599 = vpop.xlane.xlu0 %2598
        %v2600 = vrcp.pop %v2596
        %v2601 = vmul.f32 %v2591, %v2600
        %v2602 = vrcp.pop %v2599
        %v2603 = vmul.f32 %v2593, %v2602
        %v2605 = vsel %vm1251, %v2601, 0
        %v2608 = vsel %vm1251, %v2603, 0
        %2610 = vmatprep.subr.mxu0 0.0
        %2611 = vmatpush1.msra.mxu0 0.0
        %2612 = vmatprep.subr.mxu0 0.0
        %2613 = vmatpush1.msra.mxu0 0.0
        %2614 = vmatprep.subr.mxu0 0.0
        %2615 = vmatpush1.msra.mxu0 0.0
        %2616 = vmatprep.subr.mxu0 0.0
        %2617 = vmatpush1.msra.mxu0 0.0
        %2618 = vmatprep.subr.mxu0 0.0
        %2619 = vmatpush1.msra.mxu0 0.0
        %2620 = vmatprep.subr.mxu0 0.0
        %2621 = vmatpush1.msra.mxu0 0.0
        %2622 = vmatprep.subr.mxu0 0.0
        %2623 = vmatpush1.msra.mxu0 0.0
        %2624 = vmatprep.subr.mxu0 0.0
        %2625 = vmatpush1.msra.mxu0 0.0
        %2626 = vmatprep.subr.mxu0 0.0
        %2627 = vmatpush1.msra.mxu0 0.0
        %2628 = vmatprep.subr.mxu0 0.0
        %2629 = vmatpush1.msra.mxu0 0.0
        %2630 = vmatprep.subr.mxu0 0.0
        %2631 = vmatpush1.msra.mxu0 0.0
        %2632 = vmatprep.subr.mxu0 0.0
        %2633 = vmatpush1.msra.mxu0 0.0
        %2634 = vmatprep.subr.mxu0 0.0
        %2635 = vmatpush1.msra.mxu0 0.0
        %2636 = vmatprep.subr.mxu0 0.0
        %2637 = vmatpush1.msra.mxu0 0.0
        %2638 = vmatprep.subr.mxu0 0.0
        %2639 = vmatpush1.msra.mxu0 %v824
        %2640 = vmatprep.subr.mxu0 0.0
        %2641 = vmatpush1.msra.mxu0 %v819
        %2642 = vmatprep.subr.mxu0 0.0
        %2643 = vmatpush2.msra.mxu0 0.0
        %2644 = vmatprep.subr.mxu0 0.0
        %2645 = vmatpush2.msra.mxu0 0.0
        %2646 = vmatprep.subr.mxu0 0.0
        %2647 = vmatpush2.msra.mxu0 0.0
        %2648 = vmatprep.subr.mxu0 0.0
        %2649 = vmatpush2.msra.mxu0 0.0
        %2650 = vmatprep.subr.mxu0 0.0
        %2651 = vmatpush2.msra.mxu0 0.0
        %2652 = vmatprep.subr.mxu0 0.0
        %2653 = vmatpush2.msra.mxu0 0.0
        %2654 = vmatprep.subr.mxu0 0.0
        %2655 = vmatpush2.msra.mxu0 0.0
        %2656 = vmatprep.subr.mxu0 0.0
        %2657 = vmatpush2.msra.mxu0 0.0
        %2658 = vmatprep.subr.mxu0 0.0
        %2659 = vmatpush2.msra.mxu0 0.0
        %2660 = vmatprep.subr.mxu0 0.0
        %2661 = vmatpush2.msra.mxu0 0.0
        %2662 = vmatprep.subr.mxu0 0.0
        %2663 = vmatpush2.msra.mxu0 0.0
        %2664 = vmatprep.subr.mxu0 0.0
        %2665 = vmatpush2.msra.mxu0 0.0
        %2666 = vmatprep.subr.mxu0 0.0
        %2667 = vmatpush2.msra.mxu0 0.0
        %2668 = vmatprep.subr.mxu0 0.0
        %2669 = vmatpush2.msra.mxu0 0.0
        %2670 = vmatprep.subr.mxu0 0.0
        %2671 = vmatpush2.msra.mxu0 0.0
        %2672 = vmatprep.subr.mxu0 0.0
        %2673 = vmatpush2.msra.mxu0 0.0
        %2674 = vmatprep.mubr.f32.mxu0 0.0
        %2675 = vmatmul.mubr.f32.gmra.mxu0 %v2605
        %v2676 = vpop.f32.mrf.mxu0
        %v2677 = vadd.f32 0.0, %v2676
        %v2678 = vpop.f32.mrf.mxu0
        %2679 = vmatprep.mubr.f32.mxu0 0.0
        %2680 = vmatmul.mubr.f32.gmra.mxu0 %v2608
        %v2681 = vpop.f32.mrf.mxu0
        %v2682 = vadd.f32 0.0, %v2681
        %v2683 = vpop.f32.mrf.mxu0
        %2684 = vdwg.mxu0
        %v2685 = vld [vmem:[#allocation8] sm:$0xff]
        %v2686 = vld [vmem:[#allocation8 + $0x8] sm:$0xff]
        %v2687 = vld [vmem:[#allocation8 + $0x10] sm:$0xff]
        %v2688 = vld [vmem:[#allocation8 + $0x18] sm:$0xff]
        %v2689 = vld [vmem:[#allocation8 + $0x20] sm:$0xff]
        %v2690 = vld [vmem:[#allocation8 + $0x28] sm:$0xff]
        %v2691 = vld [vmem:[#allocation8 + $0x30] sm:$0xff]
        %v2692 = vld [vmem:[#allocation8 + $0x38] sm:$0xff]
        %v2693 = vld [vmem:[#allocation8 + $0x40] sm:$0xff]
        %v2694 = vld [vmem:[#allocation8 + $0x48] sm:$0xff]
        %v2695 = vld [vmem:[#allocation8 + $0x50] sm:$0xff]
        %v2696 = vld [vmem:[#allocation8 + $0x58] sm:$0xff]
        %v2697 = vld [vmem:[#allocation8 + $0x60] sm:$0xff]
        %v2698 = vld [vmem:[#allocation8 + $0x68] sm:$0xff]
        %v2699 = vld [vmem:[#allocation8 + $0x70] sm:$0xff]
        %v2700 = vld [vmem:[#allocation8 + $0x78] sm:$0xff]
        %2701 = vmatprep.subr.mxu0 0.0
        %2702 = vmatpush1.msra.mxu0 %v2682
        %2703 = vmatprep.subr.mxu0 0.0
        %2704 = vmatpush1.msra.mxu0 %v2677
        %2705 = vmatprep.subr.mxu0 0.0
        %2706 = vmatpush1.msra.mxu0 %v2492
        %2707 = vmatprep.subr.mxu0 0.0
        %2708 = vmatpush1.msra.mxu0 %v2487
        %2709 = vmatprep.subr.mxu0 0.0
        %2710 = vmatpush1.msra.mxu0 %v2302
        %2711 = vmatprep.subr.mxu0 0.0
        %2712 = vmatpush1.msra.mxu0 %v2297
        %2713 = vmatprep.subr.mxu0 0.0
        %2714 = vmatpush1.msra.mxu0 %v2112
        %2715 = vmatprep.subr.mxu0 0.0
        %2716 = vmatpush1.msra.mxu0 %v2107
        %2717 = vmatprep.subr.mxu0 0.0
        %2718 = vmatpush1.msra.mxu0 %v1922
        %2719 = vmatprep.subr.mxu0 0.0
        %2720 = vmatpush1.msra.mxu0 %v1917
        %2721 = vmatprep.subr.mxu0 0.0
        %2722 = vmatpush1.msra.mxu0 %v1732
        %2723 = vmatprep.subr.mxu0 0.0
        %2724 = vmatpush1.msra.mxu0 %v1727
        %2725 = vmatprep.subr.mxu0 0.0
        %2726 = vmatpush1.msra.mxu0 %v1542
        %2727 = vmatprep.subr.mxu0 0.0
        %2728 = vmatpush1.msra.mxu0 %v1537
        %2729 = vmatprep.subr.mxu0 0.0
        %2730 = vmatpush1.msra.mxu0 %v1352
        %2731 = vmatprep.subr.mxu0 0.0
        %2732 = vmatpush1.msra.mxu0 %v1347
        %2733 = vmatprep.subr.mxu0 0.0
        %2734 = vmatpush2.msra.mxu0 0.0
        %2735 = vmatprep.subr.mxu0 0.0
        %2736 = vmatpush2.msra.mxu0 0.0
        %2737 = vmatprep.subr.mxu0 0.0
        %2738 = vmatpush2.msra.mxu0 0.0
        %2739 = vmatprep.subr.mxu0 0.0
        %2740 = vmatpush2.msra.mxu0 0.0
        %2741 = vmatprep.subr.mxu0 0.0
        %2742 = vmatpush2.msra.mxu0 0.0
        %2743 = vmatprep.subr.mxu0 0.0
        %2744 = vmatpush2.msra.mxu0 0.0
        %2745 = vmatprep.subr.mxu0 0.0
        %2746 = vmatpush2.msra.mxu0 0.0
        %2747 = vmatprep.subr.mxu0 0.0
        %2748 = vmatpush2.msra.mxu0 0.0
        %2749 = vmatprep.subr.mxu0 0.0
        %2750 = vmatpush2.msra.mxu0 0.0
        %2751 = vmatprep.subr.mxu0 0.0
        %2752 = vmatpush2.msra.mxu0 0.0
        %2753 = vmatprep.subr.mxu0 0.0
        %2754 = vmatpush2.msra.mxu0 0.0
        %2755 = vmatprep.subr.mxu0 0.0
        %2756 = vmatpush2.msra.mxu0 0.0
        %2757 = vmatprep.subr.mxu0 0.0
        %2758 = vmatpush2.msra.mxu0 0.0
        %2759 = vmatprep.subr.mxu0 0.0
        %2760 = vmatpush2.msra.mxu0 0.0
        %2761 = vmatprep.subr.mxu0 0.0
        %2762 = vmatpush2.msra.mxu0 0.0
        %2763 = vmatprep.subr.mxu0 0.0
        %2764 = vmatpush2.msra.mxu0 0.0
        %2765 = vmatprep.mubr.f32.mxu0 0.0
        %2766 = vmatmul.mubr.f32.gmra.mxu0 %v2685
        %v2767 = vpop.f32.mrf.mxu0
        %v2768 = vadd.f32 0.0, %v2767
        %v2769 = vpop.f32.mrf.mxu0
        %2770 = vmatprep.mubr.f32.mxu0 0.0
        %2771 = vmatmul.mubr.f32.gmra.mxu0 %v2686
        %v2772 = vpop.f32.mrf.mxu0
        %v2773 = vadd.f32 0.0, %v2772
        %v2774 = vpop.f32.mrf.mxu0
        %2775 = vmatprep.mubr.f32.mxu0 0.0
        %2776 = vmatmul.mubr.f32.gmra.mxu0 %v2687
        %v2777 = vpop.f32.mrf.mxu0
        %v2778 = vadd.f32 0.0, %v2777
        %v2779 = vpop.f32.mrf.mxu0
        %2780 = vmatprep.mubr.f32.mxu0 0.0
        %2781 = vmatmul.mubr.f32.gmra.mxu0 %v2688
        %v2782 = vpop.f32.mrf.mxu0
        %v2783 = vadd.f32 0.0, %v2782
        %v2784 = vpop.f32.mrf.mxu0
        %2785 = vmatprep.mubr.f32.mxu0 0.0
        %2786 = vmatmul.mubr.f32.gmra.mxu0 %v2689
        %v2787 = vpop.f32.mrf.mxu0
        %v2788 = vadd.f32 0.0, %v2787
        %v2789 = vpop.f32.mrf.mxu0
        %2790 = vmatprep.mubr.f32.mxu0 0.0
        %2791 = vmatmul.mubr.f32.gmra.mxu0 %v2690
        %v2792 = vpop.f32.mrf.mxu0
        %v2793 = vadd.f32 0.0, %v2792
        %v2794 = vpop.f32.mrf.mxu0
        %2795 = vmatprep.mubr.f32.mxu0 0.0
        %2796 = vmatmul.mubr.f32.gmra.mxu0 %v2691
        %v2797 = vpop.f32.mrf.mxu0
        %v2798 = vadd.f32 0.0, %v2797
        %v2799 = vpop.f32.mrf.mxu0
        %2800 = vmatprep.mubr.f32.mxu0 0.0
        %2801 = vmatmul.mubr.f32.gmra.mxu0 %v2692
        %v2802 = vpop.f32.mrf.mxu0
        %v2803 = vadd.f32 0.0, %v2802
        %v2804 = vpop.f32.mrf.mxu0
        %2805 = vmatprep.mubr.f32.mxu0 0.0
        %2806 = vmatmul.mubr.f32.gmra.mxu0 %v2693
        %v2807 = vpop.f32.mrf.mxu0
        %v2808 = vadd.f32 0.0, %v2807
        %v2809 = vpop.f32.mrf.mxu0
        %2810 = vmatprep.mubr.f32.mxu0 0.0
        %2811 = vmatmul.mubr.f32.gmra.mxu0 %v2694
        %v2812 = vpop.f32.mrf.mxu0
        %v2813 = vadd.f32 0.0, %v2812
        %v2814 = vpop.f32.mrf.mxu0
        %2815 = vmatprep.mubr.f32.mxu0 0.0
        %2816 = vmatmul.mubr.f32.gmra.mxu0 %v2695
        %v2817 = vpop.f32.mrf.mxu0
        %v2818 = vadd.f32 0.0, %v2817
        %v2819 = vpop.f32.mrf.mxu0
        %2820 = vmatprep.mubr.f32.mxu0 0.0
        %2821 = vmatmul.mubr.f32.gmra.mxu0 %v2696
        %v2822 = vpop.f32.mrf.mxu0
        %v2823 = vadd.f32 0.0, %v2822
        %v2824 = vpop.f32.mrf.mxu0
        %2825 = vmatprep.mubr.f32.mxu0 0.0
        %2826 = vmatmul.mubr.f32.gmra.mxu0 %v2697
        %v2827 = vpop.f32.mrf.mxu0
        %v2828 = vadd.f32 0.0, %v2827
        %v2829 = vpop.f32.mrf.mxu0
        %2830 = vmatprep.mubr.f32.mxu0 0.0
        %2831 = vmatmul.mubr.f32.gmra.mxu0 %v2698
        %v2832 = vpop.f32.mrf.mxu0
        %v2833 = vadd.f32 0.0, %v2832
        %v2834 = vpop.f32.mrf.mxu0
        %2835 = vmatprep.mubr.f32.mxu0 0.0
        %2836 = vmatmul.mubr.f32.gmra.mxu0 %v2699
        %v2837 = vpop.f32.mrf.mxu0
        %v2838 = vadd.f32 0.0, %v2837
        %v2839 = vpop.f32.mrf.mxu0
        %2840 = vmatprep.mubr.f32.mxu0 0.0
        %2841 = vmatmul.mubr.f32.gmra.mxu0 %v2700
        %v2842 = vpop.f32.mrf.mxu0
        %v2843 = vadd.f32 0.0, %v2842
        %v2844 = vpop.f32.mrf.mxu0
        %2845 = vdwg.mxu0
        %2846 = vxpose.xlu0.b32.start [1/16] %v2768, 128
        %2847 = vxpose.xlu0.b32.cont [2/16] %v2773, 128
        %2848 = vxpose.xlu0.b32.cont [3/16] %v2778, 128
        %2849 = vxpose.xlu0.b32.cont [4/16] %v2783, 128
        %2850 = vxpose.xlu0.b32.cont [5/16] %v2788, 128
        %2851 = vxpose.xlu0.b32.cont [6/16] %v2793, 128
        %2852 = vxpose.xlu0.b32.cont [7/16] %v2798, 128
        %2853 = vxpose.xlu0.b32.cont [8/16] %v2803, 128
        %2854 = vxpose.xlu0.b32.cont [9/16] %v2808, 128
        %2855 = vxpose.xlu0.b32.cont [10/16] %v2813, 128
        %2856 = vxpose.xlu0.b32.cont [11/16] %v2818, 128
        %2857 = vxpose.xlu0.b32.cont [12/16] %v2823, 128
        %2858 = vxpose.xlu0.b32.cont [13/16] %v2828, 128
        %2859 = vxpose.xlu0.b32.cont [14/16] %v2833, 128
        %2860 = vxpose.xlu0.b32.cont [15/16] %v2838, 128
        %2861 = vxpose.xlu0.b32.end [16/16] %v2843, 128
        %v2862 = vpop.trf.xlu0
        %v2863 = vpop.trf.xlu0
        %v2864 = vpop.trf.xlu0
        %v2865 = vpop.trf.xlu0
        %v2866 = vpop.trf.xlu0
        %v2867 = vpop.trf.xlu0
        %v2868 = vpop.trf.xlu0
        %v2869 = vpop.trf.xlu0
        %v2870 = vpop.trf.xlu0
        %v2871 = vpop.trf.xlu0
        %v2872 = vpop.trf.xlu0
        %v2873 = vpop.trf.xlu0
        %v2874 = vpop.trf.xlu0
        %v2875 = vpop.trf.xlu0
        %v2876 = vpop.trf.xlu0
        %v2877 = vpop.trf.xlu0
        %v2878 = vld [vmem:[%s6] sm:$0x1]
        %v2880 = vlaneseq
        %v2881 = vshrl.u32 %v2880, 7
        %v2882 = vsub.s32 0, %v2881
        %v2883 = vrot.slane %v2878, %v2882
        %v2885 = vadd.f32 %v2862, %v2883
        %v2886 = vadd.f32 %v2863, %v2883
        %v2887 = vadd.f32 %v2864, %v2883
        %v2888 = vadd.f32 %v2865, %v2883
        %v2889 = vadd.f32 %v2866, %v2883
        %v2890 = vadd.f32 %v2867, %v2883
        %v2891 = vadd.f32 %v2868, %v2883
        %v2892 = vadd.f32 %v2869, %v2883
        %2893 = vst [vmem:[%s330] sm:$0xff] %v2885
        %2894 = vst [vmem:[%s330 + $0x8] sm:$0xff] %v2886
        %2895 = vst [vmem:[%s330 + $0x10] sm:$0xff] %v2887
        %2896 = vst [vmem:[%s330 + $0x18] sm:$0xff] %v2888
        %2897 = vst [vmem:[%s330 + $0x20] sm:$0xff] %v2889
        %2898 = vst [vmem:[%s330 + $0x28] sm:$0xff] %v2890
        %2899 = vst [vmem:[%s330 + $0x30] sm:$0xff] %v2891
        %2900 = vst [vmem:[%s330 + $0x38] sm:$0xff] %v2892
        %s2901 = sand.u32 %s184, 1
        %s2902 = scalar_lea.sflag [#allocation4], %s2901
        %s2903 = sand.u32 %s184, 1
        %s2904 = smul.addr %s2903, 64
        %s2905 = scalar_lea.vmem [#allocation10], %s2904
        // Predicated region
        $region65: #{tpu_custom_call.1} parent=47 // pred_check
          %p2906 = pneg %p194
        $region66: #{tpu_custom_call.1} parent=47 // pred_check_branch
          %2908 = sbr.rel (%p2906) target = $region68
        $region67: #{tpu_custom_call.1} parent=47 // pred_region
          %s2910 = ssub.s32 1024, 1024
          %2911 = vsyncadd %s2902, %s2910
          %s2912 = smul.addr %s24, 8
          %s2913 = smul.addr %s2912, 128
          %s2914 = scalar_lea.hbm %s7, %s2913
          %s2915 = sshll.u32 %s2905, 4
          %s2916 = int_to_ptr.vmem [resolvable:$true] %s2915
          %2921 = dma.vmem_to_hbm [thread:$0]  %s2916, 1024, %s2914, %s2902, 128, 128, 8
        $region68: #{tpu_custom_call.1} parent=47 // pred_fallthru
          _
      $region48: #{tpu_custom_call.1} parent=5 // pred_fallthru
        _
      %p2922 = scmp.le.s32.totalorder 2, %s19
      // Predicated region
      $region69: #{tpu_custom_call.1} parent=5 // pred_check
        %p2923 = pneg %p2922
      $region70: #{tpu_custom_call.1} parent=5 // pred_check_branch
        %2925 = sbr.rel (%p2923) target = $region72
      $region71: #{tpu_custom_call.1} parent=5 // pred_region
        %s2926 = ssub.s32 %s19, 2
        // Predicated region
        $region73: #{tpu_custom_call.1} parent=71 // pred_check
          %p2927 = pneg %p200
        $region74: #{tpu_custom_call.1} parent=71 // pred_check_branch
          %2929 = sbr.rel (%p2927) target = $region76
        $region75: #{tpu_custom_call.1} parent=71 // pred_region
          %s2930 = sand.u32 %s185, 1
          %s2931 = scalar_lea.sflag [#allocation4], %s2930
          %s2932 = sand.u32 %s185, 1
          %s2933 = smul.addr %s2932, 64
          %s2934 = scalar_lea.vmem [#allocation10], %s2933
          %2935 = dma.done %s2931, 1024
        $region76: #{tpu_custom_call.1} parent=71 // pred_fallthru
          _
      $region72: #{tpu_custom_call.1} parent=5 // pred_fallthru
        _
    $region6: #{tpu_custom_call.1} parent=1 // loop_footer
      %s23 = sadd.s32 1, %s19
    $region7: #{tpu_custom_call.1} parent=1 // loop_footer_branch
      %18 = sbr.rel target = $region3
    $region8: #{tpu_custom_call.1} parent=1 // loop_exit
      _
    %2936 = vsyncpa [#allocation3], 1
    %s2937 = scalar_lea.sflag [#allocation3], 1
    %2938 = vsyncpa %s2937, 1
    %2939 = vsyncpa [#allocation6], 1
    %2940 = vsyncpa [#allocation9], 1
    %2941 = vsyncpa [#allocation4], 1
    %s2942 = scalar_lea.sflag [#allocation4], 1
    %2943 = vsyncpa %s2942, 1

</llo_original>
